<compile_context>
chip_gen: v5e
topology: v5e:2x2
jax: 0.10.0
libtpu: 0.0.40
codegen_flags: <defaults>
</compile_context>

<pallas_src>
import numpy as np
import jax
import jax.numpy as jnp
from jax.experimental import pallas as pl
from jax.experimental.pallas import tpu as pltpu

# ----------------------------- hyper-params / sizes -------------------------
H = 32            # hidden
C = 8             # output_channels
OUT_W = H         # padded output lanes for the final Linear (sliced to C outside)
N_ITERS = 2       # n_graph_iters

# Graph batching layout: one "block" = one grid step = ONE graph.
NB = 128          # nodes per block / graph
EB = 256          # edges per block / graph
B = 8             # number of blocks -> grid=(B,)  (>= 4 steps per TC on v7x)

W_ROWS = 13 * H   # consolidated bf16 weight slab rows
B_ROWS = 16       # bias slab rows (9 used, padded for sublane alignment)


# ------------------------------- kernel -------------------------------------
def interaction_kernel(xg_ref, e_ref, end_row_ref, start_col_ref, end_col_ref,
                       w_ref, b_ref, out_ref):
    relu = lambda v: jnp.maximum(v, 0.0)
    bf16 = jnp.bfloat16

    def mm(a_bf, b_bf):
        # MXU: bf16 operands (cast exactly once per reuse by the caller),
        # f32 accumulation.
        return jnp.dot(a_bf, b_bf, preferred_element_type=jnp.float32)

    # ---- consolidated bf16 weight slab: static sublane slices ----
    fw_x = w_ref[0 * H:1 * H, :]     # feature_net L1, x    term
    fw_m = w_ref[1 * H:2 * H, :]     # feature_net L1, msgs term
    fw_g = w_ref[2 * H:3 * H, :]     # feature_net L1, g    term
    fw_2 = w_ref[3 * H:4 * H, :]     # feature_net L2
    gw_1 = w_ref[4 * H:5 * H, :]     # graph_net  L1
    gw_2 = w_ref[5 * H:6 * H, :]     # graph_net  L2
    ew_s = w_ref[6 * H:7 * H, :]     # edge_net L1, x_out[start] term
    ew_e = w_ref[7 * H:8 * H, :]     # edge_net L1, x_out[end]   term
    ew_c = w_ref[8 * H:9 * H, :]     # edge_net L1, e            term
    ew_2 = w_ref[9 * H:10 * H, :]    # edge_net L2
    ow_1 = w_ref[10 * H:11 * H, :]   # features_out L1
    ow_2 = w_ref[11 * H:12 * H, :]   # features_out L2
    ow_3 = w_ref[12 * H:13 * H, :]   # features_out L3 (cols >= C are zero)

    # ---- bias slab (f32); in-loop broadcasts hoisted out of the unrolled loop ----
    bias = b_ref[...]
    fn_b1 = jnp.broadcast_to(bias[0:1, :], (NB, H))
    fn_b2 = jnp.broadcast_to(bias[1:2, :], (NB, H))
    gn_b1 = bias[2:3, :]             # graph rows are already [1, H]
    gn_b2 = bias[3:4, :]
    en_b1 = jnp.broadcast_to(bias[4:5, :], (EB, H))
    en_b2 = jnp.broadcast_to(bias[5:6, :], (EB, H))
    fo_b1 = bias[6:7, :]
    fo_b2 = bias[7:8, :]
    fo_b3 = bias[8:9, :]

    # ---- one-hot scatter/gather operators built in-kernel from int32 indices ----
    # (replaces ~192 KiB of dense bf16 operators per block that were DMA'd before)
    end_row = end_row_ref[...]                                     # [1, EB]
    start_col = start_col_ref[...]                                 # [EB, 1]
    end_col = end_col_ref[...]                                     # [EB, 1]
    node_sub = jax.lax.broadcasted_iota(jnp.int32, (NB, EB), 0)    # node id / sublanes
    node_lane = jax.lax.broadcasted_iota(jnp.int32, (EB, NB), 1)   # node id / lanes
    magg = jnp.where(node_sub == end_row, 1.0, 0.0).astype(bf16)       # [NB, EB]
    g_start = jnp.where(node_lane == start_col, 1.0, 0.0).astype(bf16)  # [EB, NB]
    g_end = jnp.where(node_lane == end_col, 1.0, 0.0).astype(bf16)      # [EB, NB]

    # ---- state: f32 residual carriers + hoisted bf16 copy of x ----
    x = xg_ref[0:NB, :]              # [NB, H]  f32
    g = xg_ref[NB:2 * NB, :]         # [NB, H]  f32
    e = e_ref[...]                   # [EB, H]  f32
    x_bf = x.astype(bf16)

    for _ in range(N_ITERS):                      # unrolled message passing
        e_bf = e.astype(bf16)
        g_bf = g.astype(bf16)

        # ---- aggregation: scatter_add(e, end, dim_size=NB) -> one MXU matmul ----
        msgs = mm(magg, e_bf)                     # [NB, H] f32

        # ---- feature_net(cat([x, msgs, g])): split-weight accumulation ----
        h1 = relu(mm(x_bf, fw_x) + mm(msgs.astype(bf16), fw_m)
                  + mm(g_bf, fw_g) + fn_b1)
        x_out = relu(mm(h1.astype(bf16), fw_2) + fn_b2) + x        # residual
        x_out_bf = x_out.astype(bf16)

        # ---- graph_net(global_add_pool) + repeat_interleave ----
        # One graph per block: single sublane reduce + single sublane broadcast.
        pooled = jnp.sum(x_out, axis=0, keepdims=True)             # [1, H] (exact f32)
        hg = relu(mm(pooled.astype(bf16), gw_1) + gn_b1)
        g_graph = relu(mm(hg.astype(bf16), gw_2) + gn_b2)          # [1, H]
        g = jnp.broadcast_to(g_graph, (NB, H)) + g                 # residual

        # ---- edge_net(cat([x_out[start], x_out[end], e])) ----
        # Push L1 weights through x_out first, then gather with one-hot MXU
        # matmuls (no [2E,H] intermediate, no lane concat).
        xs_w = mm(x_out_bf, ew_s).astype(bf16)                     # [NB, H]
        xe_w = mm(x_out_bf, ew_e).astype(bf16)                     # [NB, H]
        he = relu(mm(g_start, xs_w) + mm(g_end, xe_w)
                  + mm(e_bf, ew_c) + en_b1)
        e = relu(mm(he.astype(bf16), ew_2) + en_b2) + e            # residual

        x = x_out
        x_bf = x_out_bf

    # ---- features_out: Linear/ReLU, Linear/ReLU, Linear/Tanh at OUT_W lanes ----
    f1 = relu(mm(x_bf, ow_1) + fo_b1)
    f2 = relu(mm(f1.astype(bf16), ow_2) + fo_b2)
    out_ref[...] = jnp.tanh(mm(f2.astype(bf16), ow_3) + fo_b3)


# ------------------------------- wrapper -------------------------------------
def interaction_net(x, e, g, edge_index, batch, repeater, params, validate=True):
    """Pallas forward pass of InteractionNet.

    Layout assumptions (validated below when `validate=True`; set validate=False
    under jit):
      * nodes sorted by graph; B blocks, each holding exactly ONE graph of NB
        nodes and EB edges; edges never cross block boundaries.
      * `batch` is sorted/contiguous and `repeater` == NB for every graph, so
        repeat_interleave == per-graph broadcast (encoded structurally).
    """
    n_total, h = x.shape
    assert h == H and n_total == B * NB and e.shape[0] == B * EB

    if validate:
        ei = np.asarray(edge_index)
        blk = np.repeat(np.arange(B) * NB, EB)
        assert np.all((ei[0] >= blk) & (ei[0] < blk + NB)), "edge start leaves its block"
        assert np.all((ei[1] >= blk) & (ei[1] < blk + NB)), "edge end leaves its block"
        assert np.array_equal(np.asarray(batch), np.repeat(np.arange(B), NB)), \
            "batch must be sorted with NB nodes per graph"
        assert np.all(np.asarray(repeater) == NB), "repeater must equal NB"

    (fn_w1, fn_b1, fn_w2, fn_b2, gn_w1, gn_b1, gn_w2, gn_b2,
     en_w1, en_b1, en_w2, en_b2, fo_w1, fo_b1, fo_w2, fo_b2, fo_w3, fo_b3) = params

    # ---- block-local int32 edge indices (one-hots are built in-kernel) ----
    blk_off = (jnp.arange(B, dtype=jnp.int32) * NB)[:, None]
    start_l = edge_index[0].reshape(B, EB).astype(jnp.int32) - blk_off   # [B, EB]
    end_l = edge_index[1].reshape(B, EB).astype(jnp.int32) - blk_off     # [B, EB]
    end_row = end_l[:, None, :]            # [B, 1, EB]  row layout for scatter-add
    start_col = start_l[:, :, None]        # [B, EB, 1]  col layout for gathers
    end_col = end_l[:, :, None]            # [B, EB, 1]

    # ---- consolidated parameter slabs (2 resident inputs instead of 18) ----
    fo_w3_pad = jnp.zeros((H, OUT_W), jnp.float32).at[:, :C].set(fo_w3)
    w_slab = jnp.concatenate(
        [fn_w1, fn_w2, gn_w1, gn_w2, en_w1, en_w2, fo_w1, fo_w2, fo_w3_pad],
        axis=0).astype(jnp.bfloat16)                                     # [13H, H]
    b_slab = jnp.zeros((B_ROWS, H), jnp.float32)
    b_slab = b_slab.at[0:8, :].set(
        jnp.concatenate([fn_b1, fn_b2, gn_b1, gn_b2,
                         en_b1, en_b2, fo_b1, fo_b2], axis=0))
    b_slab = b_slab.at[8, :C].set(fo_b3[0])        # pad lanes stay 0 (tanh(0)=0)

    # x and g stacked into one [B, 2*NB, H] input (g only enters iteration 0).
    xg = jnp.concatenate([x.reshape(B, NB, H), g.reshape(B, NB, H)], axis=1)
    eb = e.reshape(B, EB, H)

    # ---- advisory cost estimate for XLA's scheduler ----
    per_iter = (2 * NB * EB * H                  # scatter-add matmul
                + 3 * 2 * NB * H * H             # feature_net L1 (split weights)
                + 2 * NB * H * H                 # feature_net L2
                + 2 * 2 * 1 * H * H              # graph_net
                + 2 * 2 * NB * H * H             # edge_net L1 weights through x_out
                + 2 * 2 * EB * NB * H            # two one-hot gather matmuls
                + 2 * EB * H * H                 # e @ We_c
                + 2 * EB * H * H)                # edge_net L2
    epilogue = 2 * 2 * NB * H * H + 2 * NB * H * OUT_W
    cost = pl.CostEstimate(
        flops=B * (N_ITERS * per_iter + epilogue),
        transcendentals=B * NB * OUT_W,          # tanh
        bytes_accessed=(xg.size + eb.size + b_slab.size + B * NB * OUT_W) * 4
        + w_slab.size * 2
        + (end_row.size + start_col.size + end_col.size) * 4)

    out = pl.pallas_call(
        interaction_kernel,
        out_shape=jax.ShapeDtypeStruct((B, NB, OUT_W), jnp.float32),
        grid=(B,),
        in_specs=[
            pl.BlockSpec((None, 2 * NB, H), lambda b: (b, 0, 0)),    # [x; g] block
            pl.BlockSpec((None, EB, H), lambda b: (b, 0, 0)),        # e block
            pl.BlockSpec((None, 1, EB), lambda b: (b, 0, 0)),        # end (row layout)
            pl.BlockSpec((None, EB, 1), lambda b: (b, 0, 0)),        # start (col layout)
            pl.BlockSpec((None, EB, 1), lambda b: (b, 0, 0)),        # end (col layout)
            pl.BlockSpec((W_ROWS, H), lambda b: (0, 0)),             # weight slab (resident)
            pl.BlockSpec((B_ROWS, H), lambda b: (0, 0)),             # bias slab (resident)
        ],
        out_specs=pl.BlockSpec((None, NB, OUT_W), lambda b: (b, 0, 0)),
        compiler_params=pltpu.CompilerParams(
            dimension_semantics=("parallel",)),  # blocks shard across v7x's 2 TCs
        cost_estimate=cost,
    )(xg, eb, end_row, start_col, end_col, w_slab, b_slab)

    return out.reshape(B * NB, OUT_W)[:, :C]


# --------------------------- pure-JAX reference -------------------------------
def reference(x, e, g, edge_index, batch, repeater, params,
              matmul_dtype=jnp.float32):
    """Faithful JAX port of the PyTorch forward.  matmul_dtype=jnp.bfloat16
    approximates the kernel's MXU precision (bf16 operands, f32 accumulation)."""
    (fn_w1, fn_b1, fn_w2, fn_b2, gn_w1, gn_b1, gn_w2, gn_b2,
     en_w1, en_b1, en_w2, en_b2, fo_w1, fo_b1, fo_w2, fo_b2, fo_w3, fo_b3) = params
    relu = lambda v: jnp.maximum(v, 0.0)
    dot = lambda a, b: jnp.dot(a.astype(matmul_dtype), b.astype(matmul_dtype),
                               preferred_element_type=jnp.float32)
    start, end = edge_index[0], edge_index[1]
    n = x.shape[0]
    ng = repeater.shape[0]
    for _ in range(N_ITERS):
        msgs = jax.ops.segment_sum(
            e.astype(matmul_dtype).astype(jnp.float32), end, num_segments=n)
        xin = jnp.concatenate([x, msgs, g], axis=-1)
        x_out = relu(dot(relu(dot(xin, fn_w1) + fn_b1), fn_w2) + fn_b2) + x
        graph_in = jax.ops.segment_sum(x_out, batch, num_segments=ng)
        g_graph = relu(dot(relu(dot(graph_in, gn_w1) + gn_b1), gn_w2) + gn_b2)
        g_out = jnp.repeat(g_graph, repeater, axis=0, total_repeat_length=n) + g
        ein = jnp.concatenate([x_out[start], x_out[end], e], axis=-1)
        e_out = relu(dot(relu(dot(ein, en_w1) + en_b1), en_w2) + en_b2) + e
        x, e, g = x_out, e_out, g_out
    f1 = relu(dot(x, fo_w1) + fo_b1)
    f2 = relu(dot(f1, fo_w2) + fo_b2)
    return jnp.tanh(dot(f2, fo_w3) + fo_b3)


# ---------------------------------- main --------------------------------------
if __name__ == "__main__":
    key = jax.random.PRNGKey(0)
    keys = jax.random.split(key, 32)

    def w(k, shape, scale=0.1):
        return (scale * jax.random.normal(k, shape)).astype(jnp.float32)

    # Deterministic synthetic parameters (weights [in, out], biases [1, out]).
    params = (
        w(keys[0], (3 * H, H)), w(keys[1], (1, H)),   # feature_net L1
        w(keys[2], (H, H)),     w(keys[3], (1, H)),   # feature_net L2
        w(keys[4], (H, H)),     w(keys[5], (1, H)),   # graph_net  L1
        w(keys[6], (H, H)),     w(keys[7], (1, H)),   # graph_net  L2
        w(keys[8], (3 * H, H)), w(keys[9], (1, H)),   # edge_net   L1
        w(keys[10], (H, H)),    w(keys[11], (1, H)),  # edge_net   L2
        w(keys[12], (H, H)),    w(keys[13], (1, H)),  # features_out L1
        w(keys[14], (H, H)),    w(keys[15], (1, H)),  # features_out L2
        w(keys[16], (H, C)),    w(keys[17], (1, C)),  # features_out L3
    )

    n_total, e_total, n_graphs = B * NB, B * EB, B
    x = w(keys[20], (n_total, H), 1.0)
    e = w(keys[21], (e_total, H), 1.0)
    g = w(keys[22], (n_total, H), 1.0)

    # Edges stay inside their block; one graph of NB nodes / EB edges per block.
    blk = jnp.repeat(jnp.arange(B, dtype=jnp.int32), EB)
    start = blk * NB + jax.random.randint(keys[23], (e_total,), 0, NB, dtype=jnp.int32)
    end = blk * NB + jax.random.randint(keys[24], (e_total,), 0, NB, dtype=jnp.int32)
    edge_index = jnp.stack([start, end], axis=0)
    batch = jnp.repeat(jnp.arange(n_graphs, dtype=jnp.int32), NB)
    repeater = jnp.full((n_graphs,), NB, dtype=jnp.int32)

    out = jax.block_until_ready(
        interaction_net(x, e, g, edge_index, batch, repeater, params))

    # Check vs a reference run at the kernel's matmul precision.
    ref_bf16 = jax.block_until_ready(
        reference(x, e, g, edge_index, batch, repeater, params,
                  matmul_dtype=jnp.bfloat16))
    np.testing.assert_allclose(np.asarray(out), np.asarray(ref_bf16),
                               rtol=2e-2, atol=2e-2)

    # Looser sanity check vs the full-f32 reference (only bf16 MXU rounding differs).
    ref_f32 = jax.block_until_ready(
        reference(x, e, g, edge_index, batch, repeater, params))
    np.testing.assert_allclose(np.asarray(out), np.asarray(ref_f32),
                               rtol=5e-2, atol=5e-2)

    print("KERNEL_OK")
</pallas_src>

<mosaic_0001>
module attributes {stable_mosaic.version = 11 : i64} {
  func.func @interaction_kernel(%arg0: i32, %arg1: memref<1x256x32xf32, #tpu.memory_space<vmem>>, %arg2: memref<1x256x32xf32, #tpu.memory_space<vmem>>, %arg3: memref<1x1x256xi32, #tpu.memory_space<vmem>>, %arg4: memref<1x256x1xi32, #tpu.memory_space<vmem>>, %arg5: memref<1x256x1xi32, #tpu.memory_space<vmem>>, %arg6: memref<416x32xbf16, #tpu.memory_space<vmem>>, %arg7: memref<16x32xf32, #tpu.memory_space<vmem>>, %arg8: memref<1x128x32xf32, #tpu.memory_space<vmem>>) attributes {dimension_semantics = [#tpu.dimension_semantics<parallel>], iteration_bounds = array<i64: 8>, scalar_prefetch = 0 : i64, scratch_operands = 0 : i64, tpu.core_type = #tpu.core_type<tc>, window_params = [{transform_indices = @transform_0, window_bounds = array<i64: 1, 256, 32>}, {transform_indices = @transform_1, window_bounds = array<i64: 1, 256, 32>}, {transform_indices = @transform_2, window_bounds = array<i64: 1, 1, 256>}, {transform_indices = @transform_3, window_bounds = array<i64: 1, 256, 1>}, {transform_indices = @transform_4, window_bounds = array<i64: 1, 256, 1>}, {pipeline_mode = #tpu.pipeline_mode<synchronous>, transform_indices = @transform_5, window_bounds = array<i64: 416, 32>}, {pipeline_mode = #tpu.pipeline_mode<synchronous>, transform_indices = @transform_6, window_bounds = array<i64: 16, 32>}, {transform_indices = @transform_7, window_bounds = array<i64: 1, 128, 32>}]} {
    %c0 = arith.constant 0 : index
    %c0_0 = arith.constant 0 : index
    %0 = vector.load %arg6[%c0, %c0_0] : memref<416x32xbf16, #tpu.memory_space<vmem>>, vector<32x32xbf16>
    %c32 = arith.constant 32 : index
    %c0_1 = arith.constant 0 : index
    %1 = vector.load %arg6[%c32, %c0_1] : memref<416x32xbf16, #tpu.memory_space<vmem>>, vector<32x32xbf16>
    %c64 = arith.constant 64 : index
    %c0_2 = arith.constant 0 : index
    %2 = vector.load %arg6[%c64, %c0_2] : memref<416x32xbf16, #tpu.memory_space<vmem>>, vector<32x32xbf16>
    %c96 = arith.constant 96 : index
    %c0_3 = arith.constant 0 : index
    %3 = vector.load %arg6[%c96, %c0_3] : memref<416x32xbf16, #tpu.memory_space<vmem>>, vector<32x32xbf16>
    %c128 = arith.constant 128 : index
    %c0_4 = arith.constant 0 : index
    %4 = vector.load %arg6[%c128, %c0_4] : memref<416x32xbf16, #tpu.memory_space<vmem>>, vector<32x32xbf16>
    %c160 = arith.constant 160 : index
    %c0_5 = arith.constant 0 : index
    %5 = vector.load %arg6[%c160, %c0_5] : memref<416x32xbf16, #tpu.memory_space<vmem>>, vector<32x32xbf16>
    %c192 = arith.constant 192 : index
    %c0_6 = arith.constant 0 : index
    %6 = vector.load %arg6[%c192, %c0_6] : memref<416x32xbf16, #tpu.memory_space<vmem>>, vector<32x32xbf16>
    %c224 = arith.constant 224 : index
    %c0_7 = arith.constant 0 : index
    %7 = vector.load %arg6[%c224, %c0_7] : memref<416x32xbf16, #tpu.memory_space<vmem>>, vector<32x32xbf16>
    %c256 = arith.constant 256 : index
    %c0_8 = arith.constant 0 : index
    %8 = vector.load %arg6[%c256, %c0_8] : memref<416x32xbf16, #tpu.memory_space<vmem>>, vector<32x32xbf16>
    %c288 = arith.constant 288 : index
    %c0_9 = arith.constant 0 : index
    %9 = vector.load %arg6[%c288, %c0_9] : memref<416x32xbf16, #tpu.memory_space<vmem>>, vector<32x32xbf16>
    %c320 = arith.constant 320 : index
    %c0_10 = arith.constant 0 : index
    %10 = vector.load %arg6[%c320, %c0_10] : memref<416x32xbf16, #tpu.memory_space<vmem>>, vector<32x32xbf16>
    %c352 = arith.constant 352 : index
    %c0_11 = arith.constant 0 : index
    %11 = vector.load %arg6[%c352, %c0_11] : memref<416x32xbf16, #tpu.memory_space<vmem>>, vector<32x32xbf16>
    %c384 = arith.constant 384 : index
    %c0_12 = arith.constant 0 : index
    %12 = vector.load %arg6[%c384, %c0_12] : memref<416x32xbf16, #tpu.memory_space<vmem>>, vector<32x32xbf16>
    %c0_13 = arith.constant 0 : index
    %c0_14 = arith.constant 0 : index
    %13 = vector.load %arg7[%c0_13, %c0_14] : memref<16x32xf32, #tpu.memory_space<vmem>>, vector<16x32xf32>
    %14 = vector.extract_strided_slice %13 {offsets = [0, 0], sizes = [1, 32], strides = [1, 1]} : vector<16x32xf32> to vector<1x32xf32>
    %15 = vector.shape_cast %14 : vector<1x32xf32> to vector<1x32xf32>
    %16 = vector.broadcast %15 : vector<1x32xf32> to vector<128x32xf32>
    %17 = vector.extract_strided_slice %13 {offsets = [1, 0], sizes = [1, 32], strides = [1, 1]} : vector<16x32xf32> to vector<1x32xf32>
    %18 = vector.shape_cast %17 : vector<1x32xf32> to vector<1x32xf32>
    %19 = vector.broadcast %18 : vector<1x32xf32> to vector<128x32xf32>
    %20 = vector.extract_strided_slice %13 {offsets = [2, 0], sizes = [1, 32], strides = [1, 1]} : vector<16x32xf32> to vector<1x32xf32>
    %21 = vector.extract_strided_slice %13 {offsets = [3, 0], sizes = [1, 32], strides = [1, 1]} : vector<16x32xf32> to vector<1x32xf32>
    %22 = vector.extract_strided_slice %13 {offsets = [4, 0], sizes = [1, 32], strides = [1, 1]} : vector<16x32xf32> to vector<1x32xf32>
    %23 = vector.shape_cast %22 : vector<1x32xf32> to vector<1x32xf32>
    %24 = vector.broadcast %23 : vector<1x32xf32> to vector<256x32xf32>
    %25 = vector.extract_strided_slice %13 {offsets = [5, 0], sizes = [1, 32], strides = [1, 1]} : vector<16x32xf32> to vector<1x32xf32>
    %26 = vector.shape_cast %25 : vector<1x32xf32> to vector<1x32xf32>
    %27 = vector.broadcast %26 : vector<1x32xf32> to vector<256x32xf32>
    %28 = vector.extract_strided_slice %13 {offsets = [6, 0], sizes = [1, 32], strides = [1, 1]} : vector<16x32xf32> to vector<1x32xf32>
    %29 = vector.extract_strided_slice %13 {offsets = [7, 0], sizes = [1, 32], strides = [1, 1]} : vector<16x32xf32> to vector<1x32xf32>
    %30 = vector.extract_strided_slice %13 {offsets = [8, 0], sizes = [1, 32], strides = [1, 1]} : vector<16x32xf32> to vector<1x32xf32>
    %c0_15 = arith.constant 0 : index
    %c0_16 = arith.constant 0 : index
    %c0_17 = arith.constant 0 : index
    %31 = vector.load %arg3[%c0_15, %c0_16, %c0_17] : memref<1x1x256xi32, #tpu.memory_space<vmem>>, vector<1x1x256xi32>
    %32 = vector.shape_cast %31 : vector<1x1x256xi32> to vector<1x256xi32>
    %c0_18 = arith.constant 0 : index
    %c0_19 = arith.constant 0 : index
    %c0_20 = arith.constant 0 : index
    %33 = vector.load %arg4[%c0_18, %c0_19, %c0_20] : memref<1x256x1xi32, #tpu.memory_space<vmem>>, vector<1x256x1xi32>
    %34 = vector.shape_cast %33 : vector<1x256x1xi32> to vector<256x1xi32>
    %c0_21 = arith.constant 0 : index
    %c0_22 = arith.constant 0 : index
    %c0_23 = arith.constant 0 : index
    %35 = vector.load %arg5[%c0_21, %c0_22, %c0_23] : memref<1x256x1xi32, #tpu.memory_space<vmem>>, vector<1x256x1xi32>
    %36 = vector.shape_cast %35 : vector<1x256x1xi32> to vector<256x1xi32>
    %37 = tpu.iota {dimensions = array<i32: 0>} : vector<128x256xi32>
    %38 = tpu.iota {dimensions = array<i32: 1>} : vector<256x128xi32>
    %39 = vector.broadcast %32 : vector<1x256xi32> to vector<128x256xi32>
    %40 = arith.cmpi eq, %37, %39 : vector<128x256xi32>
    %cst = arith.constant 1.000000e+00 : f32
    %cst_24 = arith.constant 0.000000e+00 : f32
    %41 = vector.broadcast %cst : f32 to vector<128x256xf32>
    %42 = vector.broadcast %cst_24 : f32 to vector<128x256xf32>
    %43 = arith.select %40, %41, %42 : vector<128x256xi1>, vector<128x256xf32>
    %44 = arith.truncf %43 : vector<128x256xf32> to vector<128x256xbf16>
    %45 = vector.broadcast %34 : vector<256x1xi32> to vector<256x128xi32>
    %46 = arith.cmpi eq, %38, %45 : vector<256x128xi32>
    %cst_25 = arith.constant 1.000000e+00 : f32
    %cst_26 = arith.constant 0.000000e+00 : f32
    %47 = vector.broadcast %cst_25 : f32 to vector<256x128xf32>
    %48 = vector.broadcast %cst_26 : f32 to vector<256x128xf32>
    %49 = arith.select %46, %47, %48 : vector<256x128xi1>, vector<256x128xf32>
    %50 = arith.truncf %49 : vector<256x128xf32> to vector<256x128xbf16>
    %51 = vector.broadcast %36 : vector<256x1xi32> to vector<256x128xi32>
    %52 = arith.cmpi eq, %38, %51 : vector<256x128xi32>
    %cst_27 = arith.constant 1.000000e+00 : f32
    %cst_28 = arith.constant 0.000000e+00 : f32
    %53 = vector.broadcast %cst_27 : f32 to vector<256x128xf32>
    %54 = vector.broadcast %cst_28 : f32 to vector<256x128xf32>
    %55 = arith.select %52, %53, %54 : vector<256x128xi1>, vector<256x128xf32>
    %56 = arith.truncf %55 : vector<256x128xf32> to vector<256x128xbf16>
    %c0_29 = arith.constant 0 : index
    %c0_30 = arith.constant 0 : index
    %c0_31 = arith.constant 0 : index
    %57 = vector.load %arg1[%c0_29, %c0_30, %c0_31] : memref<1x256x32xf32, #tpu.memory_space<vmem>>, vector<1x128x32xf32>
    %58 = vector.shape_cast %57 : vector<1x128x32xf32> to vector<128x32xf32>
    %c0_32 = arith.constant 0 : index
    %c128_33 = arith.constant 128 : index
    %c0_34 = arith.constant 0 : index
    %59 = vector.load %arg1[%c0_32, %c128_33, %c0_34] : memref<1x256x32xf32, #tpu.memory_space<vmem>>, vector<1x128x32xf32>
    %60 = vector.shape_cast %59 : vector<1x128x32xf32> to vector<128x32xf32>
    %c0_35 = arith.constant 0 : index
    %c0_36 = arith.constant 0 : index
    %c0_37 = arith.constant 0 : index
    %61 = vector.load %arg2[%c0_35, %c0_36, %c0_37] : memref<1x256x32xf32, #tpu.memory_space<vmem>>, vector<1x256x32xf32>
    %62 = vector.shape_cast %61 : vector<1x256x32xf32> to vector<256x32xf32>
    %63 = arith.truncf %58 : vector<128x32xf32> to vector<128x32xbf16>
    %64 = arith.truncf %62 : vector<256x32xf32> to vector<256x32xbf16>
    %65 = arith.truncf %60 : vector<128x32xf32> to vector<128x32xbf16>
    %cst_38 = arith.constant dense<0.000000e+00> : vector<128x32xf32>
    %66 = tpu.matmul %44, %64, %cst_38 {dimension_numbers = #tpu.dot_dimension_numbers<[1], [0], [0], [1], [0, 0, 1, 1], [], []>} : vector<128x256xbf16>, vector<256x32xbf16>, vector<128x32xf32> -> vector<128x32xf32>
    %cst_39 = arith.constant dense<0.000000e+00> : vector<128x32xf32>
    %67 = tpu.matmul %63, %0, %cst_39 {dimension_numbers = #tpu.dot_dimension_numbers<[1], [0], [0], [1], [0, 0, 1, 1], [], []>} : vector<128x32xbf16>, vector<32x32xbf16>, vector<128x32xf32> -> vector<128x32xf32>
    %68 = arith.truncf %66 : vector<128x32xf32> to vector<128x32xbf16>
    %cst_40 = arith.constant dense<0.000000e+00> : vector<128x32xf32>
    %69 = tpu.matmul %68, %1, %cst_40 {dimension_numbers = #tpu.dot_dimension_numbers<[1], [0], [0], [1], [0, 0, 1, 1], [], []>} : vector<128x32xbf16>, vector<32x32xbf16>, vector<128x32xf32> -> vector<128x32xf32>
    %70 = arith.addf %67, %69 : vector<128x32xf32>
    %cst_41 = arith.constant dense<0.000000e+00> : vector<128x32xf32>
    %71 = tpu.matmul %65, %2, %cst_41 {dimension_numbers = #tpu.dot_dimension_numbers<[1], [0], [0], [1], [0, 0, 1, 1], [], []>} : vector<128x32xbf16>, vector<32x32xbf16>, vector<128x32xf32> -> vector<128x32xf32>
    %72 = arith.addf %70, %71 : vector<128x32xf32>
    %73 = arith.addf %72, %16 : vector<128x32xf32>
    %cst_42 = arith.constant 0.000000e+00 : f32
    %74 = vector.broadcast %cst_42 : f32 to vector<128x32xf32>
    %75 = arith.maximumf %73, %74 : vector<128x32xf32>
    %76 = arith.truncf %75 : vector<128x32xf32> to vector<128x32xbf16>
    %cst_43 = arith.constant dense<0.000000e+00> : vector<128x32xf32>
    %77 = tpu.matmul %76, %3, %cst_43 {dimension_numbers = #tpu.dot_dimension_numbers<[1], [0], [0], [1], [0, 0, 1, 1], [], []>} : vector<128x32xbf16>, vector<32x32xbf16>, vector<128x32xf32> -> vector<128x32xf32>
    %78 = arith.addf %77, %19 : vector<128x32xf32>
    %cst_44 = arith.constant 0.000000e+00 : f32
    %79 = vector.broadcast %cst_44 : f32 to vector<128x32xf32>
    %80 = arith.maximumf %78, %79 : vector<128x32xf32>
    %81 = arith.addf %80, %58 : vector<128x32xf32>
    %82 = arith.truncf %81 : vector<128x32xf32> to vector<128x32xbf16>
    %cst_45 = arith.constant dense<0.000000e+00> : vector<32xf32>
    %83 = vector.multi_reduction <add>, %81, %cst_45 [0] : vector<128x32xf32> to vector<32xf32>
    %84 = vector.shape_cast %83 : vector<32xf32> to vector<1x32xf32>
    %85 = arith.truncf %84 : vector<1x32xf32> to vector<1x32xbf16>
    %cst_46 = arith.constant dense<0.000000e+00> : vector<1x32xf32>
    %86 = tpu.matmul %85, %4, %cst_46 {dimension_numbers = #tpu.dot_dimension_numbers<[1], [0], [0], [1], [0, 0, 1, 1], [], []>} : vector<1x32xbf16>, vector<32x32xbf16>, vector<1x32xf32> -> vector<1x32xf32>
    %87 = arith.addf %86, %20 : vector<1x32xf32>
    %cst_47 = arith.constant 0.000000e+00 : f32
    %88 = vector.broadcast %cst_47 : f32 to vector<1x32xf32>
    %89 = arith.maximumf %87, %88 : vector<1x32xf32>
    %90 = arith.truncf %89 : vector<1x32xf32> to vector<1x32xbf16>
    %cst_48 = arith.constant dense<0.000000e+00> : vector<1x32xf32>
    %91 = tpu.matmul %90, %5, %cst_48 {dimension_numbers = #tpu.dot_dimension_numbers<[1], [0], [0], [1], [0, 0, 1, 1], [], []>} : vector<1x32xbf16>, vector<32x32xbf16>, vector<1x32xf32> -> vector<1x32xf32>
    %92 = arith.addf %91, %21 : vector<1x32xf32>
    %cst_49 = arith.constant 0.000000e+00 : f32
    %93 = vector.broadcast %cst_49 : f32 to vector<1x32xf32>
    %94 = arith.maximumf %92, %93 : vector<1x32xf32>
    %95 = vector.shape_cast %94 : vector<1x32xf32> to vector<1x32xf32>
    %96 = vector.broadcast %95 : vector<1x32xf32> to vector<128x32xf32>
    %97 = arith.addf %96, %60 : vector<128x32xf32>
    %cst_50 = arith.constant dense<0.000000e+00> : vector<128x32xf32>
    %98 = tpu.matmul %82, %6, %cst_50 {dimension_numbers = #tpu.dot_dimension_numbers<[1], [0], [0], [1], [0, 0, 1, 1], [], []>} : vector<128x32xbf16>, vector<32x32xbf16>, vector<128x32xf32> -> vector<128x32xf32>
    %99 = arith.truncf %98 : vector<128x32xf32> to vector<128x32xbf16>
    %cst_51 = arith.constant dense<0.000000e+00> : vector<128x32xf32>
    %100 = tpu.matmul %82, %7, %cst_51 {dimension_numbers = #tpu.dot_dimension_numbers<[1], [0], [0], [1], [0, 0, 1, 1], [], []>} : vector<128x32xbf16>, vector<32x32xbf16>, vector<128x32xf32> -> vector<128x32xf32>
    %101 = arith.truncf %100 : vector<128x32xf32> to vector<128x32xbf16>
    %cst_52 = arith.constant dense<0.000000e+00> : vector<256x32xf32>
    %102 = tpu.matmul %50, %99, %cst_52 {dimension_numbers = #tpu.dot_dimension_numbers<[1], [0], [0], [1], [0, 0, 1, 1], [], []>} : vector<256x128xbf16>, vector<128x32xbf16>, vector<256x32xf32> -> vector<256x32xf32>
    %cst_53 = arith.constant dense<0.000000e+00> : vector<256x32xf32>
    %103 = tpu.matmul %56, %101, %cst_53 {dimension_numbers = #tpu.dot_dimension_numbers<[1], [0], [0], [1], [0, 0, 1, 1], [], []>} : vector<256x128xbf16>, vector<128x32xbf16>, vector<256x32xf32> -> vector<256x32xf32>
    %104 = arith.addf %102, %103 : vector<256x32xf32>
    %cst_54 = arith.constant dense<0.000000e+00> : vector<256x32xf32>
    %105 = tpu.matmul %64, %8, %cst_54 {dimension_numbers = #tpu.dot_dimension_numbers<[1], [0], [0], [1], [0, 0, 1, 1], [], []>} : vector<256x32xbf16>, vector<32x32xbf16>, vector<256x32xf32> -> vector<256x32xf32>
    %106 = arith.addf %104, %105 : vector<256x32xf32>
    %107 = arith.addf %106, %24 : vector<256x32xf32>
    %cst_55 = arith.constant 0.000000e+00 : f32
    %108 = vector.broadcast %cst_55 : f32 to vector<256x32xf32>
    %109 = arith.maximumf %107, %108 : vector<256x32xf32>
    %110 = arith.truncf %109 : vector<256x32xf32> to vector<256x32xbf16>
    %cst_56 = arith.constant dense<0.000000e+00> : vector<256x32xf32>
    %111 = tpu.matmul %110, %9, %cst_56 {dimension_numbers = #tpu.dot_dimension_numbers<[1], [0], [0], [1], [0, 0, 1, 1], [], []>} : vector<256x32xbf16>, vector<32x32xbf16>, vector<256x32xf32> -> vector<256x32xf32>
    %112 = arith.addf %111, %27 : vector<256x32xf32>
    %cst_57 = arith.constant 0.000000e+00 : f32
    %113 = vector.broadcast %cst_57 : f32 to vector<256x32xf32>
    %114 = arith.maximumf %112, %113 : vector<256x32xf32>
    %115 = arith.addf %114, %62 : vector<256x32xf32>
    %116 = arith.truncf %115 : vector<256x32xf32> to vector<256x32xbf16>
    %117 = arith.truncf %97 : vector<128x32xf32> to vector<128x32xbf16>
    %cst_58 = arith.constant dense<0.000000e+00> : vector<128x32xf32>
    %118 = tpu.matmul %44, %116, %cst_58 {dimension_numbers = #tpu.dot_dimension_numbers<[1], [0], [0], [1], [0, 0, 1, 1], [], []>} : vector<128x256xbf16>, vector<256x32xbf16>, vector<128x32xf32> -> vector<128x32xf32>
    %cst_59 = arith.constant dense<0.000000e+00> : vector<128x32xf32>
    %119 = tpu.matmul %82, %0, %cst_59 {dimension_numbers = #tpu.dot_dimension_numbers<[1], [0], [0], [1], [0, 0, 1, 1], [], []>} : vector<128x32xbf16>, vector<32x32xbf16>, vector<128x32xf32> -> vector<128x32xf32>
    %120 = arith.truncf %118 : vector<128x32xf32> to vector<128x32xbf16>
    %cst_60 = arith.constant dense<0.000000e+00> : vector<128x32xf32>
    %121 = tpu.matmul %120, %1, %cst_60 {dimension_numbers = #tpu.dot_dimension_numbers<[1], [0], [0], [1], [0, 0, 1, 1], [], []>} : vector<128x32xbf16>, vector<32x32xbf16>, vector<128x32xf32> -> vector<128x32xf32>
    %122 = arith.addf %119, %121 : vector<128x32xf32>
    %cst_61 = arith.constant dense<0.000000e+00> : vector<128x32xf32>
    %123 = tpu.matmul %117, %2, %cst_61 {dimension_numbers = #tpu.dot_dimension_numbers<[1], [0], [0], [1], [0, 0, 1, 1], [], []>} : vector<128x32xbf16>, vector<32x32xbf16>, vector<128x32xf32> -> vector<128x32xf32>
    %124 = arith.addf %122, %123 : vector<128x32xf32>
    %125 = arith.addf %124, %16 : vector<128x32xf32>
    %cst_62 = arith.constant 0.000000e+00 : f32
    %126 = vector.broadcast %cst_62 : f32 to vector<128x32xf32>
    %127 = arith.maximumf %125, %126 : vector<128x32xf32>
    %128 = arith.truncf %127 : vector<128x32xf32> to vector<128x32xbf16>
    %cst_63 = arith.constant dense<0.000000e+00> : vector<128x32xf32>
    %129 = tpu.matmul %128, %3, %cst_63 {dimension_numbers = #tpu.dot_dimension_numbers<[1], [0], [0], [1], [0, 0, 1, 1], [], []>} : vector<128x32xbf16>, vector<32x32xbf16>, vector<128x32xf32> -> vector<128x32xf32>
    %130 = arith.addf %129, %19 : vector<128x32xf32>
    %cst_64 = arith.constant 0.000000e+00 : f32
    %131 = vector.broadcast %cst_64 : f32 to vector<128x32xf32>
    %132 = arith.maximumf %130, %131 : vector<128x32xf32>
    %133 = arith.addf %132, %81 : vector<128x32xf32>
    %134 = arith.truncf %133 : vector<128x32xf32> to vector<128x32xbf16>
    %cst_65 = arith.constant dense<0.000000e+00> : vector<128x32xf32>
    %135 = tpu.matmul %134, %10, %cst_65 {dimension_numbers = #tpu.dot_dimension_numbers<[1], [0], [0], [1], [0, 0, 1, 1], [], []>} : vector<128x32xbf16>, vector<32x32xbf16>, vector<128x32xf32> -> vector<128x32xf32>
    %136 = vector.broadcast %28 : vector<1x32xf32> to vector<128x32xf32>
    %137 = arith.addf %135, %136 : vector<128x32xf32>
    %cst_66 = arith.constant 0.000000e+00 : f32
    %138 = vector.broadcast %cst_66 : f32 to vector<128x32xf32>
    %139 = arith.maximumf %137, %138 : vector<128x32xf32>
    %140 = arith.truncf %139 : vector<128x32xf32> to vector<128x32xbf16>
    %cst_67 = arith.constant dense<0.000000e+00> : vector<128x32xf32>
    %141 = tpu.matmul %140, %11, %cst_67 {dimension_numbers = #tpu.dot_dimension_numbers<[1], [0], [0], [1], [0, 0, 1, 1], [], []>} : vector<128x32xbf16>, vector<32x32xbf16>, vector<128x32xf32> -> vector<128x32xf32>
    %142 = vector.broadcast %29 : vector<1x32xf32> to vector<128x32xf32>
    %143 = arith.addf %141, %142 : vector<128x32xf32>
    %cst_68 = arith.constant 0.000000e+00 : f32
    %144 = vector.broadcast %cst_68 : f32 to vector<128x32xf32>
    %145 = arith.maximumf %143, %144 : vector<128x32xf32>
    %146 = arith.truncf %145 : vector<128x32xf32> to vector<128x32xbf16>
    %cst_69 = arith.constant dense<0.000000e+00> : vector<128x32xf32>
    %147 = tpu.matmul %146, %12, %cst_69 {dimension_numbers = #tpu.dot_dimension_numbers<[1], [0], [0], [1], [0, 0, 1, 1], [], []>} : vector<128x32xbf16>, vector<32x32xbf16>, vector<128x32xf32> -> vector<128x32xf32>
    %148 = vector.broadcast %30 : vector<1x32xf32> to vector<128x32xf32>
    %149 = arith.addf %147, %148 : vector<128x32xf32>
    %150 = math.tanh %149 : vector<128x32xf32>
    %c0_70 = arith.constant 0 : index
    %c0_71 = arith.constant 0 : index
    %c0_72 = arith.constant 0 : index
    %151 = vector.load %arg8[%c0_70, %c0_71, %c0_72] : memref<1x128x32xf32, #tpu.memory_space<vmem>>, vector<1x128x32xf32>
    %152 = vector.shape_cast %151 : vector<1x128x32xf32> to vector<128x32xf32>
    %153 = vector.shape_cast %150 : vector<128x32xf32> to vector<1x128x32xf32>
    tpu.vector_store %arg8[%c0_70, %c0_71, %c0_72], %153 {strides = array<i32>} : memref<1x128x32xf32, #tpu.memory_space<vmem>>, vector<1x128x32xf32>,
    return
  }
  func.func @transform_0(%arg0: i32) -> (i32, i32, i32) {
    %c0_i32 = arith.constant 0 : i32
    %c0_i32_0 = arith.constant 0 : i32
    %c0_i32_1 = arith.constant 0 : i32
    return %arg0, %c0_i32, %c0_i32_0 : i32, i32, i32
  }
  func.func @transform_1(%arg0: i32) -> (i32, i32, i32) {
    %c0_i32 = arith.constant 0 : i32
    %c0_i32_0 = arith.constant 0 : i32
    %c0_i32_1 = arith.constant 0 : i32
    return %arg0, %c0_i32, %c0_i32_0 : i32, i32, i32
  }
  func.func @transform_2(%arg0: i32) -> (i32, i32, i32) {
    %c0_i32 = arith.constant 0 : i32
    %c0_i32_0 = arith.constant 0 : i32
    %c0_i32_1 = arith.constant 0 : i32
    return %arg0, %c0_i32, %c0_i32_0 : i32, i32, i32
  }
  func.func @transform_3(%arg0: i32) -> (i32, i32, i32) {
    %c0_i32 = arith.constant 0 : i32
    %c0_i32_0 = arith.constant 0 : i32
    %c0_i32_1 = arith.constant 0 : i32
    return %arg0, %c0_i32, %c0_i32_0 : i32, i32, i32
  }
  func.func @transform_4(%arg0: i32) -> (i32, i32, i32) {
    %c0_i32 = arith.constant 0 : i32
    %c0_i32_0 = arith.constant 0 : i32
    %c0_i32_1 = arith.constant 0 : i32
    return %arg0, %c0_i32, %c0_i32_0 : i32, i32, i32
  }
  func.func @transform_5(%arg0: i32) -> (i32, i32) {
    %c0_i32 = arith.constant 0 : i32
    %c0_i32_0 = arith.constant 0 : i32
    %c0_i32_1 = arith.constant 0 : i32
    return %c0_i32, %c0_i32_0 : i32, i32
  }
  func.func @transform_6(%arg0: i32) -> (i32, i32) {
    %c0_i32 = arith.constant 0 : i32
    %c0_i32_0 = arith.constant 0 : i32
    %c0_i32_1 = arith.constant 0 : i32
    return %c0_i32, %c0_i32_0 : i32, i32
  }
  func.func @transform_7(%arg0: i32) -> (i32, i32, i32) {
    %c0_i32 = arith.constant 0 : i32
    %c0_i32_0 = arith.constant 0 : i32
    %c0_i32_1 = arith.constant 0 : i32
    return %arg0, %c0_i32, %c0_i32_0 : i32, i32, i32
  }
}

</mosaic_0001>

<llo_original>
// kernel: tpu_custom_call.1
$region0: #{tpu_custom_call.1}
  #allocation0 [shape = 'u32[]', space=smem, size = 0x4, offset = 0x4, fixed_abs, tag = 'smem constant byte address 0x4 - core index']
  #allocation1 [shape = 'u32[72,128]{1,0:T(1,128)}', space=vmem, size = 0x9000, scoped, tag = 'internal scratch']
  %s0 = inlined_call_operand.vmem [shape: f32[8,256,32], index: 0, kind: input, shape index: {}]
  %s1 = inlined_call_operand.vmem [shape: f32[8,256,32], index: 1, kind: input, shape index: {}]
  %s2 = inlined_call_operand.vmem [shape: s32[8,1,256], index: 2, kind: input, shape index: {}]
  %s3 = inlined_call_operand.vmem [shape: s32[8,256,1], index: 3, kind: input, shape index: {}]
  %s4 = inlined_call_operand.vmem [shape: s32[8,256,1], index: 4, kind: input, shape index: {}]
  %s5 = inlined_call_operand.vmem [shape: bf16[416,32], index: 5, kind: input, shape index: {}]
  %s6 = inlined_call_operand.vmem [shape: f32[16,32], index: 6, kind: input, shape index: {}]
  %s7 = inlined_call_operand.vmem [shape: f32[8,128,32], index: 7, kind: output, shape index: {}]
  %s8 = sld [smem:[#allocation0]]
  $region61: #{tpu_custom_call.1} parent=0
    _
  %s10 = ssub.s32 1, %s8
  %s11 = scalar_select 0, %s10, %s8
  loop: start=0, step=1, limit=10
  $region2: #{tpu_custom_call.1} parent=0 // loop_pre_header
    _
  $region3: #{tpu_custom_call.1} parent=0 // loop_header
    %s13 = sphi 0, %s17
    %p14 = scmp.ge.s32.totalorder %s13, 10
    %s23 = sphi 0, %s25
    %s26 = sphi 0, %s23
    %s27 = sphi 0, %s26
    %s43 = sphi 0, %s27
    %s49 = sphi 0, %s51
    %s52 = sphi 0, %s49
    %s53 = sphi 0, %s52
    %s69 = sphi 0, %s53
    %s75 = sphi 0, %s77
    %s78 = sphi 0, %s75
    %s79 = sphi 0, %s78
    %s95 = sphi 0, %s79
    %s101 = sphi 0, %s103
    %s104 = sphi 0, %s101
    %s105 = sphi 0, %s104
    %s121 = sphi 0, %s105
    %s127 = sphi 0, %s129
    %s130 = sphi 0, %s127
    %s131 = sphi 0, %s130
    %s147 = sphi 0, %s131
    %s151 = sphi 0, %s151
    %s153 = sphi 0, %s151
    %s154 = sphi 0, %s153
    %s168 = sphi 0, %s154
    %s172 = sphi 0, %s172
    %s174 = sphi 0, %s172
    %s175 = sphi 0, %s174
    %s189 = sphi 0, %s175
    %s195 = sphi 0, %s197
    %s198 = sphi 0, %s195
    %s199 = sphi 0, %s198
    %s215 = sphi 0, %s199
  $region4: #{tpu_custom_call.1} parent=0 // loop_header_branch
    %16 = sbr.rel (%p14) target = $region8
  $region5: #{tpu_custom_call.1} parent=0 // loop_body
    %s18 = ssub.s32 %s13, 1
    %s19 = ssub.s32 %s13, 2
    %s20 = sadd.s32 %s13, 1
    %s21 = ssub.s32 %s13, %s20
    %p22 = scmp.eq.s32.totalorder %s21, 0
    %s24 = sadd.s32 %s23, 1
    %s25 = scalar_select %p22, %s23, %s24
    %p28 = pneg %p22
    %p29 = scmp.eq.s32.totalorder %s13, 7
    %p30 = por %p28, %p29
    %p31 = scmp.ne.s32.totalorder %s23, %s26
    %p32 = scmp.eq.s32.totalorder %s13, 0
    %p33 = por %p31, %p32
    %p34 = scmp.ne.s32.totalorder %s23, %s26
    %p35 = scmp.eq.s32.totalorder %s18, 7
    %p36 = por %p34, %p35
    %p37 = scmp.ne.s32.totalorder %s26, %s27
    %p38 = scmp.eq.s32.totalorder %s18, 0
    %p39 = por %p37, %p38
    %p40 = scmp.ne.s32.totalorder %s26, %s27
    %p41 = scmp.eq.s32.totalorder %s19, 7
    %p42 = por %p40, %p41
    %p44 = scmp.ne.s32.totalorder %s27, %s43
    %p45 = scmp.eq.s32.totalorder %s19, 0
    %p46 = por %p44, %p45
    %s47 = ssub.s32 %s13, %s20
    %p48 = scmp.eq.s32.totalorder %s47, 0
    %s50 = sadd.s32 %s49, 1
    %s51 = scalar_select %p48, %s49, %s50
    %p54 = pneg %p48
    %p55 = scmp.eq.s32.totalorder %s13, 7
    %p56 = por %p54, %p55
    %p57 = scmp.ne.s32.totalorder %s49, %s52
    %p58 = scmp.eq.s32.totalorder %s13, 0
    %p59 = por %p57, %p58
    %p60 = scmp.ne.s32.totalorder %s49, %s52
    %p61 = scmp.eq.s32.totalorder %s18, 7
    %p62 = por %p60, %p61
    %p63 = scmp.ne.s32.totalorder %s52, %s53
    %p64 = scmp.eq.s32.totalorder %s18, 0
    %p65 = por %p63, %p64
    %p66 = scmp.ne.s32.totalorder %s52, %s53
    %p67 = scmp.eq.s32.totalorder %s19, 7
    %p68 = por %p66, %p67
    %p70 = scmp.ne.s32.totalorder %s53, %s69
    %p71 = scmp.eq.s32.totalorder %s19, 0
    %p72 = por %p70, %p71
    %s73 = ssub.s32 %s13, %s20
    %p74 = scmp.eq.s32.totalorder %s73, 0
    %s76 = sadd.s32 %s75, 1
    %s77 = scalar_select %p74, %s75, %s76
    %p80 = pneg %p74
    %p81 = scmp.eq.s32.totalorder %s13, 7
    %p82 = por %p80, %p81
    %p83 = scmp.ne.s32.totalorder %s75, %s78
    %p84 = scmp.eq.s32.totalorder %s13, 0
    %p85 = por %p83, %p84
    %p86 = scmp.ne.s32.totalorder %s75, %s78
    %p87 = scmp.eq.s32.totalorder %s18, 7
    %p88 = por %p86, %p87
    %p89 = scmp.ne.s32.totalorder %s78, %s79
    %p90 = scmp.eq.s32.totalorder %s18, 0
    %p91 = por %p89, %p90
    %p92 = scmp.ne.s32.totalorder %s78, %s79
    %p93 = scmp.eq.s32.totalorder %s19, 7
    %p94 = por %p92, %p93
    %p96 = scmp.ne.s32.totalorder %s79, %s95
    %p97 = scmp.eq.s32.totalorder %s19, 0
    %p98 = por %p96, %p97
    %s99 = ssub.s32 %s13, %s20
    %p100 = scmp.eq.s32.totalorder %s99, 0
    %s102 = sadd.s32 %s101, 1
    %s103 = scalar_select %p100, %s101, %s102
    %p106 = pneg %p100
    %p107 = scmp.eq.s32.totalorder %s13, 7
    %p108 = por %p106, %p107
    %p109 = scmp.ne.s32.totalorder %s101, %s104
    %p110 = scmp.eq.s32.totalorder %s13, 0
    %p111 = por %p109, %p110
    %p112 = scmp.ne.s32.totalorder %s101, %s104
    %p113 = scmp.eq.s32.totalorder %s18, 7
    %p114 = por %p112, %p113
    %p115 = scmp.ne.s32.totalorder %s104, %s105
    %p116 = scmp.eq.s32.totalorder %s18, 0
    %p117 = por %p115, %p116
    %p118 = scmp.ne.s32.totalorder %s104, %s105
    %p119 = scmp.eq.s32.totalorder %s19, 7
    %p120 = por %p118, %p119
    %p122 = scmp.ne.s32.totalorder %s105, %s121
    %p123 = scmp.eq.s32.totalorder %s19, 0
    %p124 = por %p122, %p123
    %s125 = ssub.s32 %s13, %s20
    %p126 = scmp.eq.s32.totalorder %s125, 0
    %s128 = sadd.s32 %s127, 1
    %s129 = scalar_select %p126, %s127, %s128
    %p132 = pneg %p126
    %p133 = scmp.eq.s32.totalorder %s13, 7
    %p134 = por %p132, %p133
    %p135 = scmp.ne.s32.totalorder %s127, %s130
    %p136 = scmp.eq.s32.totalorder %s13, 0
    %p137 = por %p135, %p136
    %p138 = scmp.ne.s32.totalorder %s127, %s130
    %p139 = scmp.eq.s32.totalorder %s18, 7
    %p140 = por %p138, %p139
    %p141 = scmp.ne.s32.totalorder %s130, %s131
    %p142 = scmp.eq.s32.totalorder %s18, 0
    %p143 = por %p141, %p142
    %p144 = scmp.ne.s32.totalorder %s130, %s131
    %p145 = scmp.eq.s32.totalorder %s19, 7
    %p146 = por %p144, %p145
    %p148 = scmp.ne.s32.totalorder %s131, %s147
    %p149 = scmp.eq.s32.totalorder %s19, 0
    %p150 = por %p148, %p149
    %s152 = sadd.s32 %s151, 1
    %p155 = scmp.eq.s32.totalorder %s13, 7
    %p156 = scmp.ne.s32.totalorder %s151, %s153
    %p157 = scmp.eq.s32.totalorder %s13, 0
    %p158 = por %p156, %p157
    %p159 = scmp.ne.s32.totalorder %s151, %s153
    %p160 = scmp.eq.s32.totalorder %s18, 7
    %p161 = por %p159, %p160
    %p162 = scmp.ne.s32.totalorder %s153, %s154
    %p163 = scmp.eq.s32.totalorder %s18, 0
    %p164 = por %p162, %p163
    %p165 = scmp.ne.s32.totalorder %s153, %s154
    %p166 = scmp.eq.s32.totalorder %s19, 7
    %p167 = por %p165, %p166
    %p169 = scmp.ne.s32.totalorder %s154, %s168
    %p170 = scmp.eq.s32.totalorder %s19, 0
    %p171 = por %p169, %p170
    %s173 = sadd.s32 %s172, 1
    %p176 = scmp.eq.s32.totalorder %s13, 7
    %p177 = scmp.ne.s32.totalorder %s172, %s174
    %p178 = scmp.eq.s32.totalorder %s13, 0
    %p179 = por %p177, %p178
    %p180 = scmp.ne.s32.totalorder %s172, %s174
    %p181 = scmp.eq.s32.totalorder %s18, 7
    %p182 = por %p180, %p181
    %p183 = scmp.ne.s32.totalorder %s174, %s175
    %p184 = scmp.eq.s32.totalorder %s18, 0
    %p185 = por %p183, %p184
    %p186 = scmp.ne.s32.totalorder %s174, %s175
    %p187 = scmp.eq.s32.totalorder %s19, 7
    %p188 = por %p186, %p187
    %p190 = scmp.ne.s32.totalorder %s175, %s189
    %p191 = scmp.eq.s32.totalorder %s19, 0
    %p192 = por %p190, %p191
    %s193 = ssub.s32 %s13, %s20
    %p194 = scmp.eq.s32.totalorder %s193, 0
    %s196 = sadd.s32 %s195, 1
    %s197 = scalar_select %p194, %s195, %s196
    %p200 = pneg %p194
    %p201 = scmp.eq.s32.totalorder %s13, 7
    %p202 = por %p200, %p201
    %p203 = scmp.ne.s32.totalorder %s195, %s198
    %p204 = scmp.eq.s32.totalorder %s13, 0
    %p205 = por %p203, %p204
    %p206 = scmp.ne.s32.totalorder %s195, %s198
    %p207 = scmp.eq.s32.totalorder %s18, 7
    %p208 = por %p206, %p207
    %p209 = scmp.ne.s32.totalorder %s198, %s199
    %p210 = scmp.eq.s32.totalorder %s18, 0
    %p211 = por %p209, %p210
    %p212 = scmp.ne.s32.totalorder %s198, %s199
    %p213 = scmp.eq.s32.totalorder %s19, 7
    %p214 = por %p212, %p213
    %p216 = scmp.ne.s32.totalorder %s199, %s215
    %p217 = scmp.eq.s32.totalorder %s19, 0
    %p218 = por %p216, %p217
    %p219 = scmp.le.s32.totalorder 1, %s13
    %p220 = scmp.lt.s32.totalorder %s13, 9
    %p221 = pnand %p219, %p220
    %p222 = pneg %p221
    // Predicated region
    $region9: #{tpu_custom_call.1} parent=5 // pred_check
      _
    $region10: #{tpu_custom_call.1} parent=5 // pred_check_branch
      %224 = sbr.rel (%p221) target = $region12
    $region11: #{tpu_custom_call.1} parent=5 // pred_region
      %s225 = ssub.s32 %s13, 1
      // Predicated region
      $region13: #{tpu_custom_call.1} parent=11 // pred_check
        %p226 = pneg %p164
      $region14: #{tpu_custom_call.1} parent=11 // pred_check_branch
        %228 = sbr.rel (%p226) target = $region16
      $region15: #{tpu_custom_call.1} parent=11 // pred_region
        _
      $region16: #{tpu_custom_call.1} parent=11 // pred_fallthru
        _
      // Predicated region
      $region17: #{tpu_custom_call.1} parent=11 // pred_check
        %p229 = pneg %p185
      $region18: #{tpu_custom_call.1} parent=11 // pred_check_branch
        %231 = sbr.rel (%p229) target = $region20
      $region19: #{tpu_custom_call.1} parent=11 // pred_region
        _
      $region20: #{tpu_custom_call.1} parent=11 // pred_fallthru
        _
    $region12: #{tpu_custom_call.1} parent=5 // pred_fallthru
      _
    %p232 = scmp.lt.s32.totalorder %s13, 8
    // Predicated region
    $region21: #{tpu_custom_call.1} parent=5 // pred_check
      %p233 = pneg %p232
    $region22: #{tpu_custom_call.1} parent=5 // pred_check_branch
      %235 = sbr.rel (%p233) target = $region24
    $region23: #{tpu_custom_call.1} parent=5 // pred_region
      // Predicated region
      $region25: #{tpu_custom_call.1} parent=23 // pred_check
        %p236 = pneg %p33
      $region26: #{tpu_custom_call.1} parent=23 // pred_check_branch
        %238 = sbr.rel (%p236) target = $region28
      $region27: #{tpu_custom_call.1} parent=23 // pred_region
        %p239 = scmp.lt.s32.totalorder %s13, 7
        %s240 = scalar_select %p239, %s13, 7
        %s241 = smul.addr %s240, 32
        %s242 = smul.addr %s241, 8
        %s243 = scalar_lea.vmem %s0, %s242
      $region28: #{tpu_custom_call.1} parent=23 // pred_fallthru
        _
      // Predicated region
      $region29: #{tpu_custom_call.1} parent=23 // pred_check
        %p244 = pneg %p59
      $region30: #{tpu_custom_call.1} parent=23 // pred_check_branch
        %246 = sbr.rel (%p244) target = $region32
      $region31: #{tpu_custom_call.1} parent=23 // pred_region
        %p247 = scmp.lt.s32.totalorder %s13, 7
        %s248 = scalar_select %p247, %s13, 7
        %s249 = smul.addr %s248, 32
        %s250 = smul.addr %s249, 8
        %s251 = scalar_lea.vmem %s1, %s250
      $region32: #{tpu_custom_call.1} parent=23 // pred_fallthru
        _
      // Predicated region
      $region33: #{tpu_custom_call.1} parent=23 // pred_check
        %p252 = pneg %p85
      $region34: #{tpu_custom_call.1} parent=23 // pred_check_branch
        %254 = sbr.rel (%p252) target = $region36
      $region35: #{tpu_custom_call.1} parent=23 // pred_region
        %p255 = scmp.lt.s32.totalorder %s13, 7
        %s256 = scalar_select %p255, %s13, 7
        %s257 = smul.addr %s256, 2
        %s258 = scalar_lea.vmem %s2, %s257
      $region36: #{tpu_custom_call.1} parent=23 // pred_fallthru
        _
      // Predicated region
      $region37: #{tpu_custom_call.1} parent=23 // pred_check
        %p259 = pneg %p111
      $region38: #{tpu_custom_call.1} parent=23 // pred_check_branch
        %261 = sbr.rel (%p259) target = $region40
      $region39: #{tpu_custom_call.1} parent=23 // pred_region
        %p262 = scmp.lt.s32.totalorder %s13, 7
        %s263 = scalar_select %p262, %s13, 7
        %s264 = smul.addr %s263, 32
        %s265 = smul.addr %s264, 8
        %s266 = scalar_lea.vmem %s3, %s265
      $region40: #{tpu_custom_call.1} parent=23 // pred_fallthru
        _
      // Predicated region
      $region41: #{tpu_custom_call.1} parent=23 // pred_check
        %p267 = pneg %p137
      $region42: #{tpu_custom_call.1} parent=23 // pred_check_branch
        %269 = sbr.rel (%p267) target = $region44
      $region43: #{tpu_custom_call.1} parent=23 // pred_region
        %p270 = scmp.lt.s32.totalorder %s13, 7
        %s271 = scalar_select %p270, %s13, 7
        %s272 = smul.addr %s271, 32
        %s273 = smul.addr %s272, 8
        %s274 = scalar_lea.vmem %s4, %s273
      $region44: #{tpu_custom_call.1} parent=23 // pred_fallthru
        _
    $region24: #{tpu_custom_call.1} parent=5 // pred_fallthru
      _
    %p275 = scmp.le.s32.totalorder 1, %s13
    %p276 = scmp.lt.s32.totalorder %s13, 9
    %p277 = pnand %p275, %p276
    %p278 = pneg %p277
    // Predicated region
    $region45: #{tpu_custom_call.1} parent=5 // pred_check
      _
    $region46: #{tpu_custom_call.1} parent=5 // pred_check_branch
      %280 = sbr.rel (%p277) target = $region48
    $region47: #{tpu_custom_call.1} parent=5 // pred_region
      %s281 = ssub.s32 %s13, 1
      %p282 = scmp.lt.s32.totalorder %s18, 7
      %s283 = scalar_select %p282, %s18, 7
      %s284 = smul.addr %s283, 32
      %s285 = smul.addr %s284, 8
      %s286 = scalar_lea.vmem %s0, %s285
      %p287 = pneg %p39
      %p288 = pneg %p36
      %p289 = scmp.lt.s32.totalorder %s18, 7
      %s290 = scalar_select %p289, %s18, 7
      %s291 = smul.addr %s290, 32
      %s292 = smul.addr %s291, 8
      %s293 = scalar_lea.vmem %s1, %s292
      %p294 = pneg %p65
      %p295 = pneg %p62
      %p296 = scmp.lt.s32.totalorder %s18, 7
      %s297 = scalar_select %p296, %s18, 7
      %s298 = smul.addr %s297, 2
      %s299 = scalar_lea.vmem %s2, %s298
      %p300 = pneg %p91
      %p301 = pneg %p88
      %p302 = scmp.lt.s32.totalorder %s18, 7
      %s303 = scalar_select %p302, %s18, 7
      %s304 = smul.addr %s303, 32
      %s305 = smul.addr %s304, 8
      %s306 = scalar_lea.vmem %s3, %s305
      %p307 = pneg %p117
      %p308 = pneg %p114
      %p309 = scmp.lt.s32.totalorder %s18, 7
      %s310 = scalar_select %p309, %s18, 7
      %s311 = smul.addr %s310, 32
      %s312 = smul.addr %s311, 8
      %s313 = scalar_lea.vmem %s4, %s312
      %p314 = pneg %p143
      %p315 = pneg %p140
      %p316 = pneg %p164
      %p317 = pneg %p161
      %p318 = pneg %p185
      %p319 = pneg %p182
      %p320 = pneg %p211
      %p321 = pneg %p208
      %p322 = scmp.lt.s32.totalorder %s18, 7
      %s323 = scalar_select %p322, %s18, 7
      %s324 = smul.addr %s323, 16
      %s325 = smul.addr %s324, 8
      %s326 = scalar_lea.vmem %s7, %s325
      %p327 = scmp.lt.s32.totalorder %s18, 7
      %s328 = scalar_select %p327, %s18, 7
      %s329 = smul.addr %s328, 32
      %s330 = smul.addr %s329, 8
      %s331 = scalar_lea.vmem %s0, %s330
      %p332 = scmp.lt.s32.totalorder %s18, 7
      %s333 = scalar_select %p332, %s18, 7
      %s334 = smul.addr %s333, 32
      %s335 = smul.addr %s334, 8
      %s336 = scalar_lea.vmem %s1, %s335
      %p337 = scmp.lt.s32.totalorder %s18, 7
      %s338 = scalar_select %p337, %s18, 7
      %s339 = smul.addr %s338, 2
      %s340 = scalar_lea.vmem %s2, %s339
      %p341 = scmp.lt.s32.totalorder %s18, 7
      %s342 = scalar_select %p341, %s18, 7
      %s343 = smul.addr %s342, 32
      %s344 = smul.addr %s343, 8
      %s345 = scalar_lea.vmem %s3, %s344
      %p346 = scmp.lt.s32.totalorder %s18, 7
      %s347 = scalar_select %p346, %s18, 7
      %s348 = smul.addr %s347, 32
      %s349 = smul.addr %s348, 8
      %s350 = scalar_lea.vmem %s4, %s349
      %p351 = scmp.lt.s32.totalorder %s18, 7
      %s352 = scalar_select %p351, %s18, 7
      %s353 = smul.addr %s352, 16
      %s354 = smul.addr %s353, 8
      %s355 = scalar_lea.vmem %s7, %s354
      %v357 = vld [vmem:[%s5] sm:$0xf]
      %v358 = vld [vmem:[%s5 + $0x4] sm:$0xf]
      %v359 = vld [vmem:[%s5 + $0x8] sm:$0xf]
      %v360 = vld [vmem:[%s5 + $0xc] sm:$0xf]
      %v361 = vld [vmem:[%s5 + $0x10] sm:$0xf]
      %v362 = vld [vmem:[%s5 + $0x14] sm:$0xf]
      %v363 = vld [vmem:[%s5 + $0x18] sm:$0xf]
      %v364 = vld [vmem:[%s5 + $0x1c] sm:$0xf]
      %v365 = vld [vmem:[%s5 + $0x20] sm:$0xf]
      %v366 = vld [vmem:[%s5 + $0x24] sm:$0xf]
      %v367 = vld [vmem:[%s5 + $0x28] sm:$0xf]
      %v368 = vld [vmem:[%s5 + $0x2c] sm:$0xf]
      %v369 = vld [vmem:[%s5 + $0x30] sm:$0xf]
      %v370 = vld [vmem:[%s5 + $0x34] sm:$0xf]
      %v371 = vld [vmem:[%s5 + $0x38] sm:$0xf]
      %v372 = vld [vmem:[%s5 + $0x3c] sm:$0xf]
      %v373 = vld [vmem:[%s5 + $0x40] sm:$0xf]
      %v374 = vld [vmem:[%s5 + $0x44] sm:$0xf]
      %v375 = vld [vmem:[%s5 + $0x48] sm:$0xf]
      %v376 = vld [vmem:[%s5 + $0x4c] sm:$0xf]
      %v377 = vld [vmem:[%s5 + $0x50] sm:$0xf]
      %v378 = vld [vmem:[%s5 + $0x54] sm:$0xf]
      %v379 = vld [vmem:[%s5 + $0x58] sm:$0xf]
      %v380 = vld [vmem:[%s5 + $0x5c] sm:$0xf]
      %v381 = vld [vmem:[%s5 + $0x60] sm:$0xf]
      %v382 = vld [vmem:[%s5 + $0x64] sm:$0xf]
      %v383 = vld [vmem:[%s5 + $0x68] sm:$0xf]
      %v384 = vld [vmem:[%s5 + $0x6c] sm:$0xf]
      %v385 = vld [vmem:[%s5 + $0x70] sm:$0xf]
      %v386 = vld [vmem:[%s5 + $0x74] sm:$0xf]
      %v387 = vld [vmem:[%s5 + $0x78] sm:$0xf]
      %v388 = vld [vmem:[%s5 + $0x7c] sm:$0xf]
      %v389 = vld [vmem:[%s5 + $0x80] sm:$0xf]
      %v390 = vld [vmem:[%s5 + $0x84] sm:$0xf]
      %v391 = vld [vmem:[%s5 + $0x88] sm:$0xf]
      %v392 = vld [vmem:[%s5 + $0x8c] sm:$0xf]
      %v393 = vld [vmem:[%s5 + $0x90] sm:$0xf]
      %v394 = vld [vmem:[%s5 + $0x94] sm:$0xf]
      %v395 = vld [vmem:[%s5 + $0x98] sm:$0xf]
      %v396 = vld [vmem:[%s5 + $0x9c] sm:$0xf]
      %v397 = vld [vmem:[%s5 + $0xa0] sm:$0xf]
      %v398 = vld [vmem:[%s5 + $0xa4] sm:$0xf]
      %v399 = vld [vmem:[%s5 + $0xa8] sm:$0xf]
      %v400 = vld [vmem:[%s5 + $0xac] sm:$0xf]
      %v401 = vld [vmem:[%s5 + $0xb0] sm:$0xf]
      %v402 = vld [vmem:[%s5 + $0xb4] sm:$0xf]
      %v403 = vld [vmem:[%s5 + $0xb8] sm:$0xf]
      %v404 = vld [vmem:[%s5 + $0xbc] sm:$0xf]
      %v405 = vld [vmem:[%s5 + $0xc0] sm:$0xf]
      %v406 = vld [vmem:[%s5 + $0xc4] sm:$0xf]
      %v407 = vld [vmem:[%s5 + $0xc8] sm:$0xf]
      %v408 = vld [vmem:[%s5 + $0xcc] sm:$0xf]
      %v409 = vld [vmem:[%s6] sm:$0xff]
      %v410 = vld [vmem:[%s6 + $0x8] sm:$0xff]
      %v411 = vperm.slane %v409, 0
      %v412 = vperm.slane %v409, 1
      %v413 = vperm.slane %v409, 4
      %v414 = vperm.slane %v409, 5
      %v415 = vld [vmem:[%s340] sm:$0x3]
      %v416 = vld [vmem:[%s345] sm:$0xff]
      %v417 = vld [vmem:[%s345 + $0x8] sm:$0xff]
      %v418 = vld [vmem:[%s345 + $0x10] sm:$0xff]
      %v419 = vld [vmem:[%s345 + $0x18] sm:$0xff]
      %v420 = vld [vmem:[%s345 + $0x20] sm:$0xff]
      %v421 = vld [vmem:[%s345 + $0x28] sm:$0xff]
      %v422 = vld [vmem:[%s345 + $0x30] sm:$0xff]
      %v423 = vld [vmem:[%s345 + $0x38] sm:$0xff]
      %v424 = vld [vmem:[%s345 + $0x40] sm:$0xff]
      %v425 = vld [vmem:[%s345 + $0x48] sm:$0xff]
      %v426 = vld [vmem:[%s345 + $0x50] sm:$0xff]
      %v427 = vld [vmem:[%s345 + $0x58] sm:$0xff]
      %v428 = vld [vmem:[%s345 + $0x60] sm:$0xff]
      %v429 = vld [vmem:[%s345 + $0x68] sm:$0xff]
      %v430 = vld [vmem:[%s345 + $0x70] sm:$0xff]
      %v431 = vld [vmem:[%s345 + $0x78] sm:$0xff]
      %v432 = vld [vmem:[%s345 + $0x80] sm:$0xff]
      %v433 = vld [vmem:[%s345 + $0x88] sm:$0xff]
      %v434 = vld [vmem:[%s345 + $0x90] sm:$0xff]
      %v435 = vld [vmem:[%s345 + $0x98] sm:$0xff]
      %v436 = vld [vmem:[%s345 + $0xa0] sm:$0xff]
      %v437 = vld [vmem:[%s345 + $0xa8] sm:$0xff]
      %v438 = vld [vmem:[%s345 + $0xb0] sm:$0xff]
      %v439 = vld [vmem:[%s345 + $0xb8] sm:$0xff]
      %v440 = vld [vmem:[%s345 + $0xc0] sm:$0xff]
      %v441 = vld [vmem:[%s345 + $0xc8] sm:$0xff]
      %v442 = vld [vmem:[%s345 + $0xd0] sm:$0xff]
      %v443 = vld [vmem:[%s345 + $0xd8] sm:$0xff]
      %v444 = vld [vmem:[%s345 + $0xe0] sm:$0xff]
      %v445 = vld [vmem:[%s345 + $0xe8] sm:$0xff]
      %v446 = vld [vmem:[%s345 + $0xf0] sm:$0xff]
      %v447 = vld [vmem:[%s345 + $0xf8] sm:$0xff]
      %v448 = vld [vmem:[%s350] sm:$0xff]
      %v449 = vld [vmem:[%s350 + $0x8] sm:$0xff]
      %v450 = vld [vmem:[%s350 + $0x10] sm:$0xff]
      %v451 = vld [vmem:[%s350 + $0x18] sm:$0xff]
      %v452 = vld [vmem:[%s350 + $0x20] sm:$0xff]
      %v453 = vld [vmem:[%s350 + $0x28] sm:$0xff]
      %v454 = vld [vmem:[%s350 + $0x30] sm:$0xff]
      %v455 = vld [vmem:[%s350 + $0x38] sm:$0xff]
      %v456 = vld [vmem:[%s350 + $0x40] sm:$0xff]
      %v457 = vld [vmem:[%s350 + $0x48] sm:$0xff]
      %v458 = vld [vmem:[%s350 + $0x50] sm:$0xff]
      %v459 = vld [vmem:[%s350 + $0x58] sm:$0xff]
      %v460 = vld [vmem:[%s350 + $0x60] sm:$0xff]
      %v461 = vld [vmem:[%s350 + $0x68] sm:$0xff]
      %v462 = vld [vmem:[%s350 + $0x70] sm:$0xff]
      %v463 = vld [vmem:[%s350 + $0x78] sm:$0xff]
      %v464 = vld [vmem:[%s350 + $0x80] sm:$0xff]
      %v465 = vld [vmem:[%s350 + $0x88] sm:$0xff]
      %v466 = vld [vmem:[%s350 + $0x90] sm:$0xff]
      %v467 = vld [vmem:[%s350 + $0x98] sm:$0xff]
      %v468 = vld [vmem:[%s350 + $0xa0] sm:$0xff]
      %v469 = vld [vmem:[%s350 + $0xa8] sm:$0xff]
      %v470 = vld [vmem:[%s350 + $0xb0] sm:$0xff]
      %v471 = vld [vmem:[%s350 + $0xb8] sm:$0xff]
      %v472 = vld [vmem:[%s350 + $0xc0] sm:$0xff]
      %v473 = vld [vmem:[%s350 + $0xc8] sm:$0xff]
      %v474 = vld [vmem:[%s350 + $0xd0] sm:$0xff]
      %v475 = vld [vmem:[%s350 + $0xd8] sm:$0xff]
      %v476 = vld [vmem:[%s350 + $0xe0] sm:$0xff]
      %v477 = vld [vmem:[%s350 + $0xe8] sm:$0xff]
      %v478 = vld [vmem:[%s350 + $0xf0] sm:$0xff]
      %v479 = vld [vmem:[%s350 + $0xf8] sm:$0xff]
      %v480 = vlaneseq
      %v481 = vshrl.u32 %v480, 7
      %v482 = vadd.s32 %v481, 8
      %v483 = vadd.s32 %v481, 16
      %v484 = vadd.s32 %v481, 24
      %v485 = vadd.s32 %v481, 32
      %v486 = vadd.s32 %v481, 40
      %v487 = vadd.s32 %v481, 48
      %v488 = vadd.s32 %v481, 56
      %v489 = vadd.s32 %v481, 64
      %v490 = vadd.s32 %v481, 72
      %v491 = vadd.s32 %v481, 80
      %v492 = vadd.s32 %v481, 88
      %v493 = vadd.s32 %v481, 96
      %v494 = vadd.s32 %v481, 104
      %v495 = vadd.s32 %v481, 112
      %v496 = vadd.s32 %v481, 120
      %v497 = vlaneseq
      %v498 = vand.u32 %v497, 127
      %v499 = vperm.slane %v415, 0
      %v500 = vperm.slane %v415, 1
      %vm501 = vcmp.eq.s32.totalorder %v481, %v499
      %vm502 = vcmp.eq.s32.totalorder %v481, %v500
      %vm503 = vcmp.eq.s32.totalorder %v482, %v499
      %vm504 = vcmp.eq.s32.totalorder %v482, %v500
      %vm505 = vcmp.eq.s32.totalorder %v483, %v499
      %vm506 = vcmp.eq.s32.totalorder %v483, %v500
      %vm507 = vcmp.eq.s32.totalorder %v484, %v499
      %vm508 = vcmp.eq.s32.totalorder %v484, %v500
      %vm509 = vcmp.eq.s32.totalorder %v485, %v499
      %vm510 = vcmp.eq.s32.totalorder %v485, %v500
      %vm511 = vcmp.eq.s32.totalorder %v486, %v499
      %vm512 = vcmp.eq.s32.totalorder %v486, %v500
      %vm513 = vcmp.eq.s32.totalorder %v487, %v499
      %vm514 = vcmp.eq.s32.totalorder %v487, %v500
      %vm515 = vcmp.eq.s32.totalorder %v488, %v499
      %vm516 = vcmp.eq.s32.totalorder %v488, %v500
      %vm517 = vcmp.eq.s32.totalorder %v489, %v499
      %vm518 = vcmp.eq.s32.totalorder %v489, %v500
      %vm519 = vcmp.eq.s32.totalorder %v490, %v499
      %vm520 = vcmp.eq.s32.totalorder %v490, %v500
      %vm521 = vcmp.eq.s32.totalorder %v491, %v499
      %vm522 = vcmp.eq.s32.totalorder %v491, %v500
      %vm523 = vcmp.eq.s32.totalorder %v492, %v499
      %vm524 = vcmp.eq.s32.totalorder %v492, %v500
      %vm525 = vcmp.eq.s32.totalorder %v493, %v499
      %vm526 = vcmp.eq.s32.totalorder %v493, %v500
      %vm527 = vcmp.eq.s32.totalorder %v494, %v499
      %vm528 = vcmp.eq.s32.totalorder %v494, %v500
      %vm529 = vcmp.eq.s32.totalorder %v495, %v499
      %vm530 = vcmp.eq.s32.totalorder %v495, %v500
      %vm531 = vcmp.eq.s32.totalorder %v496, %v499
      %vm532 = vcmp.eq.s32.totalorder %v496, %v500
      %v533 = vsel %vm501, 1.0, 0.0
      %v534 = vsel %vm502, 1.0, 0.0
      %v535 = vsel %vm503, 1.0, 0.0
      %v536 = vsel %vm504, 1.0, 0.0
      %v537 = vsel %vm505, 1.0, 0.0
      %v538 = vsel %vm506, 1.0, 0.0
      %v539 = vsel %vm507, 1.0, 0.0
      %v540 = vsel %vm508, 1.0, 0.0
      %v541 = vsel %vm509, 1.0, 0.0
      %v542 = vsel %vm510, 1.0, 0.0
      %v543 = vsel %vm511, 1.0, 0.0
      %v544 = vsel %vm512, 1.0, 0.0
      %v545 = vsel %vm513, 1.0, 0.0
      %v546 = vsel %vm514, 1.0, 0.0
      %v547 = vsel %vm515, 1.0, 0.0
      %v548 = vsel %vm516, 1.0, 0.0
      %v549 = vsel %vm517, 1.0, 0.0
      %v550 = vsel %vm518, 1.0, 0.0
      %v551 = vsel %vm519, 1.0, 0.0
      %v552 = vsel %vm520, 1.0, 0.0
      %v553 = vsel %vm521, 1.0, 0.0
      %v554 = vsel %vm522, 1.0, 0.0
      %v555 = vsel %vm523, 1.0, 0.0
      %v556 = vsel %vm524, 1.0, 0.0
      %v557 = vsel %vm525, 1.0, 0.0
      %v558 = vsel %vm526, 1.0, 0.0
      %v559 = vsel %vm527, 1.0, 0.0
      %v560 = vsel %vm528, 1.0, 0.0
      %v561 = vsel %vm529, 1.0, 0.0
      %v562 = vsel %vm530, 1.0, 0.0
      %v563 = vsel %vm531, 1.0, 0.0
      %v564 = vsel %vm532, 1.0, 0.0
      %v565 = vpack.c.bf16 %v535, %v533
      %v566 = vpack.c.bf16 %v536, %v534
      %v567 = vpack.c.bf16 %v539, %v537
      %v568 = vpack.c.bf16 %v540, %v538
      %v569 = vpack.c.bf16 %v543, %v541
      %v570 = vpack.c.bf16 %v544, %v542
      %v571 = vpack.c.bf16 %v547, %v545
      %v572 = vpack.c.bf16 %v548, %v546
      %v573 = vpack.c.bf16 %v551, %v549
      %v574 = vpack.c.bf16 %v552, %v550
      %v575 = vpack.c.bf16 %v555, %v553
      %v576 = vpack.c.bf16 %v556, %v554
      %v577 = vpack.c.bf16 %v559, %v557
      %v578 = vpack.c.bf16 %v560, %v558
      %v579 = vpack.c.bf16 %v563, %v561
      %v580 = vpack.c.bf16 %v564, %v562
      %581 = vset.pattern.permute.xlu0 0
      %582 = vperm.xlu0 %581, %v416
      %v583 = vpop.permute.xlu0 %582
      %584 = vset.pattern.permute.xlu0 0
      %585 = vperm.xlu0 %584, %v417
      %v586 = vpop.permute.xlu0 %585
      %587 = vset.pattern.permute.xlu0 0
      %588 = vperm.xlu0 %587, %v418
      %v589 = vpop.permute.xlu0 %588
      %590 = vset.pattern.permute.xlu0 0
      %591 = vperm.xlu0 %590, %v419
      %v592 = vpop.permute.xlu0 %591
      %593 = vset.pattern.permute.xlu0 0
      %594 = vperm.xlu0 %593, %v420
      %v595 = vpop.permute.xlu0 %594
      %596 = vset.pattern.permute.xlu0 0
      %597 = vperm.xlu0 %596, %v421
      %v598 = vpop.permute.xlu0 %597
      %599 = vset.pattern.permute.xlu0 0
      %600 = vperm.xlu0 %599, %v422
      %v601 = vpop.permute.xlu0 %600
      %602 = vset.pattern.permute.xlu0 0
      %603 = vperm.xlu0 %602, %v423
      %v604 = vpop.permute.xlu0 %603
      %605 = vset.pattern.permute.xlu0 0
      %606 = vperm.xlu0 %605, %v424
      %v607 = vpop.permute.xlu0 %606
      %608 = vset.pattern.permute.xlu0 0
      %609 = vperm.xlu0 %608, %v425
      %v610 = vpop.permute.xlu0 %609
      %611 = vset.pattern.permute.xlu0 0
      %612 = vperm.xlu0 %611, %v426
      %v613 = vpop.permute.xlu0 %612
      %614 = vset.pattern.permute.xlu0 0
      %615 = vperm.xlu0 %614, %v427
      %v616 = vpop.permute.xlu0 %615
      %617 = vset.pattern.permute.xlu0 0
      %618 = vperm.xlu0 %617, %v428
      %v619 = vpop.permute.xlu0 %618
      %620 = vset.pattern.permute.xlu0 0
      %621 = vperm.xlu0 %620, %v429
      %v622 = vpop.permute.xlu0 %621
      %623 = vset.pattern.permute.xlu0 0
      %624 = vperm.xlu0 %623, %v430
      %v625 = vpop.permute.xlu0 %624
      %626 = vset.pattern.permute.xlu0 0
      %627 = vperm.xlu0 %626, %v431
      %v628 = vpop.permute.xlu0 %627
      %629 = vset.pattern.permute.xlu0 0
      %630 = vperm.xlu0 %629, %v432
      %v631 = vpop.permute.xlu0 %630
      %632 = vset.pattern.permute.xlu0 0
      %633 = vperm.xlu0 %632, %v433
      %v634 = vpop.permute.xlu0 %633
      %635 = vset.pattern.permute.xlu0 0
      %636 = vperm.xlu0 %635, %v434
      %v637 = vpop.permute.xlu0 %636
      %638 = vset.pattern.permute.xlu0 0
      %639 = vperm.xlu0 %638, %v435
      %v640 = vpop.permute.xlu0 %639
      %641 = vset.pattern.permute.xlu0 0
      %642 = vperm.xlu0 %641, %v436
      %v643 = vpop.permute.xlu0 %642
      %644 = vset.pattern.permute.xlu0 0
      %645 = vperm.xlu0 %644, %v437
      %v646 = vpop.permute.xlu0 %645
      %647 = vset.pattern.permute.xlu0 0
      %648 = vperm.xlu0 %647, %v438
      %v649 = vpop.permute.xlu0 %648
      %650 = vset.pattern.permute.xlu0 0
      %651 = vperm.xlu0 %650, %v439
      %v652 = vpop.permute.xlu0 %651
      %653 = vset.pattern.permute.xlu0 0
      %654 = vperm.xlu0 %653, %v440
      %v655 = vpop.permute.xlu0 %654
      %656 = vset.pattern.permute.xlu0 0
      %657 = vperm.xlu0 %656, %v441
      %v658 = vpop.permute.xlu0 %657
      %659 = vset.pattern.permute.xlu0 0
      %660 = vperm.xlu0 %659, %v442
      %v661 = vpop.permute.xlu0 %660
      %662 = vset.pattern.permute.xlu0 0
      %663 = vperm.xlu0 %662, %v443
      %v664 = vpop.permute.xlu0 %663
      %665 = vset.pattern.permute.xlu0 0
      %666 = vperm.xlu0 %665, %v444
      %v667 = vpop.permute.xlu0 %666
      %668 = vset.pattern.permute.xlu0 0
      %669 = vperm.xlu0 %668, %v445
      %v670 = vpop.permute.xlu0 %669
      %671 = vset.pattern.permute.xlu0 0
      %672 = vperm.xlu0 %671, %v446
      %v673 = vpop.permute.xlu0 %672
      %674 = vset.pattern.permute.xlu0 0
      %675 = vperm.xlu0 %674, %v447
      %v676 = vpop.permute.xlu0 %675
      %vm677 = vcmp.eq.s32.totalorder %v498, %v583
      %vm678 = vcmp.eq.s32.totalorder %v498, %v586
      %vm679 = vcmp.eq.s32.totalorder %v498, %v589
      %vm680 = vcmp.eq.s32.totalorder %v498, %v592
      %vm681 = vcmp.eq.s32.totalorder %v498, %v595
      %vm682 = vcmp.eq.s32.totalorder %v498, %v598
      %vm683 = vcmp.eq.s32.totalorder %v498, %v601
      %vm684 = vcmp.eq.s32.totalorder %v498, %v604
      %vm685 = vcmp.eq.s32.totalorder %v498, %v607
      %vm686 = vcmp.eq.s32.totalorder %v498, %v610
      %vm687 = vcmp.eq.s32.totalorder %v498, %v613
      %vm688 = vcmp.eq.s32.totalorder %v498, %v616
      %vm689 = vcmp.eq.s32.totalorder %v498, %v619
      %vm690 = vcmp.eq.s32.totalorder %v498, %v622
      %vm691 = vcmp.eq.s32.totalorder %v498, %v625
      %vm692 = vcmp.eq.s32.totalorder %v498, %v628
      %vm693 = vcmp.eq.s32.totalorder %v498, %v631
      %vm694 = vcmp.eq.s32.totalorder %v498, %v634
      %vm695 = vcmp.eq.s32.totalorder %v498, %v637
      %vm696 = vcmp.eq.s32.totalorder %v498, %v640
      %vm697 = vcmp.eq.s32.totalorder %v498, %v643
      %vm698 = vcmp.eq.s32.totalorder %v498, %v646
      %vm699 = vcmp.eq.s32.totalorder %v498, %v649
      %vm700 = vcmp.eq.s32.totalorder %v498, %v652
      %vm701 = vcmp.eq.s32.totalorder %v498, %v655
      %vm702 = vcmp.eq.s32.totalorder %v498, %v658
      %vm703 = vcmp.eq.s32.totalorder %v498, %v661
      %vm704 = vcmp.eq.s32.totalorder %v498, %v664
      %vm705 = vcmp.eq.s32.totalorder %v498, %v667
      %vm706 = vcmp.eq.s32.totalorder %v498, %v670
      %vm707 = vcmp.eq.s32.totalorder %v498, %v673
      %vm708 = vcmp.eq.s32.totalorder %v498, %v676
      %v709 = vsel %vm677, 1.0, 0.0
      %v710 = vsel %vm678, 1.0, 0.0
      %v711 = vsel %vm679, 1.0, 0.0
      %v712 = vsel %vm680, 1.0, 0.0
      %v713 = vsel %vm681, 1.0, 0.0
      %v714 = vsel %vm682, 1.0, 0.0
      %v715 = vsel %vm683, 1.0, 0.0
      %v716 = vsel %vm684, 1.0, 0.0
      %v717 = vsel %vm685, 1.0, 0.0
      %v718 = vsel %vm686, 1.0, 0.0
      %v719 = vsel %vm687, 1.0, 0.0
      %v720 = vsel %vm688, 1.0, 0.0
      %v721 = vsel %vm689, 1.0, 0.0
      %v722 = vsel %vm690, 1.0, 0.0
      %v723 = vsel %vm691, 1.0, 0.0
      %v724 = vsel %vm692, 1.0, 0.0
      %v725 = vsel %vm693, 1.0, 0.0
      %v726 = vsel %vm694, 1.0, 0.0
      %v727 = vsel %vm695, 1.0, 0.0
      %v728 = vsel %vm696, 1.0, 0.0
      %v729 = vsel %vm697, 1.0, 0.0
      %v730 = vsel %vm698, 1.0, 0.0
      %v731 = vsel %vm699, 1.0, 0.0
      %v732 = vsel %vm700, 1.0, 0.0
      %v733 = vsel %vm701, 1.0, 0.0
      %v734 = vsel %vm702, 1.0, 0.0
      %v735 = vsel %vm703, 1.0, 0.0
      %v736 = vsel %vm704, 1.0, 0.0
      %v737 = vsel %vm705, 1.0, 0.0
      %v738 = vsel %vm706, 1.0, 0.0
      %v739 = vsel %vm707, 1.0, 0.0
      %v740 = vsel %vm708, 1.0, 0.0
      %v741 = vpack.c.bf16 %v710, %v709
      %v742 = vpack.c.bf16 %v712, %v711
      %v743 = vpack.c.bf16 %v714, %v713
      %v744 = vpack.c.bf16 %v716, %v715
      %v745 = vpack.c.bf16 %v718, %v717
      %v746 = vpack.c.bf16 %v720, %v719
      %v747 = vpack.c.bf16 %v722, %v721
      %v748 = vpack.c.bf16 %v724, %v723
      %v749 = vpack.c.bf16 %v726, %v725
      %v750 = vpack.c.bf16 %v728, %v727
      %v751 = vpack.c.bf16 %v730, %v729
      %v752 = vpack.c.bf16 %v732, %v731
      %v753 = vpack.c.bf16 %v734, %v733
      %v754 = vpack.c.bf16 %v736, %v735
      %v755 = vpack.c.bf16 %v738, %v737
      %v756 = vpack.c.bf16 %v740, %v739
      %757 = vset.pattern.permute.xlu0 0
      %758 = vperm.xlu0 %757, %v448
      %v759 = vpop.permute.xlu0 %758
      %760 = vset.pattern.permute.xlu0 0
      %761 = vperm.xlu0 %760, %v449
      %v762 = vpop.permute.xlu0 %761
      %763 = vset.pattern.permute.xlu0 0
      %764 = vperm.xlu0 %763, %v450
      %v765 = vpop.permute.xlu0 %764
      %766 = vset.pattern.permute.xlu0 0
      %767 = vperm.xlu0 %766, %v451
      %v768 = vpop.permute.xlu0 %767
      %769 = vset.pattern.permute.xlu0 0
      %770 = vperm.xlu0 %769, %v452
      %v771 = vpop.permute.xlu0 %770
      %772 = vset.pattern.permute.xlu0 0
      %773 = vperm.xlu0 %772, %v453
      %v774 = vpop.permute.xlu0 %773
      %775 = vset.pattern.permute.xlu0 0
      %776 = vperm.xlu0 %775, %v454
      %v777 = vpop.permute.xlu0 %776
      %778 = vset.pattern.permute.xlu0 0
      %779 = vperm.xlu0 %778, %v455
      %v780 = vpop.permute.xlu0 %779
      %781 = vset.pattern.permute.xlu0 0
      %782 = vperm.xlu0 %781, %v456
      %v783 = vpop.permute.xlu0 %782
      %784 = vset.pattern.permute.xlu0 0
      %785 = vperm.xlu0 %784, %v457
      %v786 = vpop.permute.xlu0 %785
      %787 = vset.pattern.permute.xlu0 0
      %788 = vperm.xlu0 %787, %v458
      %v789 = vpop.permute.xlu0 %788
      %790 = vset.pattern.permute.xlu0 0
      %791 = vperm.xlu0 %790, %v459
      %v792 = vpop.permute.xlu0 %791
      %793 = vset.pattern.permute.xlu0 0
      %794 = vperm.xlu0 %793, %v460
      %v795 = vpop.permute.xlu0 %794
      %796 = vset.pattern.permute.xlu0 0
      %797 = vperm.xlu0 %796, %v461
      %v798 = vpop.permute.xlu0 %797
      %799 = vset.pattern.permute.xlu0 0
      %800 = vperm.xlu0 %799, %v462
      %v801 = vpop.permute.xlu0 %800
      %802 = vset.pattern.permute.xlu0 0
      %803 = vperm.xlu0 %802, %v463
      %v804 = vpop.permute.xlu0 %803
      %805 = vset.pattern.permute.xlu0 0
      %806 = vperm.xlu0 %805, %v464
      %v807 = vpop.permute.xlu0 %806
      %808 = vset.pattern.permute.xlu0 0
      %809 = vperm.xlu0 %808, %v465
      %v810 = vpop.permute.xlu0 %809
      %811 = vset.pattern.permute.xlu0 0
      %812 = vperm.xlu0 %811, %v466
      %v813 = vpop.permute.xlu0 %812
      %814 = vset.pattern.permute.xlu0 0
      %815 = vperm.xlu0 %814, %v467
      %v816 = vpop.permute.xlu0 %815
      %817 = vset.pattern.permute.xlu0 0
      %818 = vperm.xlu0 %817, %v468
      %v819 = vpop.permute.xlu0 %818
      %820 = vset.pattern.permute.xlu0 0
      %821 = vperm.xlu0 %820, %v469
      %v822 = vpop.permute.xlu0 %821
      %823 = vset.pattern.permute.xlu0 0
      %824 = vperm.xlu0 %823, %v470
      %v825 = vpop.permute.xlu0 %824
      %826 = vset.pattern.permute.xlu0 0
      %827 = vperm.xlu0 %826, %v471
      %v828 = vpop.permute.xlu0 %827
      %829 = vset.pattern.permute.xlu0 0
      %830 = vperm.xlu0 %829, %v472
      %v831 = vpop.permute.xlu0 %830
      %832 = vset.pattern.permute.xlu0 0
      %833 = vperm.xlu0 %832, %v473
      %v834 = vpop.permute.xlu0 %833
      %835 = vset.pattern.permute.xlu0 0
      %836 = vperm.xlu0 %835, %v474
      %v837 = vpop.permute.xlu0 %836
      %838 = vset.pattern.permute.xlu0 0
      %839 = vperm.xlu0 %838, %v475
      %v840 = vpop.permute.xlu0 %839
      %841 = vset.pattern.permute.xlu0 0
      %842 = vperm.xlu0 %841, %v476
      %v843 = vpop.permute.xlu0 %842
      %844 = vset.pattern.permute.xlu0 0
      %845 = vperm.xlu0 %844, %v477
      %v846 = vpop.permute.xlu0 %845
      %847 = vset.pattern.permute.xlu0 0
      %848 = vperm.xlu0 %847, %v478
      %v849 = vpop.permute.xlu0 %848
      %850 = vset.pattern.permute.xlu0 0
      %851 = vperm.xlu0 %850, %v479
      %v852 = vpop.permute.xlu0 %851
      %vm853 = vcmp.eq.s32.totalorder %v498, %v759
      %vm854 = vcmp.eq.s32.totalorder %v498, %v762
      %vm855 = vcmp.eq.s32.totalorder %v498, %v765
      %vm856 = vcmp.eq.s32.totalorder %v498, %v768
      %vm857 = vcmp.eq.s32.totalorder %v498, %v771
      %vm858 = vcmp.eq.s32.totalorder %v498, %v774
      %vm859 = vcmp.eq.s32.totalorder %v498, %v777
      %vm860 = vcmp.eq.s32.totalorder %v498, %v780
      %vm861 = vcmp.eq.s32.totalorder %v498, %v783
      %vm862 = vcmp.eq.s32.totalorder %v498, %v786
      %vm863 = vcmp.eq.s32.totalorder %v498, %v789
      %vm864 = vcmp.eq.s32.totalorder %v498, %v792
      %vm865 = vcmp.eq.s32.totalorder %v498, %v795
      %vm866 = vcmp.eq.s32.totalorder %v498, %v798
      %vm867 = vcmp.eq.s32.totalorder %v498, %v801
      %vm868 = vcmp.eq.s32.totalorder %v498, %v804
      %vm869 = vcmp.eq.s32.totalorder %v498, %v807
      %vm870 = vcmp.eq.s32.totalorder %v498, %v810
      %vm871 = vcmp.eq.s32.totalorder %v498, %v813
      %vm872 = vcmp.eq.s32.totalorder %v498, %v816
      %vm873 = vcmp.eq.s32.totalorder %v498, %v819
      %vm874 = vcmp.eq.s32.totalorder %v498, %v822
      %vm875 = vcmp.eq.s32.totalorder %v498, %v825
      %vm876 = vcmp.eq.s32.totalorder %v498, %v828
      %vm877 = vcmp.eq.s32.totalorder %v498, %v831
      %vm878 = vcmp.eq.s32.totalorder %v498, %v834
      %vm879 = vcmp.eq.s32.totalorder %v498, %v837
      %vm880 = vcmp.eq.s32.totalorder %v498, %v840
      %vm881 = vcmp.eq.s32.totalorder %v498, %v843
      %vm882 = vcmp.eq.s32.totalorder %v498, %v846
      %vm883 = vcmp.eq.s32.totalorder %v498, %v849
      %vm884 = vcmp.eq.s32.totalorder %v498, %v852
      %v885 = vsel %vm853, 1.0, 0.0
      %v886 = vsel %vm854, 1.0, 0.0
      %v887 = vsel %vm855, 1.0, 0.0
      %v888 = vsel %vm856, 1.0, 0.0
      %v889 = vsel %vm857, 1.0, 0.0
      %v890 = vsel %vm858, 1.0, 0.0
      %v891 = vsel %vm859, 1.0, 0.0
      %v892 = vsel %vm860, 1.0, 0.0
      %v893 = vsel %vm861, 1.0, 0.0
      %v894 = vsel %vm862, 1.0, 0.0
      %v895 = vsel %vm863, 1.0, 0.0
      %v896 = vsel %vm864, 1.0, 0.0
      %v897 = vsel %vm865, 1.0, 0.0
      %v898 = vsel %vm866, 1.0, 0.0
      %v899 = vsel %vm867, 1.0, 0.0
      %v900 = vsel %vm868, 1.0, 0.0
      %v901 = vsel %vm869, 1.0, 0.0
      %v902 = vsel %vm870, 1.0, 0.0
      %v903 = vsel %vm871, 1.0, 0.0
      %v904 = vsel %vm872, 1.0, 0.0
      %v905 = vsel %vm873, 1.0, 0.0
      %v906 = vsel %vm874, 1.0, 0.0
      %v907 = vsel %vm875, 1.0, 0.0
      %v908 = vsel %vm876, 1.0, 0.0
      %v909 = vsel %vm877, 1.0, 0.0
      %v910 = vsel %vm878, 1.0, 0.0
      %v911 = vsel %vm879, 1.0, 0.0
      %v912 = vsel %vm880, 1.0, 0.0
      %v913 = vsel %vm881, 1.0, 0.0
      %v914 = vsel %vm882, 1.0, 0.0
      %v915 = vsel %vm883, 1.0, 0.0
      %v916 = vsel %vm884, 1.0, 0.0
      %v917 = vpack.c.bf16 %v886, %v885
      %v918 = vpack.c.bf16 %v888, %v887
      %v919 = vpack.c.bf16 %v890, %v889
      %v920 = vpack.c.bf16 %v892, %v891
      %v921 = vpack.c.bf16 %v894, %v893
      %v922 = vpack.c.bf16 %v896, %v895
      %v923 = vpack.c.bf16 %v898, %v897
      %v924 = vpack.c.bf16 %v900, %v899
      %v925 = vpack.c.bf16 %v902, %v901
      %v926 = vpack.c.bf16 %v904, %v903
      %v927 = vpack.c.bf16 %v906, %v905
      %v928 = vpack.c.bf16 %v908, %v907
      %v929 = vpack.c.bf16 %v910, %v909
      %v930 = vpack.c.bf16 %v912, %v911
      %v931 = vpack.c.bf16 %v914, %v913
      %v932 = vpack.c.bf16 %v916, %v915
      %v933 = vld [vmem:[%s331] sm:$0xff]
      %v934 = vld [vmem:[%s331 + $0x8] sm:$0xff]
      %v935 = vld [vmem:[%s331 + $0x10] sm:$0xff]
      %v936 = vld [vmem:[%s331 + $0x18] sm:$0xff]
      %v937 = vld [vmem:[%s331 + $0x20] sm:$0xff]
      %v938 = vld [vmem:[%s331 + $0x28] sm:$0xff]
      %v939 = vld [vmem:[%s331 + $0x30] sm:$0xff]
      %v940 = vld [vmem:[%s331 + $0x38] sm:$0xff]
      %v941 = vld [vmem:[%s331 + $0x40] sm:$0xff]
      %v942 = vld [vmem:[%s331 + $0x48] sm:$0xff]
      %v943 = vld [vmem:[%s331 + $0x50] sm:$0xff]
      %v944 = vld [vmem:[%s331 + $0x58] sm:$0xff]
      %v945 = vld [vmem:[%s331 + $0x60] sm:$0xff]
      %v946 = vld [vmem:[%s331 + $0x68] sm:$0xff]
      %v947 = vld [vmem:[%s331 + $0x70] sm:$0xff]
      %v948 = vld [vmem:[%s331 + $0x78] sm:$0xff]
      %v949 = vld [vmem:[%s331 + $0x80] sm:$0xff]
      %v950 = vld [vmem:[%s331 + $0x88] sm:$0xff]
      %v951 = vld [vmem:[%s331 + $0x90] sm:$0xff]
      %v952 = vld [vmem:[%s331 + $0x98] sm:$0xff]
      %v953 = vld [vmem:[%s331 + $0xa0] sm:$0xff]
      %v954 = vld [vmem:[%s331 + $0xa8] sm:$0xff]
      %v955 = vld [vmem:[%s331 + $0xb0] sm:$0xff]
      %v956 = vld [vmem:[%s331 + $0xb8] sm:$0xff]
      %v957 = vld [vmem:[%s331 + $0xc0] sm:$0xff]
      %v958 = vld [vmem:[%s331 + $0xc8] sm:$0xff]
      %v959 = vld [vmem:[%s331 + $0xd0] sm:$0xff]
      %v960 = vld [vmem:[%s331 + $0xd8] sm:$0xff]
      %v961 = vld [vmem:[%s331 + $0xe0] sm:$0xff]
      %v962 = vld [vmem:[%s331 + $0xe8] sm:$0xff]
      %v963 = vld [vmem:[%s331 + $0xf0] sm:$0xff]
      %v964 = vld [vmem:[%s331 + $0xf8] sm:$0xff]
      %v965 = vld [vmem:[%s336] sm:$0xff]
      %v966 = vld [vmem:[%s336 + $0x8] sm:$0xff]
      %v967 = vld [vmem:[%s336 + $0x10] sm:$0xff]
      %v968 = vld [vmem:[%s336 + $0x18] sm:$0xff]
      %v969 = vld [vmem:[%s336 + $0x20] sm:$0xff]
      %v970 = vld [vmem:[%s336 + $0x28] sm:$0xff]
      %v971 = vld [vmem:[%s336 + $0x30] sm:$0xff]
      %v972 = vld [vmem:[%s336 + $0x38] sm:$0xff]
      %v973 = vld [vmem:[%s336 + $0x40] sm:$0xff]
      %v974 = vld [vmem:[%s336 + $0x48] sm:$0xff]
      %v975 = vld [vmem:[%s336 + $0x50] sm:$0xff]
      %v976 = vld [vmem:[%s336 + $0x58] sm:$0xff]
      %v977 = vld [vmem:[%s336 + $0x60] sm:$0xff]
      %v978 = vld [vmem:[%s336 + $0x68] sm:$0xff]
      %v979 = vld [vmem:[%s336 + $0x70] sm:$0xff]
      %v980 = vld [vmem:[%s336 + $0x78] sm:$0xff]
      %v981 = vld [vmem:[%s336 + $0x80] sm:$0xff]
      %v982 = vld [vmem:[%s336 + $0x88] sm:$0xff]
      %v983 = vld [vmem:[%s336 + $0x90] sm:$0xff]
      %v984 = vld [vmem:[%s336 + $0x98] sm:$0xff]
      %v985 = vld [vmem:[%s336 + $0xa0] sm:$0xff]
      %v986 = vld [vmem:[%s336 + $0xa8] sm:$0xff]
      %v987 = vld [vmem:[%s336 + $0xb0] sm:$0xff]
      %v988 = vld [vmem:[%s336 + $0xb8] sm:$0xff]
      %v989 = vld [vmem:[%s336 + $0xc0] sm:$0xff]
      %v990 = vld [vmem:[%s336 + $0xc8] sm:$0xff]
      %v991 = vld [vmem:[%s336 + $0xd0] sm:$0xff]
      %v992 = vld [vmem:[%s336 + $0xd8] sm:$0xff]
      %v993 = vld [vmem:[%s336 + $0xe0] sm:$0xff]
      %v994 = vld [vmem:[%s336 + $0xe8] sm:$0xff]
      %v995 = vld [vmem:[%s336 + $0xf0] sm:$0xff]
      %v996 = vld [vmem:[%s336 + $0xf8] sm:$0xff]
      %v997 = vpack.c.bf16 %v934, %v933
      %v998 = vpack.c.bf16 %v936, %v935
      %v999 = vpack.c.bf16 %v938, %v937
      %v1000 = vpack.c.bf16 %v940, %v939
      %v1001 = vpack.c.bf16 %v942, %v941
      %v1002 = vpack.c.bf16 %v944, %v943
      %v1003 = vpack.c.bf16 %v946, %v945
      %v1004 = vpack.c.bf16 %v948, %v947
      %v1005 = vpack.c.bf16 %v966, %v965
      %v1006 = vpack.c.bf16 %v968, %v967
      %v1007 = vpack.c.bf16 %v970, %v969
      %v1008 = vpack.c.bf16 %v972, %v971
      %v1009 = vpack.c.bf16 %v974, %v973
      %v1010 = vpack.c.bf16 %v976, %v975
      %v1011 = vpack.c.bf16 %v978, %v977
      %v1012 = vpack.c.bf16 %v980, %v979
      %v1013 = vpack.c.bf16 %v982, %v981
      %v1014 = vpack.c.bf16 %v984, %v983
      %v1015 = vpack.c.bf16 %v986, %v985
      %v1016 = vpack.c.bf16 %v988, %v987
      %v1017 = vpack.c.bf16 %v990, %v989
      %v1018 = vpack.c.bf16 %v992, %v991
      %v1019 = vpack.c.bf16 %v994, %v993
      %v1020 = vpack.c.bf16 %v996, %v995
      %v1021 = vpack.c.bf16 %v950, %v949
      %v1022 = vpack.c.bf16 %v952, %v951
      %v1023 = vpack.c.bf16 %v954, %v953
      %v1024 = vpack.c.bf16 %v956, %v955
      %v1025 = vpack.c.bf16 %v958, %v957
      %v1026 = vpack.c.bf16 %v960, %v959
      %v1027 = vpack.c.bf16 %v962, %v961
      %v1028 = vpack.c.bf16 %v964, %v963
      %1029 = vmatpush.bf16.msra.mxu0 %v1012
      %1030 = vmatpush.bf16.msra.mxu0 %v1011
      %1031 = vmatpush.bf16.msra.mxu0 %v1010
      %1032 = vmatpush.bf16.msra.mxu0 %v1009
      %1033 = vmatpush.bf16.msra.mxu0 %v1008
      %1034 = vmatpush.bf16.msra.mxu0 %v1007
      %1035 = vmatpush.bf16.msra.mxu0 %v1006
      %1036 = vmatpush.bf16.msra.mxu0 %v1005
      %1037 = vmatmul.bf16.gmra.mxu0 %v565
      %v1038 = vpop.f32.mrf.mxu0
      %v1039 = vadd.f32 0.0, %v1038
      %v1040 = vpop.f32.mrf.mxu0
      %v1041 = vadd.f32 0.0, %v1040
      %1042 = vmatmul.bf16.gmra.mxu0 %v567
      %v1043 = vpop.f32.mrf.mxu0
      %v1044 = vadd.f32 0.0, %v1043
      %v1045 = vpop.f32.mrf.mxu0
      %v1046 = vadd.f32 0.0, %v1045
      %1047 = vmatmul.bf16.gmra.mxu0 %v569
      %v1048 = vpop.f32.mrf.mxu0
      %v1049 = vadd.f32 0.0, %v1048
      %v1050 = vpop.f32.mrf.mxu0
      %v1051 = vadd.f32 0.0, %v1050
      %1052 = vmatmul.bf16.gmra.mxu0 %v571
      %v1053 = vpop.f32.mrf.mxu0
      %v1054 = vadd.f32 0.0, %v1053
      %v1055 = vpop.f32.mrf.mxu0
      %v1056 = vadd.f32 0.0, %v1055
      %1057 = vmatmul.bf16.gmra.mxu0 %v573
      %v1058 = vpop.f32.mrf.mxu0
      %v1059 = vadd.f32 0.0, %v1058
      %v1060 = vpop.f32.mrf.mxu0
      %v1061 = vadd.f32 0.0, %v1060
      %1062 = vmatmul.bf16.gmra.mxu0 %v575
      %v1063 = vpop.f32.mrf.mxu0
      %v1064 = vadd.f32 0.0, %v1063
      %v1065 = vpop.f32.mrf.mxu0
      %v1066 = vadd.f32 0.0, %v1065
      %1067 = vmatmul.bf16.gmra.mxu0 %v577
      %v1068 = vpop.f32.mrf.mxu0
      %v1069 = vadd.f32 0.0, %v1068
      %v1070 = vpop.f32.mrf.mxu0
      %v1071 = vadd.f32 0.0, %v1070
      %1072 = vmatmul.bf16.gmra.mxu0 %v579
      %v1073 = vpop.f32.mrf.mxu0
      %v1074 = vadd.f32 0.0, %v1073
      %v1075 = vpop.f32.mrf.mxu0
      %v1076 = vadd.f32 0.0, %v1075
      %1077 = vdwg.mxu0
      %1078 = vmatpush.bf16.msra.mxu0 %v1020
      %1079 = vmatpush.bf16.msra.mxu0 %v1019
      %1080 = vmatpush.bf16.msra.mxu0 %v1018
      %1081 = vmatpush.bf16.msra.mxu0 %v1017
      %1082 = vmatpush.bf16.msra.mxu0 %v1016
      %1083 = vmatpush.bf16.msra.mxu0 %v1015
      %1084 = vmatpush.bf16.msra.mxu0 %v1014
      %1085 = vmatpush.bf16.msra.mxu0 %v1013
      %1086 = vmatmul.bf16.gmra.mxu0 %v566
      %v1087 = vpop.f32.mrf.mxu0
      %v1088 = vadd.f32 %v1039, %v1087
      %v1089 = vpop.f32.mrf.mxu0
      %v1090 = vadd.f32 %v1041, %v1089
      %1091 = vmatmul.bf16.gmra.mxu0 %v568
      %v1092 = vpop.f32.mrf.mxu0
      %v1093 = vadd.f32 %v1044, %v1092
      %v1094 = vpop.f32.mrf.mxu0
      %v1095 = vadd.f32 %v1046, %v1094
      %1096 = vmatmul.bf16.gmra.mxu0 %v570
      %v1097 = vpop.f32.mrf.mxu0
      %v1098 = vadd.f32 %v1049, %v1097
      %v1099 = vpop.f32.mrf.mxu0
      %v1100 = vadd.f32 %v1051, %v1099
      %1101 = vmatmul.bf16.gmra.mxu0 %v572
      %v1102 = vpop.f32.mrf.mxu0
      %v1103 = vadd.f32 %v1054, %v1102
      %v1104 = vpop.f32.mrf.mxu0
      %v1105 = vadd.f32 %v1056, %v1104
      %1106 = vmatmul.bf16.gmra.mxu0 %v574
      %v1107 = vpop.f32.mrf.mxu0
      %v1108 = vadd.f32 %v1059, %v1107
      %v1109 = vpop.f32.mrf.mxu0
      %v1110 = vadd.f32 %v1061, %v1109
      %1111 = vmatmul.bf16.gmra.mxu0 %v576
      %v1112 = vpop.f32.mrf.mxu0
      %v1113 = vadd.f32 %v1064, %v1112
      %v1114 = vpop.f32.mrf.mxu0
      %v1115 = vadd.f32 %v1066, %v1114
      %1116 = vmatmul.bf16.gmra.mxu0 %v578
      %v1117 = vpop.f32.mrf.mxu0
      %v1118 = vadd.f32 %v1069, %v1117
      %v1119 = vpop.f32.mrf.mxu0
      %v1120 = vadd.f32 %v1071, %v1119
      %1121 = vmatmul.bf16.gmra.mxu0 %v580
      %v1122 = vpop.f32.mrf.mxu0
      %v1123 = vadd.f32 %v1074, %v1122
      %v1124 = vpop.f32.mrf.mxu0
      %v1125 = vadd.f32 %v1076, %v1124
      %1126 = vdwg.mxu0
      %v1127 = vpack.c.bf16 %v1090, %v1088
      %v1128 = vpack.c.bf16 %v1095, %v1093
      %v1129 = vpack.c.bf16 %v1100, %v1098
      %v1130 = vpack.c.bf16 %v1105, %v1103
      %v1131 = vpack.c.bf16 %v1110, %v1108
      %v1132 = vpack.c.bf16 %v1115, %v1113
      %v1133 = vpack.c.bf16 %v1120, %v1118
      %v1134 = vpack.c.bf16 %v1125, %v1123
      %v1139 = vunpack.c.l.b16 %v361
      %v1140 = vunpack.c.l.b16 %v362
      %v1141 = vunpack.c.l.b16 %v363
      %v1142 = vunpack.c.l.b16 %v364
      %v1143 = vpack.c.b16 %v1140, %v1139
      %v1144 = vpack.c.b16 %v1142, %v1141
      %vm1147 = vcmask 261120
      %v1149 = vsel %vm1147, %v1127, 0
      %v1152 = vsel %vm1147, %v1128, 0
      %v1155 = vsel %vm1147, %v1129, 0
      %v1158 = vsel %vm1147, %v1130, 0
      %v1161 = vsel %vm1147, %v1131, 0
      %v1164 = vsel %vm1147, %v1132, 0
      %v1167 = vsel %vm1147, %v1133, 0
      %v1170 = vsel %vm1147, %v1134, 0
      %1172 = vmatpush.bf16.msra.mxu0 0
      %1173 = vmatpush.bf16.msra.mxu0 0
      %1174 = vmatpush.bf16.msra.mxu0 0
      %1175 = vmatpush.bf16.msra.mxu0 0
      %1176 = vmatpush.bf16.msra.mxu0 0
      %1177 = vmatpush.bf16.msra.mxu0 0
      %1178 = vmatpush.bf16.msra.mxu0 %v1144
      %1179 = vmatpush.bf16.msra.mxu0 %v1143
      %1180 = vmatmul.bf16.gmra.mxu0 %v1149
      %v1181 = vpop.f32.mrf.mxu0
      %v1182 = vadd.f32 0.0, %v1181
      %v1183 = vpop.f32.mrf.mxu0
      %v1184 = vadd.f32 0.0, %v1183
      %1185 = vmatmul.bf16.gmra.mxu0 %v1152
      %v1186 = vpop.f32.mrf.mxu0
      %v1187 = vadd.f32 0.0, %v1186
      %v1188 = vpop.f32.mrf.mxu0
      %v1189 = vadd.f32 0.0, %v1188
      %1190 = vmatmul.bf16.gmra.mxu0 %v1155
      %v1191 = vpop.f32.mrf.mxu0
      %v1192 = vadd.f32 0.0, %v1191
      %v1193 = vpop.f32.mrf.mxu0
      %v1194 = vadd.f32 0.0, %v1193
      %1195 = vmatmul.bf16.gmra.mxu0 %v1158
      %v1196 = vpop.f32.mrf.mxu0
      %v1197 = vadd.f32 0.0, %v1196
      %v1198 = vpop.f32.mrf.mxu0
      %v1199 = vadd.f32 0.0, %v1198
      %1200 = vmatmul.bf16.gmra.mxu0 %v1161
      %v1201 = vpop.f32.mrf.mxu0
      %v1202 = vadd.f32 0.0, %v1201
      %v1203 = vpop.f32.mrf.mxu0
      %v1204 = vadd.f32 0.0, %v1203
      %1205 = vmatmul.bf16.gmra.mxu0 %v1164
      %v1206 = vpop.f32.mrf.mxu0
      %v1207 = vadd.f32 0.0, %v1206
      %v1208 = vpop.f32.mrf.mxu0
      %v1209 = vadd.f32 0.0, %v1208
      %1210 = vmatmul.bf16.gmra.mxu0 %v1167
      %v1211 = vpop.f32.mrf.mxu0
      %v1212 = vadd.f32 0.0, %v1211
      %v1213 = vpop.f32.mrf.mxu0
      %v1214 = vadd.f32 0.0, %v1213
      %1215 = vmatmul.bf16.gmra.mxu0 %v1170
      %v1216 = vpop.f32.mrf.mxu0
      %v1217 = vadd.f32 0.0, %v1216
      %v1218 = vpop.f32.mrf.mxu0
      %v1219 = vadd.f32 0.0, %v1218
      %1220 = vdwg.mxu0
      %v1225 = vunpack.c.l.b16 %v357
      %v1226 = vunpack.c.l.b16 %v358
      %v1227 = vunpack.c.l.b16 %v359
      %v1228 = vunpack.c.l.b16 %v360
      %v1229 = vpack.c.b16 %v1226, %v1225
      %v1230 = vpack.c.b16 %v1228, %v1227
      %v1234 = vsel %vm1147, %v997, 0
      %v1237 = vsel %vm1147, %v998, 0
      %v1240 = vsel %vm1147, %v999, 0
      %v1243 = vsel %vm1147, %v1000, 0
      %v1246 = vsel %vm1147, %v1001, 0
      %v1249 = vsel %vm1147, %v1002, 0
      %v1252 = vsel %vm1147, %v1003, 0
      %v1255 = vsel %vm1147, %v1004, 0
      %1257 = vmatpush.bf16.msra.mxu0 0
      %1258 = vmatpush.bf16.msra.mxu0 0
      %1259 = vmatpush.bf16.msra.mxu0 0
      %1260 = vmatpush.bf16.msra.mxu0 0
      %1261 = vmatpush.bf16.msra.mxu0 0
      %1262 = vmatpush.bf16.msra.mxu0 0
      %1263 = vmatpush.bf16.msra.mxu0 %v1230
      %1264 = vmatpush.bf16.msra.mxu0 %v1229
      %1265 = vmatmul.bf16.gmra.mxu0 %v1234
      %v1266 = vpop.f32.mrf.mxu0
      %v1267 = vadd.f32 %v1182, %v1266
      %v1268 = vpop.f32.mrf.mxu0
      %v1269 = vadd.f32 %v1184, %v1268
      %1270 = vmatmul.bf16.gmra.mxu0 %v1237
      %v1271 = vpop.f32.mrf.mxu0
      %v1272 = vadd.f32 %v1187, %v1271
      %v1273 = vpop.f32.mrf.mxu0
      %v1274 = vadd.f32 %v1189, %v1273
      %1275 = vmatmul.bf16.gmra.mxu0 %v1240
      %v1276 = vpop.f32.mrf.mxu0
      %v1277 = vadd.f32 %v1192, %v1276
      %v1278 = vpop.f32.mrf.mxu0
      %v1279 = vadd.f32 %v1194, %v1278
      %1280 = vmatmul.bf16.gmra.mxu0 %v1243
      %v1281 = vpop.f32.mrf.mxu0
      %v1282 = vadd.f32 %v1197, %v1281
      %v1283 = vpop.f32.mrf.mxu0
      %v1284 = vadd.f32 %v1199, %v1283
      %1285 = vmatmul.bf16.gmra.mxu0 %v1246
      %v1286 = vpop.f32.mrf.mxu0
      %v1287 = vadd.f32 %v1202, %v1286
      %v1288 = vpop.f32.mrf.mxu0
      %v1289 = vadd.f32 %v1204, %v1288
      %1290 = vmatmul.bf16.gmra.mxu0 %v1249
      %v1291 = vpop.f32.mrf.mxu0
      %v1292 = vadd.f32 %v1207, %v1291
      %v1293 = vpop.f32.mrf.mxu0
      %v1294 = vadd.f32 %v1209, %v1293
      %1295 = vmatmul.bf16.gmra.mxu0 %v1252
      %v1296 = vpop.f32.mrf.mxu0
      %v1297 = vadd.f32 %v1212, %v1296
      %v1298 = vpop.f32.mrf.mxu0
      %v1299 = vadd.f32 %v1214, %v1298
      %1300 = vmatmul.bf16.gmra.mxu0 %v1255
      %v1301 = vpop.f32.mrf.mxu0
      %v1302 = vadd.f32 %v1217, %v1301
      %v1303 = vpop.f32.mrf.mxu0
      %v1304 = vadd.f32 %v1219, %v1303
      %1305 = vdwg.mxu0
      %v1310 = vunpack.c.l.b16 %v365
      %v1311 = vunpack.c.l.b16 %v366
      %v1312 = vunpack.c.l.b16 %v367
      %v1313 = vunpack.c.l.b16 %v368
      %v1314 = vpack.c.b16 %v1311, %v1310
      %v1315 = vpack.c.b16 %v1313, %v1312
      %v1319 = vsel %vm1147, %v1021, 0
      %v1322 = vsel %vm1147, %v1022, 0
      %v1325 = vsel %vm1147, %v1023, 0
      %v1328 = vsel %vm1147, %v1024, 0
      %v1331 = vsel %vm1147, %v1025, 0
      %v1334 = vsel %vm1147, %v1026, 0
      %v1337 = vsel %vm1147, %v1027, 0
      %v1340 = vsel %vm1147, %v1028, 0
      %1342 = vmatpush.bf16.msra.mxu0 0
      %1343 = vmatpush.bf16.msra.mxu0 0
      %1344 = vmatpush.bf16.msra.mxu0 0
      %1345 = vmatpush.bf16.msra.mxu0 0
      %1346 = vmatpush.bf16.msra.mxu0 0
      %1347 = vmatpush.bf16.msra.mxu0 0
      %1348 = vmatpush.bf16.msra.mxu0 %v1315
      %1349 = vmatpush.bf16.msra.mxu0 %v1314
      %1350 = vmatmul.bf16.gmra.mxu0 %v1319
      %v1351 = vpop.f32.mrf.mxu0
      %v1352 = vadd.f32 0.0, %v1351
      %v1353 = vpop.f32.mrf.mxu0
      %v1354 = vadd.f32 0.0, %v1353
      %1355 = vmatmul.bf16.gmra.mxu0 %v1322
      %v1356 = vpop.f32.mrf.mxu0
      %v1357 = vadd.f32 0.0, %v1356
      %v1358 = vpop.f32.mrf.mxu0
      %v1359 = vadd.f32 0.0, %v1358
      %1360 = vmatmul.bf16.gmra.mxu0 %v1325
      %v1361 = vpop.f32.mrf.mxu0
      %v1362 = vadd.f32 0.0, %v1361
      %v1363 = vpop.f32.mrf.mxu0
      %v1364 = vadd.f32 0.0, %v1363
      %1365 = vmatmul.bf16.gmra.mxu0 %v1328
      %v1366 = vpop.f32.mrf.mxu0
      %v1367 = vadd.f32 0.0, %v1366
      %v1368 = vpop.f32.mrf.mxu0
      %v1369 = vadd.f32 0.0, %v1368
      %1370 = vmatmul.bf16.gmra.mxu0 %v1331
      %v1371 = vpop.f32.mrf.mxu0
      %v1372 = vadd.f32 0.0, %v1371
      %v1373 = vpop.f32.mrf.mxu0
      %v1374 = vadd.f32 0.0, %v1373
      %1375 = vmatmul.bf16.gmra.mxu0 %v1334
      %v1376 = vpop.f32.mrf.mxu0
      %v1377 = vadd.f32 0.0, %v1376
      %v1378 = vpop.f32.mrf.mxu0
      %v1379 = vadd.f32 0.0, %v1378
      %1380 = vmatmul.bf16.gmra.mxu0 %v1337
      %v1381 = vpop.f32.mrf.mxu0
      %v1382 = vadd.f32 0.0, %v1381
      %v1383 = vpop.f32.mrf.mxu0
      %v1384 = vadd.f32 0.0, %v1383
      %1385 = vmatmul.bf16.gmra.mxu0 %v1340
      %v1386 = vpop.f32.mrf.mxu0
      %v1387 = vadd.f32 0.0, %v1386
      %v1388 = vpop.f32.mrf.mxu0
      %v1389 = vadd.f32 0.0, %v1388
      %1390 = vdwg.mxu0
      %v1391 = vadd.f32 %v1267, %v1352
      %v1392 = vadd.f32 %v1269, %v1354
      %v1393 = vadd.f32 %v1272, %v1357
      %v1394 = vadd.f32 %v1274, %v1359
      %v1395 = vadd.f32 %v1277, %v1362
      %v1396 = vadd.f32 %v1279, %v1364
      %v1397 = vadd.f32 %v1282, %v1367
      %v1398 = vadd.f32 %v1284, %v1369
      %v1399 = vadd.f32 %v1287, %v1372
      %v1400 = vadd.f32 %v1289, %v1374
      %v1401 = vadd.f32 %v1292, %v1377
      %v1402 = vadd.f32 %v1294, %v1379
      %v1403 = vadd.f32 %v1297, %v1382
      %v1404 = vadd.f32 %v1299, %v1384
      %v1405 = vadd.f32 %v1302, %v1387
      %v1406 = vadd.f32 %v1304, %v1389
      %v1407 = vadd.f32 %v1391, %v411
      %v1408 = vadd.f32 %v1392, %v411
      %v1409 = vadd.f32 %v1393, %v411
      %v1410 = vadd.f32 %v1394, %v411
      %v1411 = vadd.f32 %v1395, %v411
      %v1412 = vadd.f32 %v1396, %v411
      %v1413 = vadd.f32 %v1397, %v411
      %v1414 = vadd.f32 %v1398, %v411
      %v1415 = vadd.f32 %v1399, %v411
      %v1416 = vadd.f32 %v1400, %v411
      %v1417 = vadd.f32 %v1401, %v411
      %v1418 = vadd.f32 %v1402, %v411
      %v1419 = vadd.f32 %v1403, %v411
      %v1420 = vadd.f32 %v1404, %v411
      %v1421 = vadd.f32 %v1405, %v411
      %v1422 = vadd.f32 %v1406, %v411
      %v1423 = vmax.f32 %v1407, 0.0
      %v1424 = vmax.f32 %v1408, 0.0
      %v1425 = vmax.f32 %v1409, 0.0
      %v1426 = vmax.f32 %v1410, 0.0
      %v1427 = vmax.f32 %v1411, 0.0
      %v1428 = vmax.f32 %v1412, 0.0
      %v1429 = vmax.f32 %v1413, 0.0
      %v1430 = vmax.f32 %v1414, 0.0
      %v1431 = vmax.f32 %v1415, 0.0
      %v1432 = vmax.f32 %v1416, 0.0
      %v1433 = vmax.f32 %v1417, 0.0
      %v1434 = vmax.f32 %v1418, 0.0
      %v1435 = vmax.f32 %v1419, 0.0
      %v1436 = vmax.f32 %v1420, 0.0
      %v1437 = vmax.f32 %v1421, 0.0
      %v1438 = vmax.f32 %v1422, 0.0
      %v1439 = vpack.c.bf16 %v1424, %v1423
      %v1440 = vpack.c.bf16 %v1426, %v1425
      %v1441 = vpack.c.bf16 %v1428, %v1427
      %v1442 = vpack.c.bf16 %v1430, %v1429
      %v1443 = vpack.c.bf16 %v1432, %v1431
      %v1444 = vpack.c.bf16 %v1434, %v1433
      %v1445 = vpack.c.bf16 %v1436, %v1435
      %v1446 = vpack.c.bf16 %v1438, %v1437
      %v1451 = vunpack.c.l.b16 %v369
      %v1452 = vunpack.c.l.b16 %v370
      %v1453 = vunpack.c.l.b16 %v371
      %v1454 = vunpack.c.l.b16 %v372
      %v1455 = vpack.c.b16 %v1452, %v1451
      %v1456 = vpack.c.b16 %v1454, %v1453
      %v1460 = vsel %vm1147, %v1439, 0
      %v1463 = vsel %vm1147, %v1440, 0
      %v1466 = vsel %vm1147, %v1441, 0
      %v1469 = vsel %vm1147, %v1442, 0
      %v1472 = vsel %vm1147, %v1443, 0
      %v1475 = vsel %vm1147, %v1444, 0
      %v1478 = vsel %vm1147, %v1445, 0
      %v1481 = vsel %vm1147, %v1446, 0
      %1483 = vmatpush.bf16.msra.mxu0 0
      %1484 = vmatpush.bf16.msra.mxu0 0
      %1485 = vmatpush.bf16.msra.mxu0 0
      %1486 = vmatpush.bf16.msra.mxu0 0
      %1487 = vmatpush.bf16.msra.mxu0 0
      %1488 = vmatpush.bf16.msra.mxu0 0
      %1489 = vmatpush.bf16.msra.mxu0 %v1456
      %1490 = vmatpush.bf16.msra.mxu0 %v1455
      %1491 = vmatmul.bf16.gmra.mxu0 %v1460
      %v1492 = vpop.f32.mrf.mxu0
      %v1493 = vadd.f32 %v412, %v1492
      %v1494 = vpop.f32.mrf.mxu0
      %v1495 = vadd.f32 %v412, %v1494
      %1496 = vmatmul.bf16.gmra.mxu0 %v1463
      %v1497 = vpop.f32.mrf.mxu0
      %v1498 = vadd.f32 %v412, %v1497
      %v1499 = vpop.f32.mrf.mxu0
      %v1500 = vadd.f32 %v412, %v1499
      %1501 = vmatmul.bf16.gmra.mxu0 %v1466
      %v1502 = vpop.f32.mrf.mxu0
      %v1503 = vadd.f32 %v412, %v1502
      %v1504 = vpop.f32.mrf.mxu0
      %v1505 = vadd.f32 %v412, %v1504
      %1506 = vmatmul.bf16.gmra.mxu0 %v1469
      %v1507 = vpop.f32.mrf.mxu0
      %v1508 = vadd.f32 %v412, %v1507
      %v1509 = vpop.f32.mrf.mxu0
      %v1510 = vadd.f32 %v412, %v1509
      %1511 = vmatmul.bf16.gmra.mxu0 %v1472
      %v1512 = vpop.f32.mrf.mxu0
      %v1513 = vadd.f32 %v412, %v1512
      %v1514 = vpop.f32.mrf.mxu0
      %v1515 = vadd.f32 %v412, %v1514
      %1516 = vmatmul.bf16.gmra.mxu0 %v1475
      %v1517 = vpop.f32.mrf.mxu0
      %v1518 = vadd.f32 %v412, %v1517
      %v1519 = vpop.f32.mrf.mxu0
      %v1520 = vadd.f32 %v412, %v1519
      %1521 = vmatmul.bf16.gmra.mxu0 %v1478
      %v1522 = vpop.f32.mrf.mxu0
      %v1523 = vadd.f32 %v412, %v1522
      %v1524 = vpop.f32.mrf.mxu0
      %v1525 = vadd.f32 %v412, %v1524
      %1526 = vmatmul.bf16.gmra.mxu0 %v1481
      %v1527 = vpop.f32.mrf.mxu0
      %v1528 = vadd.f32 %v412, %v1527
      %v1529 = vpop.f32.mrf.mxu0
      %v1530 = vadd.f32 %v412, %v1529
      %1531 = vdwg.mxu0
      %v1532 = vmax.f32 %v1493, 0.0
      %v1533 = vmax.f32 %v1495, 0.0
      %v1534 = vmax.f32 %v1498, 0.0
      %v1535 = vmax.f32 %v1500, 0.0
      %v1536 = vmax.f32 %v1503, 0.0
      %v1537 = vmax.f32 %v1505, 0.0
      %v1538 = vmax.f32 %v1508, 0.0
      %v1539 = vmax.f32 %v1510, 0.0
      %v1540 = vmax.f32 %v1513, 0.0
      %v1541 = vmax.f32 %v1515, 0.0
      %v1542 = vmax.f32 %v1518, 0.0
      %v1543 = vmax.f32 %v1520, 0.0
      %v1544 = vmax.f32 %v1523, 0.0
      %v1545 = vmax.f32 %v1525, 0.0
      %v1546 = vmax.f32 %v1528, 0.0
      %v1547 = vmax.f32 %v1530, 0.0
      %v1548 = vadd.f32 %v1532, %v933
      %v1549 = vadd.f32 %v1533, %v934
      %v1550 = vadd.f32 %v1534, %v935
      %v1551 = vadd.f32 %v1535, %v936
      %v1552 = vadd.f32 %v1536, %v937
      %v1553 = vadd.f32 %v1537, %v938
      %v1554 = vadd.f32 %v1538, %v939
      %v1555 = vadd.f32 %v1539, %v940
      %v1556 = vadd.f32 %v1540, %v941
      %v1557 = vadd.f32 %v1541, %v942
      %v1558 = vadd.f32 %v1542, %v943
      %v1559 = vadd.f32 %v1543, %v944
      %v1560 = vadd.f32 %v1544, %v945
      %v1561 = vadd.f32 %v1545, %v946
      %v1562 = vadd.f32 %v1546, %v947
      %v1563 = vadd.f32 %v1547, %v948
      %v1564 = vpack.c.bf16 %v1549, %v1548
      %v1565 = vpack.c.bf16 %v1551, %v1550
      %v1566 = vpack.c.bf16 %v1553, %v1552
      %v1567 = vpack.c.bf16 %v1555, %v1554
      %v1568 = vpack.c.bf16 %v1557, %v1556
      %v1569 = vpack.c.bf16 %v1559, %v1558
      %v1570 = vpack.c.bf16 %v1561, %v1560
      %v1571 = vpack.c.bf16 %v1563, %v1562
      %v1572 = vsel %vm1147, %v1548, 0.0
      %v1573 = vsel %vm1147, %v1549, 0.0
      %v1574 = vadd.f32 %v1572, %v1573
      %v1575 = vsel %vm1147, %v1550, 0.0
      %v1576 = vadd.f32 %v1574, %v1575
      %v1577 = vsel %vm1147, %v1551, 0.0
      %v1578 = vadd.f32 %v1576, %v1577
      %v1579 = vsel %vm1147, %v1552, 0.0
      %v1580 = vadd.f32 %v1578, %v1579
      %v1581 = vsel %vm1147, %v1553, 0.0
      %v1582 = vadd.f32 %v1580, %v1581
      %v1583 = vsel %vm1147, %v1554, 0.0
      %v1584 = vadd.f32 %v1582, %v1583
      %v1585 = vsel %vm1147, %v1555, 0.0
      %v1586 = vadd.f32 %v1584, %v1585
      %v1587 = vsel %vm1147, %v1556, 0.0
      %v1588 = vadd.f32 %v1586, %v1587
      %v1589 = vsel %vm1147, %v1557, 0.0
      %v1590 = vadd.f32 %v1588, %v1589
      %v1591 = vsel %vm1147, %v1558, 0.0
      %v1592 = vadd.f32 %v1590, %v1591
      %v1593 = vsel %vm1147, %v1559, 0.0
      %v1594 = vadd.f32 %v1592, %v1593
      %v1595 = vsel %vm1147, %v1560, 0.0
      %v1596 = vadd.f32 %v1594, %v1595
      %v1597 = vsel %vm1147, %v1561, 0.0
      %v1598 = vadd.f32 %v1596, %v1597
      %v1599 = vsel %vm1147, %v1562, 0.0
      %v1600 = vadd.f32 %v1598, %v1599
      %v1601 = vsel %vm1147, %v1563, 0.0
      %v1602 = vadd.f32 %v1600, %v1601
      %v1603 = vrot.slane %v1602, 4
      %v1604 = vadd.f32 %v1602, %v1603
      %v1605 = vrot.slane %v1604, 2
      %v1606 = vadd.f32 %v1604, %v1605
      %v1607 = vrot.slane %v1606, 1
      %v1608 = vadd.f32 %v1606, %v1607
      %v1609 = vpack.c.bf16 %v1608, %v1608
      %v1614 = vunpack.c.l.b16 %v373
      %v1615 = vunpack.c.l.b16 %v374
      %v1616 = vunpack.c.l.b16 %v375
      %v1617 = vunpack.c.l.b16 %v376
      %v1618 = vpack.c.b16 %v1615, %v1614
      %v1619 = vpack.c.b16 %v1617, %v1616
      %v1623 = vrot.slane %v409, 2
      %v1626 = vsel %vm1147, %v1609, 0
      %1628 = vmatpush.bf16.msra.mxu0 0
      %1629 = vmatpush.bf16.msra.mxu0 0
      %1630 = vmatpush.bf16.msra.mxu0 0
      %1631 = vmatpush.bf16.msra.mxu0 0
      %1632 = vmatpush.bf16.msra.mxu0 0
      %1633 = vmatpush.bf16.msra.mxu0 0
      %1634 = vmatpush.bf16.msra.mxu0 %v1619
      %1635 = vmatpush.bf16.msra.mxu0 %v1618
      %1636 = vmatmul.bf16.gmra.mxu0 %v1626
      %v1637 = vpop.f32.mrf.mxu0
      %v1638 = vadd.f32 %v1623, %v1637
      %v1639 = vpop.f32.mrf.mxu0
      %1640 = vdwg.mxu0
      %v1641 = vmax.f32 %v1638, 0.0
      %v1642 = vpack.c.bf16 %v1641, %v1641
      %v1647 = vunpack.c.l.b16 %v377
      %v1648 = vunpack.c.l.b16 %v378
      %v1649 = vunpack.c.l.b16 %v379
      %v1650 = vunpack.c.l.b16 %v380
      %v1651 = vpack.c.b16 %v1648, %v1647
      %v1652 = vpack.c.b16 %v1650, %v1649
      %v1655 = vrot.slane %v409, 3
      %v1658 = vsel %vm1147, %v1642, 0
      %1660 = vmatpush.bf16.msra.mxu0 0
      %1661 = vmatpush.bf16.msra.mxu0 0
      %1662 = vmatpush.bf16.msra.mxu0 0
      %1663 = vmatpush.bf16.msra.mxu0 0
      %1664 = vmatpush.bf16.msra.mxu0 0
      %1665 = vmatpush.bf16.msra.mxu0 0
      %1666 = vmatpush.bf16.msra.mxu0 %v1652
      %1667 = vmatpush.bf16.msra.mxu0 %v1651
      %1668 = vmatmul.bf16.gmra.mxu0 %v1658
      %v1669 = vpop.f32.mrf.mxu0
      %v1670 = vadd.f32 %v1655, %v1669
      %v1671 = vpop.f32.mrf.mxu0
      %1672 = vdwg.mxu0
      %v1673 = vmax.f32 %v1670, 0.0
      %v1674 = vperm.slane %v1673, 0
      %v1675 = vadd.f32 %v1674, %v949
      %v1676 = vadd.f32 %v1674, %v950
      %v1677 = vadd.f32 %v1674, %v951
      %v1678 = vadd.f32 %v1674, %v952
      %v1679 = vadd.f32 %v1674, %v953
      %v1680 = vadd.f32 %v1674, %v954
      %v1681 = vadd.f32 %v1674, %v955
      %v1682 = vadd.f32 %v1674, %v956
      %v1683 = vadd.f32 %v1674, %v957
      %v1684 = vadd.f32 %v1674, %v958
      %v1685 = vadd.f32 %v1674, %v959
      %v1686 = vadd.f32 %v1674, %v960
      %v1687 = vadd.f32 %v1674, %v961
      %v1688 = vadd.f32 %v1674, %v962
      %v1689 = vadd.f32 %v1674, %v963
      %v1690 = vadd.f32 %v1674, %v964
      %v1695 = vunpack.c.l.b16 %v381
      %v1696 = vunpack.c.l.b16 %v382
      %v1697 = vunpack.c.l.b16 %v383
      %v1698 = vunpack.c.l.b16 %v384
      %v1699 = vpack.c.b16 %v1696, %v1695
      %v1700 = vpack.c.b16 %v1698, %v1697
      %v1704 = vsel %vm1147, %v1564, 0
      %v1707 = vsel %vm1147, %v1565, 0
      %v1710 = vsel %vm1147, %v1566, 0
      %v1713 = vsel %vm1147, %v1567, 0
      %v1716 = vsel %vm1147, %v1568, 0
      %v1719 = vsel %vm1147, %v1569, 0
      %v1722 = vsel %vm1147, %v1570, 0
      %v1725 = vsel %vm1147, %v1571, 0
      %1727 = vmatpush.bf16.msra.mxu0 0
      %1728 = vmatpush.bf16.msra.mxu0 0
      %1729 = vmatpush.bf16.msra.mxu0 0
      %1730 = vmatpush.bf16.msra.mxu0 0
      %1731 = vmatpush.bf16.msra.mxu0 0
      %1732 = vmatpush.bf16.msra.mxu0 0
      %1733 = vmatpush.bf16.msra.mxu0 %v1700
      %1734 = vmatpush.bf16.msra.mxu0 %v1699
      %1735 = vmatmul.bf16.gmra.mxu0 %v1704
      %v1736 = vpop.f32.mrf.mxu0
      %v1737 = vadd.f32 0.0, %v1736
      %v1738 = vpop.f32.mrf.mxu0
      %v1739 = vadd.f32 0.0, %v1738
      %1740 = vmatmul.bf16.gmra.mxu0 %v1707
      %v1741 = vpop.f32.mrf.mxu0
      %v1742 = vadd.f32 0.0, %v1741
      %v1743 = vpop.f32.mrf.mxu0
      %v1744 = vadd.f32 0.0, %v1743
      %1745 = vmatmul.bf16.gmra.mxu0 %v1710
      %v1746 = vpop.f32.mrf.mxu0
      %v1747 = vadd.f32 0.0, %v1746
      %v1748 = vpop.f32.mrf.mxu0
      %v1749 = vadd.f32 0.0, %v1748
      %1750 = vmatmul.bf16.gmra.mxu0 %v1713
      %v1751 = vpop.f32.mrf.mxu0
      %v1752 = vadd.f32 0.0, %v1751
      %v1753 = vpop.f32.mrf.mxu0
      %v1754 = vadd.f32 0.0, %v1753
      %1755 = vmatmul.bf16.gmra.mxu0 %v1716
      %v1756 = vpop.f32.mrf.mxu0
      %v1757 = vadd.f32 0.0, %v1756
      %v1758 = vpop.f32.mrf.mxu0
      %v1759 = vadd.f32 0.0, %v1758
      %1760 = vmatmul.bf16.gmra.mxu0 %v1719
      %v1761 = vpop.f32.mrf.mxu0
      %v1762 = vadd.f32 0.0, %v1761
      %v1763 = vpop.f32.mrf.mxu0
      %v1764 = vadd.f32 0.0, %v1763
      %1765 = vmatmul.bf16.gmra.mxu0 %v1722
      %v1766 = vpop.f32.mrf.mxu0
      %v1767 = vadd.f32 0.0, %v1766
      %v1768 = vpop.f32.mrf.mxu0
      %v1769 = vadd.f32 0.0, %v1768
      %1770 = vmatmul.bf16.gmra.mxu0 %v1725
      %v1771 = vpop.f32.mrf.mxu0
      %v1772 = vadd.f32 0.0, %v1771
      %v1773 = vpop.f32.mrf.mxu0
      %v1774 = vadd.f32 0.0, %v1773
      %1775 = vdwg.mxu0
      %v1776 = vpack.c.bf16 %v1739, %v1737
      %v1777 = vpack.c.bf16 %v1744, %v1742
      %v1778 = vpack.c.bf16 %v1749, %v1747
      %v1779 = vpack.c.bf16 %v1754, %v1752
      %v1780 = vpack.c.bf16 %v1759, %v1757
      %v1781 = vpack.c.bf16 %v1764, %v1762
      %v1782 = vpack.c.bf16 %v1769, %v1767
      %v1783 = vpack.c.bf16 %v1774, %v1772
      %v1788 = vunpack.c.l.b16 %v385
      %v1789 = vunpack.c.l.b16 %v386
      %v1790 = vunpack.c.l.b16 %v387
      %v1791 = vunpack.c.l.b16 %v388
      %v1792 = vpack.c.b16 %v1789, %v1788
      %v1793 = vpack.c.b16 %v1791, %v1790
      %1796 = vmatpush.bf16.msra.mxu0 0
      %1797 = vmatpush.bf16.msra.mxu0 0
      %1798 = vmatpush.bf16.msra.mxu0 0
      %1799 = vmatpush.bf16.msra.mxu0 0
      %1800 = vmatpush.bf16.msra.mxu0 0
      %1801 = vmatpush.bf16.msra.mxu0 0
      %1802 = vmatpush.bf16.msra.mxu0 %v1793
      %1803 = vmatpush.bf16.msra.mxu0 %v1792
      %1804 = vmatmul.bf16.gmra.mxu0 %v1704
      %v1805 = vpop.f32.mrf.mxu0
      %v1806 = vadd.f32 0.0, %v1805
      %v1807 = vpop.f32.mrf.mxu0
      %v1808 = vadd.f32 0.0, %v1807
      %1809 = vmatmul.bf16.gmra.mxu0 %v1707
      %v1810 = vpop.f32.mrf.mxu0
      %v1811 = vadd.f32 0.0, %v1810
      %v1812 = vpop.f32.mrf.mxu0
      %v1813 = vadd.f32 0.0, %v1812
      %1814 = vmatmul.bf16.gmra.mxu0 %v1710
      %v1815 = vpop.f32.mrf.mxu0
      %v1816 = vadd.f32 0.0, %v1815
      %v1817 = vpop.f32.mrf.mxu0
      %v1818 = vadd.f32 0.0, %v1817
      %1819 = vmatmul.bf16.gmra.mxu0 %v1713
      %v1820 = vpop.f32.mrf.mxu0
      %v1821 = vadd.f32 0.0, %v1820
      %v1822 = vpop.f32.mrf.mxu0
      %v1823 = vadd.f32 0.0, %v1822
      %1824 = vmatmul.bf16.gmra.mxu0 %v1716
      %v1825 = vpop.f32.mrf.mxu0
      %v1826 = vadd.f32 0.0, %v1825
      %v1827 = vpop.f32.mrf.mxu0
      %v1828 = vadd.f32 0.0, %v1827
      %1829 = vmatmul.bf16.gmra.mxu0 %v1719
      %v1830 = vpop.f32.mrf.mxu0
      %v1831 = vadd.f32 0.0, %v1830
      %v1832 = vpop.f32.mrf.mxu0
      %v1833 = vadd.f32 0.0, %v1832
      %1834 = vmatmul.bf16.gmra.mxu0 %v1722
      %v1835 = vpop.f32.mrf.mxu0
      %v1836 = vadd.f32 0.0, %v1835
      %v1837 = vpop.f32.mrf.mxu0
      %v1838 = vadd.f32 0.0, %v1837
      %1839 = vmatmul.bf16.gmra.mxu0 %v1725
      %v1840 = vpop.f32.mrf.mxu0
      %v1841 = vadd.f32 0.0, %v1840
      %v1842 = vpop.f32.mrf.mxu0
      %v1843 = vadd.f32 0.0, %v1842
      %1844 = vdwg.mxu0
      %v1845 = vpack.c.bf16 %v1808, %v1806
      %v1846 = vpack.c.bf16 %v1813, %v1811
      %v1847 = vpack.c.bf16 %v1818, %v1816
      %v1848 = vpack.c.bf16 %v1823, %v1821
      %v1849 = vpack.c.bf16 %v1828, %v1826
      %v1850 = vpack.c.bf16 %v1833, %v1831
      %v1851 = vpack.c.bf16 %v1838, %v1836
      %v1852 = vpack.c.bf16 %v1843, %v1841
      %1853 = vmatpush.bf16.msra.mxu0 %v1852
      %1854 = vmatpush.bf16.msra.mxu0 %v1851
      %1855 = vmatpush.bf16.msra.mxu0 %v1850
      %1856 = vmatpush.bf16.msra.mxu0 %v1849
      %1857 = vmatpush.bf16.msra.mxu0 %v1848
      %1858 = vmatpush.bf16.msra.mxu0 %v1847
      %1859 = vmatpush.bf16.msra.mxu0 %v1846
      %1860 = vmatpush.bf16.msra.mxu0 %v1845
      %1861 = vmatmul.bf16.gmra.mxu0 %v917
      %v1862 = vpop.f32.mrf.mxu0
      %v1863 = vadd.f32 0.0, %v1862
      %v1864 = vpop.f32.mrf.mxu0
      %v1865 = vadd.f32 0.0, %v1864
      %1866 = vmatmul.bf16.gmra.mxu0 %v918
      %v1867 = vpop.f32.mrf.mxu0
      %v1868 = vadd.f32 0.0, %v1867
      %v1869 = vpop.f32.mrf.mxu0
      %v1870 = vadd.f32 0.0, %v1869
      %1871 = vmatmul.bf16.gmra.mxu0 %v919
      %v1872 = vpop.f32.mrf.mxu0
      %v1873 = vadd.f32 0.0, %v1872
      %v1874 = vpop.f32.mrf.mxu0
      %v1875 = vadd.f32 0.0, %v1874
      %1876 = vmatmul.bf16.gmra.mxu0 %v920
      %v1877 = vpop.f32.mrf.mxu0
      %v1878 = vadd.f32 0.0, %v1877
      %v1879 = vpop.f32.mrf.mxu0
      %v1880 = vadd.f32 0.0, %v1879
      %1881 = vmatmul.bf16.gmra.mxu0 %v921
      %v1882 = vpop.f32.mrf.mxu0
      %v1883 = vadd.f32 0.0, %v1882
      %v1884 = vpop.f32.mrf.mxu0
      %v1885 = vadd.f32 0.0, %v1884
      %1886 = vmatmul.bf16.gmra.mxu0 %v922
      %v1887 = vpop.f32.mrf.mxu0
      %v1888 = vadd.f32 0.0, %v1887
      %v1889 = vpop.f32.mrf.mxu0
      %v1890 = vadd.f32 0.0, %v1889
      %1891 = vmatmul.bf16.gmra.mxu0 %v923
      %v1892 = vpop.f32.mrf.mxu0
      %v1893 = vadd.f32 0.0, %v1892
      %v1894 = vpop.f32.mrf.mxu0
      %v1895 = vadd.f32 0.0, %v1894
      %1896 = vmatmul.bf16.gmra.mxu0 %v924
      %v1897 = vpop.f32.mrf.mxu0
      %v1898 = vadd.f32 0.0, %v1897
      %v1899 = vpop.f32.mrf.mxu0
      %v1900 = vadd.f32 0.0, %v1899
      %1901 = vmatmul.bf16.gmra.mxu0 %v925
      %v1902 = vpop.f32.mrf.mxu0
      %v1903 = vadd.f32 0.0, %v1902
      %v1904 = vpop.f32.mrf.mxu0
      %v1905 = vadd.f32 0.0, %v1904
      %1906 = vmatmul.bf16.gmra.mxu0 %v926
      %v1907 = vpop.f32.mrf.mxu0
      %v1908 = vadd.f32 0.0, %v1907
      %v1909 = vpop.f32.mrf.mxu0
      %v1910 = vadd.f32 0.0, %v1909
      %1911 = vmatmul.bf16.gmra.mxu0 %v927
      %v1912 = vpop.f32.mrf.mxu0
      %v1913 = vadd.f32 0.0, %v1912
      %v1914 = vpop.f32.mrf.mxu0
      %v1915 = vadd.f32 0.0, %v1914
      %1916 = vmatmul.bf16.gmra.mxu0 %v928
      %v1917 = vpop.f32.mrf.mxu0
      %v1918 = vadd.f32 0.0, %v1917
      %v1919 = vpop.f32.mrf.mxu0
      %v1920 = vadd.f32 0.0, %v1919
      %1921 = vmatmul.bf16.gmra.mxu0 %v929
      %v1922 = vpop.f32.mrf.mxu0
      %v1923 = vadd.f32 0.0, %v1922
      %v1924 = vpop.f32.mrf.mxu0
      %v1925 = vadd.f32 0.0, %v1924
      %1926 = vmatmul.bf16.gmra.mxu0 %v930
      %v1927 = vpop.f32.mrf.mxu0
      %v1928 = vadd.f32 0.0, %v1927
      %v1929 = vpop.f32.mrf.mxu0
      %v1930 = vadd.f32 0.0, %v1929
      %1931 = vmatmul.bf16.gmra.mxu0 %v931
      %v1932 = vpop.f32.mrf.mxu0
      %v1933 = vadd.f32 0.0, %v1932
      %v1934 = vpop.f32.mrf.mxu0
      %v1935 = vadd.f32 0.0, %v1934
      %1936 = vmatmul.bf16.gmra.mxu0 %v932
      %v1937 = vpop.f32.mrf.mxu0
      %v1938 = vadd.f32 0.0, %v1937
      %v1939 = vpop.f32.mrf.mxu0
      %v1940 = vadd.f32 0.0, %v1939
      %1941 = vdwg.mxu0
      %1942 = vmatpush.bf16.msra.mxu0 %v1783
      %1943 = vmatpush.bf16.msra.mxu0 %v1782
      %1944 = vmatpush.bf16.msra.mxu0 %v1781
      %1945 = vmatpush.bf16.msra.mxu0 %v1780
      %1946 = vmatpush.bf16.msra.mxu0 %v1779
      %1947 = vmatpush.bf16.msra.mxu0 %v1778
      %1948 = vmatpush.bf16.msra.mxu0 %v1777
      %1949 = vmatpush.bf16.msra.mxu0 %v1776
      %1950 = vmatmul.bf16.gmra.mxu0 %v741
      %v1951 = vpop.f32.mrf.mxu0
      %v1952 = vadd.f32 %v1863, %v1951
      %v1953 = vpop.f32.mrf.mxu0
      %v1954 = vadd.f32 %v1865, %v1953
      %1955 = vmatmul.bf16.gmra.mxu0 %v742
      %v1956 = vpop.f32.mrf.mxu0
      %v1957 = vadd.f32 %v1868, %v1956
      %v1958 = vpop.f32.mrf.mxu0
      %v1959 = vadd.f32 %v1870, %v1958
      %1960 = vmatmul.bf16.gmra.mxu0 %v743
      %v1961 = vpop.f32.mrf.mxu0
      %v1962 = vadd.f32 %v1873, %v1961
      %v1963 = vpop.f32.mrf.mxu0
      %v1964 = vadd.f32 %v1875, %v1963
      %1965 = vmatmul.bf16.gmra.mxu0 %v744
      %v1966 = vpop.f32.mrf.mxu0
      %v1967 = vadd.f32 %v1878, %v1966
      %v1968 = vpop.f32.mrf.mxu0
      %v1969 = vadd.f32 %v1880, %v1968
      %1970 = vmatmul.bf16.gmra.mxu0 %v745
      %v1971 = vpop.f32.mrf.mxu0
      %v1972 = vadd.f32 %v1883, %v1971
      %v1973 = vpop.f32.mrf.mxu0
      %v1974 = vadd.f32 %v1885, %v1973
      %1975 = vmatmul.bf16.gmra.mxu0 %v746
      %v1976 = vpop.f32.mrf.mxu0
      %v1977 = vadd.f32 %v1888, %v1976
      %v1978 = vpop.f32.mrf.mxu0
      %v1979 = vadd.f32 %v1890, %v1978
      %1980 = vmatmul.bf16.gmra.mxu0 %v747
      %v1981 = vpop.f32.mrf.mxu0
      %v1982 = vadd.f32 %v1893, %v1981
      %v1983 = vpop.f32.mrf.mxu0
      %v1984 = vadd.f32 %v1895, %v1983
      %1985 = vmatmul.bf16.gmra.mxu0 %v748
      %v1986 = vpop.f32.mrf.mxu0
      %v1987 = vadd.f32 %v1898, %v1986
      %v1988 = vpop.f32.mrf.mxu0
      %v1989 = vadd.f32 %v1900, %v1988
      %1990 = vmatmul.bf16.gmra.mxu0 %v749
      %v1991 = vpop.f32.mrf.mxu0
      %v1992 = vadd.f32 %v1903, %v1991
      %v1993 = vpop.f32.mrf.mxu0
      %v1994 = vadd.f32 %v1905, %v1993
      %1995 = vmatmul.bf16.gmra.mxu0 %v750
      %v1996 = vpop.f32.mrf.mxu0
      %v1997 = vadd.f32 %v1908, %v1996
      %v1998 = vpop.f32.mrf.mxu0
      %v1999 = vadd.f32 %v1910, %v1998
      %2000 = vmatmul.bf16.gmra.mxu0 %v751
      %v2001 = vpop.f32.mrf.mxu0
      %v2002 = vadd.f32 %v1913, %v2001
      %v2003 = vpop.f32.mrf.mxu0
      %v2004 = vadd.f32 %v1915, %v2003
      %2005 = vmatmul.bf16.gmra.mxu0 %v752
      %v2006 = vpop.f32.mrf.mxu0
      %v2007 = vadd.f32 %v1918, %v2006
      %v2008 = vpop.f32.mrf.mxu0
      %v2009 = vadd.f32 %v1920, %v2008
      %2010 = vmatmul.bf16.gmra.mxu0 %v753
      %v2011 = vpop.f32.mrf.mxu0
      %v2012 = vadd.f32 %v1923, %v2011
      %v2013 = vpop.f32.mrf.mxu0
      %v2014 = vadd.f32 %v1925, %v2013
      %2015 = vmatmul.bf16.gmra.mxu0 %v754
      %v2016 = vpop.f32.mrf.mxu0
      %v2017 = vadd.f32 %v1928, %v2016
      %v2018 = vpop.f32.mrf.mxu0
      %v2019 = vadd.f32 %v1930, %v2018
      %2020 = vmatmul.bf16.gmra.mxu0 %v755
      %v2021 = vpop.f32.mrf.mxu0
      %v2022 = vadd.f32 %v1933, %v2021
      %v2023 = vpop.f32.mrf.mxu0
      %v2024 = vadd.f32 %v1935, %v2023
      %2025 = vmatmul.bf16.gmra.mxu0 %v756
      %v2026 = vpop.f32.mrf.mxu0
      %v2027 = vadd.f32 %v1938, %v2026
      %v2028 = vpop.f32.mrf.mxu0
      %v2029 = vadd.f32 %v1940, %v2028
      %2030 = vdwg.mxu0
      %v2035 = vunpack.c.l.b16 %v389
      %v2036 = vunpack.c.l.b16 %v390
      %v2037 = vunpack.c.l.b16 %v391
      %v2038 = vunpack.c.l.b16 %v392
      %v2039 = vpack.c.b16 %v2036, %v2035
      %v2040 = vpack.c.b16 %v2038, %v2037
      %v2044 = vsel %vm1147, %v1005, 0
      %v2047 = vsel %vm1147, %v1006, 0
      %v2050 = vsel %vm1147, %v1007, 0
      %v2053 = vsel %vm1147, %v1008, 0
      %v2056 = vsel %vm1147, %v1009, 0
      %v2059 = vsel %vm1147, %v1010, 0
      %v2062 = vsel %vm1147, %v1011, 0
      %v2065 = vsel %vm1147, %v1012, 0
      %v2068 = vsel %vm1147, %v1013, 0
      %v2071 = vsel %vm1147, %v1014, 0
      %v2074 = vsel %vm1147, %v1015, 0
      %v2077 = vsel %vm1147, %v1016, 0
      %v2080 = vsel %vm1147, %v1017, 0
      %v2083 = vsel %vm1147, %v1018, 0
      %v2086 = vsel %vm1147, %v1019, 0
      %v2089 = vsel %vm1147, %v1020, 0
      %2091 = vmatpush.bf16.msra.mxu0 0
      %2092 = vmatpush.bf16.msra.mxu0 0
      %2093 = vmatpush.bf16.msra.mxu0 0
      %2094 = vmatpush.bf16.msra.mxu0 0
      %2095 = vmatpush.bf16.msra.mxu0 0
      %2096 = vmatpush.bf16.msra.mxu0 0
      %2097 = vmatpush.bf16.msra.mxu0 %v2040
      %2098 = vmatpush.bf16.msra.mxu0 %v2039
      %2099 = vmatmul.bf16.gmra.mxu0 %v2044
      %v2100 = vpop.f32.mrf.mxu0
      %v2101 = vadd.f32 0.0, %v2100
      %v2102 = vpop.f32.mrf.mxu0
      %v2103 = vadd.f32 0.0, %v2102
      %2104 = vmatmul.bf16.gmra.mxu0 %v2047
      %v2105 = vpop.f32.mrf.mxu0
      %v2106 = vadd.f32 0.0, %v2105
      %v2107 = vpop.f32.mrf.mxu0
      %v2108 = vadd.f32 0.0, %v2107
      %2109 = vmatmul.bf16.gmra.mxu0 %v2050
      %v2110 = vpop.f32.mrf.mxu0
      %v2111 = vadd.f32 0.0, %v2110
      %v2112 = vpop.f32.mrf.mxu0
      %v2113 = vadd.f32 0.0, %v2112
      %2114 = vmatmul.bf16.gmra.mxu0 %v2053
      %v2115 = vpop.f32.mrf.mxu0
      %v2116 = vadd.f32 0.0, %v2115
      %v2117 = vpop.f32.mrf.mxu0
      %v2118 = vadd.f32 0.0, %v2117
      %2119 = vmatmul.bf16.gmra.mxu0 %v2056
      %v2120 = vpop.f32.mrf.mxu0
      %v2121 = vadd.f32 0.0, %v2120
      %v2122 = vpop.f32.mrf.mxu0
      %v2123 = vadd.f32 0.0, %v2122
      %2124 = vmatmul.bf16.gmra.mxu0 %v2059
      %v2125 = vpop.f32.mrf.mxu0
      %v2126 = vadd.f32 0.0, %v2125
      %v2127 = vpop.f32.mrf.mxu0
      %v2128 = vadd.f32 0.0, %v2127
      %2129 = vmatmul.bf16.gmra.mxu0 %v2062
      %v2130 = vpop.f32.mrf.mxu0
      %v2131 = vadd.f32 0.0, %v2130
      %v2132 = vpop.f32.mrf.mxu0
      %v2133 = vadd.f32 0.0, %v2132
      %2134 = vmatmul.bf16.gmra.mxu0 %v2065
      %v2135 = vpop.f32.mrf.mxu0
      %v2136 = vadd.f32 0.0, %v2135
      %v2137 = vpop.f32.mrf.mxu0
      %v2138 = vadd.f32 0.0, %v2137
      %2139 = vmatmul.bf16.gmra.mxu0 %v2068
      %v2140 = vpop.f32.mrf.mxu0
      %v2141 = vadd.f32 0.0, %v2140
      %v2142 = vpop.f32.mrf.mxu0
      %v2143 = vadd.f32 0.0, %v2142
      %2144 = vmatmul.bf16.gmra.mxu0 %v2071
      %v2145 = vpop.f32.mrf.mxu0
      %v2146 = vadd.f32 0.0, %v2145
      %v2147 = vpop.f32.mrf.mxu0
      %v2148 = vadd.f32 0.0, %v2147
      %2149 = vmatmul.bf16.gmra.mxu0 %v2074
      %v2150 = vpop.f32.mrf.mxu0
      %v2151 = vadd.f32 0.0, %v2150
      %v2152 = vpop.f32.mrf.mxu0
      %v2153 = vadd.f32 0.0, %v2152
      %2154 = vmatmul.bf16.gmra.mxu0 %v2077
      %v2155 = vpop.f32.mrf.mxu0
      %v2156 = vadd.f32 0.0, %v2155
      %v2157 = vpop.f32.mrf.mxu0
      %v2158 = vadd.f32 0.0, %v2157
      %2159 = vmatmul.bf16.gmra.mxu0 %v2080
      %v2160 = vpop.f32.mrf.mxu0
      %v2161 = vadd.f32 0.0, %v2160
      %v2162 = vpop.f32.mrf.mxu0
      %v2163 = vadd.f32 0.0, %v2162
      %2164 = vmatmul.bf16.gmra.mxu0 %v2083
      %v2165 = vpop.f32.mrf.mxu0
      %v2166 = vadd.f32 0.0, %v2165
      %v2167 = vpop.f32.mrf.mxu0
      %v2168 = vadd.f32 0.0, %v2167
      %2169 = vmatmul.bf16.gmra.mxu0 %v2086
      %v2170 = vpop.f32.mrf.mxu0
      %v2171 = vadd.f32 0.0, %v2170
      %v2172 = vpop.f32.mrf.mxu0
      %v2173 = vadd.f32 0.0, %v2172
      %2174 = vmatmul.bf16.gmra.mxu0 %v2089
      %v2175 = vpop.f32.mrf.mxu0
      %v2176 = vadd.f32 0.0, %v2175
      %v2177 = vpop.f32.mrf.mxu0
      %v2178 = vadd.f32 0.0, %v2177
      %2179 = vdwg.mxu0
      %v2180 = vadd.f32 %v1952, %v2101
      %v2181 = vadd.f32 %v1954, %v2103
      %v2182 = vadd.f32 %v1957, %v2106
      %v2183 = vadd.f32 %v1959, %v2108
      %v2184 = vadd.f32 %v1962, %v2111
      %v2185 = vadd.f32 %v1964, %v2113
      %v2186 = vadd.f32 %v1967, %v2116
      %v2187 = vadd.f32 %v1969, %v2118
      %v2188 = vadd.f32 %v1972, %v2121
      %v2189 = vadd.f32 %v1974, %v2123
      %v2190 = vadd.f32 %v1977, %v2126
      %v2191 = vadd.f32 %v1979, %v2128
      %v2192 = vadd.f32 %v1982, %v2131
      %v2193 = vadd.f32 %v1984, %v2133
      %v2194 = vadd.f32 %v1987, %v2136
      %v2195 = vadd.f32 %v1989, %v2138
      %v2196 = vadd.f32 %v1992, %v2141
      %v2197 = vadd.f32 %v1994, %v2143
      %v2198 = vadd.f32 %v1997, %v2146
      %v2199 = vadd.f32 %v1999, %v2148
      %v2200 = vadd.f32 %v2002, %v2151
      %v2201 = vadd.f32 %v2004, %v2153
      %v2202 = vadd.f32 %v2007, %v2156
      %v2203 = vadd.f32 %v2009, %v2158
      %v2204 = vadd.f32 %v2012, %v2161
      %v2205 = vadd.f32 %v2014, %v2163
      %v2206 = vadd.f32 %v2017, %v2166
      %v2207 = vadd.f32 %v2019, %v2168
      %v2208 = vadd.f32 %v2022, %v2171
      %v2209 = vadd.f32 %v2024, %v2173
      %v2210 = vadd.f32 %v2027, %v2176
      %v2211 = vadd.f32 %v2029, %v2178
      %v2212 = vadd.f32 %v2180, %v413
      %v2213 = vadd.f32 %v2181, %v413
      %v2214 = vadd.f32 %v2182, %v413
      %v2215 = vadd.f32 %v2183, %v413
      %v2216 = vadd.f32 %v2184, %v413
      %v2217 = vadd.f32 %v2185, %v413
      %v2218 = vadd.f32 %v2186, %v413
      %v2219 = vadd.f32 %v2187, %v413
      %v2220 = vadd.f32 %v2188, %v413
      %v2221 = vadd.f32 %v2189, %v413
      %v2222 = vadd.f32 %v2190, %v413
      %v2223 = vadd.f32 %v2191, %v413
      %v2224 = vadd.f32 %v2192, %v413
      %v2225 = vadd.f32 %v2193, %v413
      %v2226 = vadd.f32 %v2194, %v413
      %v2227 = vadd.f32 %v2195, %v413
      %v2228 = vadd.f32 %v2196, %v413
      %v2229 = vadd.f32 %v2197, %v413
      %v2230 = vadd.f32 %v2198, %v413
      %v2231 = vadd.f32 %v2199, %v413
      %v2232 = vadd.f32 %v2200, %v413
      %v2233 = vadd.f32 %v2201, %v413
      %v2234 = vadd.f32 %v2202, %v413
      %v2235 = vadd.f32 %v2203, %v413
      %v2236 = vadd.f32 %v2204, %v413
      %v2237 = vadd.f32 %v2205, %v413
      %v2238 = vadd.f32 %v2206, %v413
      %v2239 = vadd.f32 %v2207, %v413
      %v2240 = vadd.f32 %v2208, %v413
      %v2241 = vadd.f32 %v2209, %v413
      %v2242 = vadd.f32 %v2210, %v413
      %v2243 = vadd.f32 %v2211, %v413
      %v2244 = vmax.f32 %v2212, 0.0
      %v2245 = vmax.f32 %v2213, 0.0
      %v2246 = vmax.f32 %v2214, 0.0
      %v2247 = vmax.f32 %v2215, 0.0
      %v2248 = vmax.f32 %v2216, 0.0
      %v2249 = vmax.f32 %v2217, 0.0
      %v2250 = vmax.f32 %v2218, 0.0
      %v2251 = vmax.f32 %v2219, 0.0
      %v2252 = vmax.f32 %v2220, 0.0
      %v2253 = vmax.f32 %v2221, 0.0
      %v2254 = vmax.f32 %v2222, 0.0
      %v2255 = vmax.f32 %v2223, 0.0
      %v2256 = vmax.f32 %v2224, 0.0
      %v2257 = vmax.f32 %v2225, 0.0
      %v2258 = vmax.f32 %v2226, 0.0
      %v2259 = vmax.f32 %v2227, 0.0
      %v2260 = vmax.f32 %v2228, 0.0
      %v2261 = vmax.f32 %v2229, 0.0
      %v2262 = vmax.f32 %v2230, 0.0
      %v2263 = vmax.f32 %v2231, 0.0
      %v2264 = vmax.f32 %v2232, 0.0
      %v2265 = vmax.f32 %v2233, 0.0
      %v2266 = vmax.f32 %v2234, 0.0
      %v2267 = vmax.f32 %v2235, 0.0
      %v2268 = vmax.f32 %v2236, 0.0
      %v2269 = vmax.f32 %v2237, 0.0
      %v2270 = vmax.f32 %v2238, 0.0
      %v2271 = vmax.f32 %v2239, 0.0
      %v2272 = vmax.f32 %v2240, 0.0
      %v2273 = vmax.f32 %v2241, 0.0
      %v2274 = vmax.f32 %v2242, 0.0
      %v2275 = vmax.f32 %v2243, 0.0
      %v2276 = vpack.c.bf16 %v2245, %v2244
      %v2277 = vpack.c.bf16 %v2247, %v2246
      %v2278 = vpack.c.bf16 %v2249, %v2248
      %v2279 = vpack.c.bf16 %v2251, %v2250
      %v2280 = vpack.c.bf16 %v2253, %v2252
      %v2281 = vpack.c.bf16 %v2255, %v2254
      %v2282 = vpack.c.bf16 %v2257, %v2256
      %v2283 = vpack.c.bf16 %v2259, %v2258
      %v2284 = vpack.c.bf16 %v2261, %v2260
      %v2285 = vpack.c.bf16 %v2263, %v2262
      %v2286 = vpack.c.bf16 %v2265, %v2264
      %v2287 = vpack.c.bf16 %v2267, %v2266
      %v2288 = vpack.c.bf16 %v2269, %v2268
      %v2289 = vpack.c.bf16 %v2271, %v2270
      %v2290 = vpack.c.bf16 %v2273, %v2272
      %v2291 = vpack.c.bf16 %v2275, %v2274
      %v2296 = vunpack.c.l.b16 %v393
      %v2297 = vunpack.c.l.b16 %v394
      %v2298 = vunpack.c.l.b16 %v395
      %v2299 = vunpack.c.l.b16 %v396
      %v2300 = vpack.c.b16 %v2297, %v2296
      %v2301 = vpack.c.b16 %v2299, %v2298
      %v2305 = vsel %vm1147, %v2276, 0
      %v2308 = vsel %vm1147, %v2277, 0
      %v2311 = vsel %vm1147, %v2278, 0
      %v2314 = vsel %vm1147, %v2279, 0
      %v2317 = vsel %vm1147, %v2280, 0
      %v2320 = vsel %vm1147, %v2281, 0
      %v2323 = vsel %vm1147, %v2282, 0
      %v2326 = vsel %vm1147, %v2283, 0
      %v2329 = vsel %vm1147, %v2284, 0
      %v2332 = vsel %vm1147, %v2285, 0
      %v2335 = vsel %vm1147, %v2286, 0
      %v2338 = vsel %vm1147, %v2287, 0
      %v2341 = vsel %vm1147, %v2288, 0
      %v2344 = vsel %vm1147, %v2289, 0
      %v2347 = vsel %vm1147, %v2290, 0
      %v2350 = vsel %vm1147, %v2291, 0
      %2352 = vmatpush.bf16.msra.mxu0 0
      %2353 = vmatpush.bf16.msra.mxu0 0
      %2354 = vmatpush.bf16.msra.mxu0 0
      %2355 = vmatpush.bf16.msra.mxu0 0
      %2356 = vmatpush.bf16.msra.mxu0 0
      %2357 = vmatpush.bf16.msra.mxu0 0
      %2358 = vmatpush.bf16.msra.mxu0 %v2301
      %2359 = vmatpush.bf16.msra.mxu0 %v2300
      %2360 = vmatmul.bf16.gmra.mxu0 %v2305
      %v2361 = vpop.f32.mrf.mxu0
      %v2362 = vadd.f32 %v414, %v2361
      %v2363 = vpop.f32.mrf.mxu0
      %v2364 = vadd.f32 %v414, %v2363
      %2365 = vmatmul.bf16.gmra.mxu0 %v2308
      %v2366 = vpop.f32.mrf.mxu0
      %v2367 = vadd.f32 %v414, %v2366
      %v2368 = vpop.f32.mrf.mxu0
      %v2369 = vadd.f32 %v414, %v2368
      %2370 = vmatmul.bf16.gmra.mxu0 %v2311
      %v2371 = vpop.f32.mrf.mxu0
      %v2372 = vadd.f32 %v414, %v2371
      %v2373 = vpop.f32.mrf.mxu0
      %v2374 = vadd.f32 %v414, %v2373
      %2375 = vmatmul.bf16.gmra.mxu0 %v2314
      %v2376 = vpop.f32.mrf.mxu0
      %v2377 = vadd.f32 %v414, %v2376
      %v2378 = vpop.f32.mrf.mxu0
      %v2379 = vadd.f32 %v414, %v2378
      %2380 = vmatmul.bf16.gmra.mxu0 %v2317
      %v2381 = vpop.f32.mrf.mxu0
      %v2382 = vadd.f32 %v414, %v2381
      %v2383 = vpop.f32.mrf.mxu0
      %v2384 = vadd.f32 %v414, %v2383
      %2385 = vmatmul.bf16.gmra.mxu0 %v2320
      %v2386 = vpop.f32.mrf.mxu0
      %v2387 = vadd.f32 %v414, %v2386
      %v2388 = vpop.f32.mrf.mxu0
      %v2389 = vadd.f32 %v414, %v2388
      %2390 = vmatmul.bf16.gmra.mxu0 %v2323
      %v2391 = vpop.f32.mrf.mxu0
      %v2392 = vadd.f32 %v414, %v2391
      %v2393 = vpop.f32.mrf.mxu0
      %v2394 = vadd.f32 %v414, %v2393
      %2395 = vmatmul.bf16.gmra.mxu0 %v2326
      %v2396 = vpop.f32.mrf.mxu0
      %v2397 = vadd.f32 %v414, %v2396
      %v2398 = vpop.f32.mrf.mxu0
      %v2399 = vadd.f32 %v414, %v2398
      %2400 = vmatmul.bf16.gmra.mxu0 %v2329
      %v2401 = vpop.f32.mrf.mxu0
      %v2402 = vadd.f32 %v414, %v2401
      %v2403 = vpop.f32.mrf.mxu0
      %v2404 = vadd.f32 %v414, %v2403
      %2405 = vmatmul.bf16.gmra.mxu0 %v2332
      %v2406 = vpop.f32.mrf.mxu0
      %v2407 = vadd.f32 %v414, %v2406
      %v2408 = vpop.f32.mrf.mxu0
      %v2409 = vadd.f32 %v414, %v2408
      %2410 = vmatmul.bf16.gmra.mxu0 %v2335
      %v2411 = vpop.f32.mrf.mxu0
      %v2412 = vadd.f32 %v414, %v2411
      %v2413 = vpop.f32.mrf.mxu0
      %v2414 = vadd.f32 %v414, %v2413
      %2415 = vmatmul.bf16.gmra.mxu0 %v2338
      %v2416 = vpop.f32.mrf.mxu0
      %v2417 = vadd.f32 %v414, %v2416
      %v2418 = vpop.f32.mrf.mxu0
      %v2419 = vadd.f32 %v414, %v2418
      %2420 = vmatmul.bf16.gmra.mxu0 %v2341
      %v2421 = vpop.f32.mrf.mxu0
      %v2422 = vadd.f32 %v414, %v2421
      %v2423 = vpop.f32.mrf.mxu0
      %v2424 = vadd.f32 %v414, %v2423
      %2425 = vmatmul.bf16.gmra.mxu0 %v2344
      %v2426 = vpop.f32.mrf.mxu0
      %v2427 = vadd.f32 %v414, %v2426
      %v2428 = vpop.f32.mrf.mxu0
      %v2429 = vadd.f32 %v414, %v2428
      %2430 = vmatmul.bf16.gmra.mxu0 %v2347
      %v2431 = vpop.f32.mrf.mxu0
      %v2432 = vadd.f32 %v414, %v2431
      %v2433 = vpop.f32.mrf.mxu0
      %v2434 = vadd.f32 %v414, %v2433
      %2435 = vmatmul.bf16.gmra.mxu0 %v2350
      %v2436 = vpop.f32.mrf.mxu0
      %v2437 = vadd.f32 %v414, %v2436
      %v2438 = vpop.f32.mrf.mxu0
      %v2439 = vadd.f32 %v414, %v2438
      %2440 = vdwg.mxu0
      %v2441 = vmax.f32 %v2362, 0.0
      %v2442 = vmax.f32 %v2364, 0.0
      %v2443 = vmax.f32 %v2367, 0.0
      %v2444 = vmax.f32 %v2369, 0.0
      %v2445 = vmax.f32 %v2372, 0.0
      %v2446 = vmax.f32 %v2374, 0.0
      %v2447 = vmax.f32 %v2377, 0.0
      %v2448 = vmax.f32 %v2379, 0.0
      %v2449 = vmax.f32 %v2382, 0.0
      %v2450 = vmax.f32 %v2384, 0.0
      %v2451 = vmax.f32 %v2387, 0.0
      %v2452 = vmax.f32 %v2389, 0.0
      %v2453 = vmax.f32 %v2392, 0.0
      %v2454 = vmax.f32 %v2394, 0.0
      %v2455 = vmax.f32 %v2397, 0.0
      %v2456 = vmax.f32 %v2399, 0.0
      %v2457 = vmax.f32 %v2402, 0.0
      %v2458 = vmax.f32 %v2404, 0.0
      %v2459 = vmax.f32 %v2407, 0.0
      %v2460 = vmax.f32 %v2409, 0.0
      %v2461 = vmax.f32 %v2412, 0.0
      %v2462 = vmax.f32 %v2414, 0.0
      %v2463 = vmax.f32 %v2417, 0.0
      %v2464 = vmax.f32 %v2419, 0.0
      %v2465 = vmax.f32 %v2422, 0.0
      %v2466 = vmax.f32 %v2424, 0.0
      %v2467 = vmax.f32 %v2427, 0.0
      %v2468 = vmax.f32 %v2429, 0.0
      %v2469 = vmax.f32 %v2432, 0.0
      %v2470 = vmax.f32 %v2434, 0.0
      %v2471 = vmax.f32 %v2437, 0.0
      %v2472 = vmax.f32 %v2439, 0.0
      %v2473 = vadd.f32 %v2441, %v965
      %v2474 = vadd.f32 %v2442, %v966
      %v2475 = vadd.f32 %v2443, %v967
      %v2476 = vadd.f32 %v2444, %v968
      %v2477 = vadd.f32 %v2445, %v969
      %v2478 = vadd.f32 %v2446, %v970
      %v2479 = vadd.f32 %v2447, %v971
      %v2480 = vadd.f32 %v2448, %v972
      %v2481 = vadd.f32 %v2449, %v973
      %v2482 = vadd.f32 %v2450, %v974
      %v2483 = vadd.f32 %v2451, %v975
      %v2484 = vadd.f32 %v2452, %v976
      %v2485 = vadd.f32 %v2453, %v977
      %v2486 = vadd.f32 %v2454, %v978
      %v2487 = vadd.f32 %v2455, %v979
      %v2488 = vadd.f32 %v2456, %v980
      %v2489 = vadd.f32 %v2457, %v981
      %v2490 = vadd.f32 %v2458, %v982
      %v2491 = vadd.f32 %v2459, %v983
      %v2492 = vadd.f32 %v2460, %v984
      %v2493 = vadd.f32 %v2461, %v985
      %v2494 = vadd.f32 %v2462, %v986
      %v2495 = vadd.f32 %v2463, %v987
      %v2496 = vadd.f32 %v2464, %v988
      %v2497 = vadd.f32 %v2465, %v989
      %v2498 = vadd.f32 %v2466, %v990
      %v2499 = vadd.f32 %v2467, %v991
      %v2500 = vadd.f32 %v2468, %v992
      %v2501 = vadd.f32 %v2469, %v993
      %v2502 = vadd.f32 %v2470, %v994
      %v2503 = vadd.f32 %v2471, %v995
      %v2504 = vadd.f32 %v2472, %v996
      %v2505 = vpack.c.bf16 %v2474, %v2473
      %v2506 = vpack.c.bf16 %v2476, %v2475
      %v2507 = vpack.c.bf16 %v2478, %v2477
      %v2508 = vpack.c.bf16 %v2480, %v2479
      %v2509 = vpack.c.bf16 %v2482, %v2481
      %v2510 = vpack.c.bf16 %v2484, %v2483
      %v2511 = vpack.c.bf16 %v2486, %v2485
      %v2512 = vpack.c.bf16 %v2488, %v2487
      %v2513 = vpack.c.bf16 %v2490, %v2489
      %v2514 = vpack.c.bf16 %v2492, %v2491
      %v2515 = vpack.c.bf16 %v2494, %v2493
      %v2516 = vpack.c.bf16 %v2496, %v2495
      %v2517 = vpack.c.bf16 %v2498, %v2497
      %v2518 = vpack.c.bf16 %v2500, %v2499
      %v2519 = vpack.c.bf16 %v2502, %v2501
      %v2520 = vpack.c.bf16 %v2504, %v2503
      %v2521 = vpack.c.bf16 %v1676, %v1675
      %v2522 = vpack.c.bf16 %v1678, %v1677
      %v2523 = vpack.c.bf16 %v1680, %v1679
      %v2524 = vpack.c.bf16 %v1682, %v1681
      %v2525 = vpack.c.bf16 %v1684, %v1683
      %v2526 = vpack.c.bf16 %v1686, %v1685
      %v2527 = vpack.c.bf16 %v1688, %v1687
      %v2528 = vpack.c.bf16 %v1690, %v1689
      %2529 = vmatpush.bf16.msra.mxu0 %v2512
      %2530 = vmatpush.bf16.msra.mxu0 %v2511
      %2531 = vmatpush.bf16.msra.mxu0 %v2510
      %2532 = vmatpush.bf16.msra.mxu0 %v2509
      %2533 = vmatpush.bf16.msra.mxu0 %v2508
      %2534 = vmatpush.bf16.msra.mxu0 %v2507
      %2535 = vmatpush.bf16.msra.mxu0 %v2506
      %2536 = vmatpush.bf16.msra.mxu0 %v2505
      %2537 = vmatmul.bf16.gmra.mxu0 %v565
      %v2538 = vpop.f32.mrf.mxu0
      %v2539 = vadd.f32 0.0, %v2538
      %v2540 = vpop.f32.mrf.mxu0
      %v2541 = vadd.f32 0.0, %v2540
      %2542 = vmatmul.bf16.gmra.mxu0 %v567
      %v2543 = vpop.f32.mrf.mxu0
      %v2544 = vadd.f32 0.0, %v2543
      %v2545 = vpop.f32.mrf.mxu0
      %v2546 = vadd.f32 0.0, %v2545
      %2547 = vmatmul.bf16.gmra.mxu0 %v569
      %v2548 = vpop.f32.mrf.mxu0
      %v2549 = vadd.f32 0.0, %v2548
      %v2550 = vpop.f32.mrf.mxu0
      %v2551 = vadd.f32 0.0, %v2550
      %2552 = vmatmul.bf16.gmra.mxu0 %v571
      %v2553 = vpop.f32.mrf.mxu0
      %v2554 = vadd.f32 0.0, %v2553
      %v2555 = vpop.f32.mrf.mxu0
      %v2556 = vadd.f32 0.0, %v2555
      %2557 = vmatmul.bf16.gmra.mxu0 %v573
      %v2558 = vpop.f32.mrf.mxu0
      %v2559 = vadd.f32 0.0, %v2558
      %v2560 = vpop.f32.mrf.mxu0
      %v2561 = vadd.f32 0.0, %v2560
      %2562 = vmatmul.bf16.gmra.mxu0 %v575
      %v2563 = vpop.f32.mrf.mxu0
      %v2564 = vadd.f32 0.0, %v2563
      %v2565 = vpop.f32.mrf.mxu0
      %v2566 = vadd.f32 0.0, %v2565
      %2567 = vmatmul.bf16.gmra.mxu0 %v577
      %v2568 = vpop.f32.mrf.mxu0
      %v2569 = vadd.f32 0.0, %v2568
      %v2570 = vpop.f32.mrf.mxu0
      %v2571 = vadd.f32 0.0, %v2570
      %2572 = vmatmul.bf16.gmra.mxu0 %v579
      %v2573 = vpop.f32.mrf.mxu0
      %v2574 = vadd.f32 0.0, %v2573
      %v2575 = vpop.f32.mrf.mxu0
      %v2576 = vadd.f32 0.0, %v2575
      %2577 = vdwg.mxu0
      %2578 = vmatpush.bf16.msra.mxu0 %v2520
      %2579 = vmatpush.bf16.msra.mxu0 %v2519
      %2580 = vmatpush.bf16.msra.mxu0 %v2518
      %2581 = vmatpush.bf16.msra.mxu0 %v2517
      %2582 = vmatpush.bf16.msra.mxu0 %v2516
      %2583 = vmatpush.bf16.msra.mxu0 %v2515
      %2584 = vmatpush.bf16.msra.mxu0 %v2514
      %2585 = vmatpush.bf16.msra.mxu0 %v2513
      %2586 = vmatmul.bf16.gmra.mxu0 %v566
      %v2587 = vpop.f32.mrf.mxu0
      %v2588 = vadd.f32 %v2539, %v2587
      %v2589 = vpop.f32.mrf.mxu0
      %v2590 = vadd.f32 %v2541, %v2589
      %2591 = vmatmul.bf16.gmra.mxu0 %v568
      %v2592 = vpop.f32.mrf.mxu0
      %v2593 = vadd.f32 %v2544, %v2592
      %v2594 = vpop.f32.mrf.mxu0
      %v2595 = vadd.f32 %v2546, %v2594
      %2596 = vmatmul.bf16.gmra.mxu0 %v570
      %v2597 = vpop.f32.mrf.mxu0
      %v2598 = vadd.f32 %v2549, %v2597
      %v2599 = vpop.f32.mrf.mxu0
      %v2600 = vadd.f32 %v2551, %v2599
      %2601 = vmatmul.bf16.gmra.mxu0 %v572
      %v2602 = vpop.f32.mrf.mxu0
      %v2603 = vadd.f32 %v2554, %v2602
      %v2604 = vpop.f32.mrf.mxu0
      %v2605 = vadd.f32 %v2556, %v2604
      %2606 = vmatmul.bf16.gmra.mxu0 %v574
      %v2607 = vpop.f32.mrf.mxu0
      %v2608 = vadd.f32 %v2559, %v2607
      %v2609 = vpop.f32.mrf.mxu0
      %v2610 = vadd.f32 %v2561, %v2609
      %2611 = vmatmul.bf16.gmra.mxu0 %v576
      %v2612 = vpop.f32.mrf.mxu0
      %v2613 = vadd.f32 %v2564, %v2612
      %v2614 = vpop.f32.mrf.mxu0
      %v2615 = vadd.f32 %v2566, %v2614
      %2616 = vmatmul.bf16.gmra.mxu0 %v578
      %v2617 = vpop.f32.mrf.mxu0
      %v2618 = vadd.f32 %v2569, %v2617
      %v2619 = vpop.f32.mrf.mxu0
      %v2620 = vadd.f32 %v2571, %v2619
      %2621 = vmatmul.bf16.gmra.mxu0 %v580
      %v2622 = vpop.f32.mrf.mxu0
      %v2623 = vadd.f32 %v2574, %v2622
      %v2624 = vpop.f32.mrf.mxu0
      %v2625 = vadd.f32 %v2576, %v2624
      %2626 = vdwg.mxu0
      %v2627 = vpack.c.bf16 %v2590, %v2588
      %v2628 = vpack.c.bf16 %v2595, %v2593
      %v2629 = vpack.c.bf16 %v2600, %v2598
      %v2630 = vpack.c.bf16 %v2605, %v2603
      %v2631 = vpack.c.bf16 %v2610, %v2608
      %v2632 = vpack.c.bf16 %v2615, %v2613
      %v2633 = vpack.c.bf16 %v2620, %v2618
      %v2634 = vpack.c.bf16 %v2625, %v2623
      %v2636 = vsel %vm1147, %v2627, 0
      %v2639 = vsel %vm1147, %v2628, 0
      %v2642 = vsel %vm1147, %v2629, 0
      %v2645 = vsel %vm1147, %v2630, 0
      %v2648 = vsel %vm1147, %v2631, 0
      %v2651 = vsel %vm1147, %v2632, 0
      %v2654 = vsel %vm1147, %v2633, 0
      %v2657 = vsel %vm1147, %v2634, 0
      %2659 = vmatpush.bf16.msra.mxu0 0
      %2660 = vmatpush.bf16.msra.mxu0 0
      %2661 = vmatpush.bf16.msra.mxu0 0
      %2662 = vmatpush.bf16.msra.mxu0 0
      %2663 = vmatpush.bf16.msra.mxu0 0
      %2664 = vmatpush.bf16.msra.mxu0 0
      %2665 = vmatpush.bf16.msra.mxu0 %v1144
      %2666 = vmatpush.bf16.msra.mxu0 %v1143
      %2667 = vmatmul.bf16.gmra.mxu0 %v2636
      %v2668 = vpop.f32.mrf.mxu0
      %v2669 = vadd.f32 0.0, %v2668
      %v2670 = vpop.f32.mrf.mxu0
      %v2671 = vadd.f32 0.0, %v2670
      %2672 = vmatmul.bf16.gmra.mxu0 %v2639
      %v2673 = vpop.f32.mrf.mxu0
      %v2674 = vadd.f32 0.0, %v2673
      %v2675 = vpop.f32.mrf.mxu0
      %v2676 = vadd.f32 0.0, %v2675
      %2677 = vmatmul.bf16.gmra.mxu0 %v2642
      %v2678 = vpop.f32.mrf.mxu0
      %v2679 = vadd.f32 0.0, %v2678
      %v2680 = vpop.f32.mrf.mxu0
      %v2681 = vadd.f32 0.0, %v2680
      %2682 = vmatmul.bf16.gmra.mxu0 %v2645
      %v2683 = vpop.f32.mrf.mxu0
      %v2684 = vadd.f32 0.0, %v2683
      %v2685 = vpop.f32.mrf.mxu0
      %v2686 = vadd.f32 0.0, %v2685
      %2687 = vmatmul.bf16.gmra.mxu0 %v2648
      %v2688 = vpop.f32.mrf.mxu0
      %v2689 = vadd.f32 0.0, %v2688
      %v2690 = vpop.f32.mrf.mxu0
      %v2691 = vadd.f32 0.0, %v2690
      %2692 = vmatmul.bf16.gmra.mxu0 %v2651
      %v2693 = vpop.f32.mrf.mxu0
      %v2694 = vadd.f32 0.0, %v2693
      %v2695 = vpop.f32.mrf.mxu0
      %v2696 = vadd.f32 0.0, %v2695
      %2697 = vmatmul.bf16.gmra.mxu0 %v2654
      %v2698 = vpop.f32.mrf.mxu0
      %v2699 = vadd.f32 0.0, %v2698
      %v2700 = vpop.f32.mrf.mxu0
      %v2701 = vadd.f32 0.0, %v2700
      %2702 = vmatmul.bf16.gmra.mxu0 %v2657
      %v2703 = vpop.f32.mrf.mxu0
      %v2704 = vadd.f32 0.0, %v2703
      %v2705 = vpop.f32.mrf.mxu0
      %v2706 = vadd.f32 0.0, %v2705
      %2707 = vdwg.mxu0
      %2708 = vmatpush.bf16.msra.mxu0 0
      %2709 = vmatpush.bf16.msra.mxu0 0
      %2710 = vmatpush.bf16.msra.mxu0 0
      %2711 = vmatpush.bf16.msra.mxu0 0
      %2712 = vmatpush.bf16.msra.mxu0 0
      %2713 = vmatpush.bf16.msra.mxu0 0
      %2714 = vmatpush.bf16.msra.mxu0 %v1230
      %2715 = vmatpush.bf16.msra.mxu0 %v1229
      %2716 = vmatmul.bf16.gmra.mxu0 %v1704
      %v2717 = vpop.f32.mrf.mxu0
      %v2718 = vadd.f32 %v2669, %v2717
      %v2719 = vpop.f32.mrf.mxu0
      %v2720 = vadd.f32 %v2671, %v2719
      %2721 = vmatmul.bf16.gmra.mxu0 %v1707
      %v2722 = vpop.f32.mrf.mxu0
      %v2723 = vadd.f32 %v2674, %v2722
      %v2724 = vpop.f32.mrf.mxu0
      %v2725 = vadd.f32 %v2676, %v2724
      %2726 = vmatmul.bf16.gmra.mxu0 %v1710
      %v2727 = vpop.f32.mrf.mxu0
      %v2728 = vadd.f32 %v2679, %v2727
      %v2729 = vpop.f32.mrf.mxu0
      %v2730 = vadd.f32 %v2681, %v2729
      %2731 = vmatmul.bf16.gmra.mxu0 %v1713
      %v2732 = vpop.f32.mrf.mxu0
      %v2733 = vadd.f32 %v2684, %v2732
      %v2734 = vpop.f32.mrf.mxu0
      %v2735 = vadd.f32 %v2686, %v2734
      %2736 = vmatmul.bf16.gmra.mxu0 %v1716
      %v2737 = vpop.f32.mrf.mxu0
      %v2738 = vadd.f32 %v2689, %v2737
      %v2739 = vpop.f32.mrf.mxu0
      %v2740 = vadd.f32 %v2691, %v2739
      %2741 = vmatmul.bf16.gmra.mxu0 %v1719
      %v2742 = vpop.f32.mrf.mxu0
      %v2743 = vadd.f32 %v2694, %v2742
      %v2744 = vpop.f32.mrf.mxu0
      %v2745 = vadd.f32 %v2696, %v2744
      %2746 = vmatmul.bf16.gmra.mxu0 %v1722
      %v2747 = vpop.f32.mrf.mxu0
      %v2748 = vadd.f32 %v2699, %v2747
      %v2749 = vpop.f32.mrf.mxu0
      %v2750 = vadd.f32 %v2701, %v2749
      %2751 = vmatmul.bf16.gmra.mxu0 %v1725
      %v2752 = vpop.f32.mrf.mxu0
      %v2753 = vadd.f32 %v2704, %v2752
      %v2754 = vpop.f32.mrf.mxu0
      %v2755 = vadd.f32 %v2706, %v2754
      %2756 = vdwg.mxu0
      %v2758 = vsel %vm1147, %v2521, 0
      %v2761 = vsel %vm1147, %v2522, 0
      %v2764 = vsel %vm1147, %v2523, 0
      %v2767 = vsel %vm1147, %v2524, 0
      %v2770 = vsel %vm1147, %v2525, 0
      %v2773 = vsel %vm1147, %v2526, 0
      %v2776 = vsel %vm1147, %v2527, 0
      %v2779 = vsel %vm1147, %v2528, 0
      %2781 = vmatpush.bf16.msra.mxu0 0
      %2782 = vmatpush.bf16.msra.mxu0 0
      %2783 = vmatpush.bf16.msra.mxu0 0
      %2784 = vmatpush.bf16.msra.mxu0 0
      %2785 = vmatpush.bf16.msra.mxu0 0
      %2786 = vmatpush.bf16.msra.mxu0 0
      %2787 = vmatpush.bf16.msra.mxu0 %v1315
      %2788 = vmatpush.bf16.msra.mxu0 %v1314
      %2789 = vmatmul.bf16.gmra.mxu0 %v2758
      %v2790 = vpop.f32.mrf.mxu0
      %v2791 = vadd.f32 0.0, %v2790
      %v2792 = vpop.f32.mrf.mxu0
      %v2793 = vadd.f32 0.0, %v2792
      %2794 = vmatmul.bf16.gmra.mxu0 %v2761
      %v2795 = vpop.f32.mrf.mxu0
      %v2796 = vadd.f32 0.0, %v2795
      %v2797 = vpop.f32.mrf.mxu0
      %v2798 = vadd.f32 0.0, %v2797
      %2799 = vmatmul.bf16.gmra.mxu0 %v2764
      %v2800 = vpop.f32.mrf.mxu0
      %v2801 = vadd.f32 0.0, %v2800
      %v2802 = vpop.f32.mrf.mxu0
      %v2803 = vadd.f32 0.0, %v2802
      %2804 = vmatmul.bf16.gmra.mxu0 %v2767
      %v2805 = vpop.f32.mrf.mxu0
      %v2806 = vadd.f32 0.0, %v2805
      %v2807 = vpop.f32.mrf.mxu0
      %v2808 = vadd.f32 0.0, %v2807
      %2809 = vmatmul.bf16.gmra.mxu0 %v2770
      %v2810 = vpop.f32.mrf.mxu0
      %v2811 = vadd.f32 0.0, %v2810
      %v2812 = vpop.f32.mrf.mxu0
      %v2813 = vadd.f32 0.0, %v2812
      %2814 = vmatmul.bf16.gmra.mxu0 %v2773
      %v2815 = vpop.f32.mrf.mxu0
      %v2816 = vadd.f32 0.0, %v2815
      %v2817 = vpop.f32.mrf.mxu0
      %v2818 = vadd.f32 0.0, %v2817
      %2819 = vmatmul.bf16.gmra.mxu0 %v2776
      %v2820 = vpop.f32.mrf.mxu0
      %v2821 = vadd.f32 0.0, %v2820
      %v2822 = vpop.f32.mrf.mxu0
      %v2823 = vadd.f32 0.0, %v2822
      %2824 = vmatmul.bf16.gmra.mxu0 %v2779
      %v2825 = vpop.f32.mrf.mxu0
      %v2826 = vadd.f32 0.0, %v2825
      %v2827 = vpop.f32.mrf.mxu0
      %v2828 = vadd.f32 0.0, %v2827
      %2829 = vdwg.mxu0
      %v2830 = vadd.f32 %v2718, %v2791
      %v2831 = vadd.f32 %v2720, %v2793
      %v2832 = vadd.f32 %v2723, %v2796
      %v2833 = vadd.f32 %v2725, %v2798
      %v2834 = vadd.f32 %v2728, %v2801
      %v2835 = vadd.f32 %v2730, %v2803
      %v2836 = vadd.f32 %v2733, %v2806
      %v2837 = vadd.f32 %v2735, %v2808
      %v2838 = vadd.f32 %v2738, %v2811
      %v2839 = vadd.f32 %v2740, %v2813
      %v2840 = vadd.f32 %v2743, %v2816
      %v2841 = vadd.f32 %v2745, %v2818
      %v2842 = vadd.f32 %v2748, %v2821
      %v2843 = vadd.f32 %v2750, %v2823
      %v2844 = vadd.f32 %v2753, %v2826
      %v2845 = vadd.f32 %v2755, %v2828
      %v2846 = vadd.f32 %v2830, %v411
      %v2847 = vadd.f32 %v2831, %v411
      %v2848 = vadd.f32 %v2832, %v411
      %v2849 = vadd.f32 %v2833, %v411
      %v2850 = vadd.f32 %v2834, %v411
      %v2851 = vadd.f32 %v2835, %v411
      %v2852 = vadd.f32 %v2836, %v411
      %v2853 = vadd.f32 %v2837, %v411
      %v2854 = vadd.f32 %v2838, %v411
      %v2855 = vadd.f32 %v2839, %v411
      %v2856 = vadd.f32 %v2840, %v411
      %v2857 = vadd.f32 %v2841, %v411
      %v2858 = vadd.f32 %v2842, %v411
      %v2859 = vadd.f32 %v2843, %v411
      %v2860 = vadd.f32 %v2844, %v411
      %v2861 = vadd.f32 %v2845, %v411
      %v2862 = vmax.f32 %v2846, 0.0
      %v2863 = vmax.f32 %v2847, 0.0
      %v2864 = vmax.f32 %v2848, 0.0
      %v2865 = vmax.f32 %v2849, 0.0
      %v2866 = vmax.f32 %v2850, 0.0
      %v2867 = vmax.f32 %v2851, 0.0
      %v2868 = vmax.f32 %v2852, 0.0
      %v2869 = vmax.f32 %v2853, 0.0
      %v2870 = vmax.f32 %v2854, 0.0
      %v2871 = vmax.f32 %v2855, 0.0
      %v2872 = vmax.f32 %v2856, 0.0
      %v2873 = vmax.f32 %v2857, 0.0
      %v2874 = vmax.f32 %v2858, 0.0
      %v2875 = vmax.f32 %v2859, 0.0
      %v2876 = vmax.f32 %v2860, 0.0
      %v2877 = vmax.f32 %v2861, 0.0
      %v2878 = vpack.c.bf16 %v2863, %v2862
      %v2879 = vpack.c.bf16 %v2865, %v2864
      %v2880 = vpack.c.bf16 %v2867, %v2866
      %v2881 = vpack.c.bf16 %v2869, %v2868
      %v2882 = vpack.c.bf16 %v2871, %v2870
      %v2883 = vpack.c.bf16 %v2873, %v2872
      %v2884 = vpack.c.bf16 %v2875, %v2874
      %v2885 = vpack.c.bf16 %v2877, %v2876
      %v2887 = vsel %vm1147, %v2878, 0
      %v2890 = vsel %vm1147, %v2879, 0
      %v2893 = vsel %vm1147, %v2880, 0
      %v2896 = vsel %vm1147, %v2881, 0
      %v2899 = vsel %vm1147, %v2882, 0
      %v2902 = vsel %vm1147, %v2883, 0
      %v2905 = vsel %vm1147, %v2884, 0
      %v2908 = vsel %vm1147, %v2885, 0
      %2910 = vmatpush.bf16.msra.mxu0 0
      %2911 = vmatpush.bf16.msra.mxu0 0
      %2912 = vmatpush.bf16.msra.mxu0 0
      %2913 = vmatpush.bf16.msra.mxu0 0
      %2914 = vmatpush.bf16.msra.mxu0 0
      %2915 = vmatpush.bf16.msra.mxu0 0
      %2916 = vmatpush.bf16.msra.mxu0 %v1456
      %2917 = vmatpush.bf16.msra.mxu0 %v1455
      %2918 = vmatmul.bf16.gmra.mxu0 %v2887
      %v2919 = vpop.f32.mrf.mxu0
      %v2920 = vadd.f32 %v412, %v2919
      %v2921 = vpop.f32.mrf.mxu0
      %v2922 = vadd.f32 %v412, %v2921
      %2923 = vmatmul.bf16.gmra.mxu0 %v2890
      %v2924 = vpop.f32.mrf.mxu0
      %v2925 = vadd.f32 %v412, %v2924
      %v2926 = vpop.f32.mrf.mxu0
      %v2927 = vadd.f32 %v412, %v2926
      %2928 = vmatmul.bf16.gmra.mxu0 %v2893
      %v2929 = vpop.f32.mrf.mxu0
      %v2930 = vadd.f32 %v412, %v2929
      %v2931 = vpop.f32.mrf.mxu0
      %v2932 = vadd.f32 %v412, %v2931
      %2933 = vmatmul.bf16.gmra.mxu0 %v2896
      %v2934 = vpop.f32.mrf.mxu0
      %v2935 = vadd.f32 %v412, %v2934
      %v2936 = vpop.f32.mrf.mxu0
      %v2937 = vadd.f32 %v412, %v2936
      %2938 = vmatmul.bf16.gmra.mxu0 %v2899
      %v2939 = vpop.f32.mrf.mxu0
      %v2940 = vadd.f32 %v412, %v2939
      %v2941 = vpop.f32.mrf.mxu0
      %v2942 = vadd.f32 %v412, %v2941
      %2943 = vmatmul.bf16.gmra.mxu0 %v2902
      %v2944 = vpop.f32.mrf.mxu0
      %v2945 = vadd.f32 %v412, %v2944
      %v2946 = vpop.f32.mrf.mxu0
      %v2947 = vadd.f32 %v412, %v2946
      %2948 = vmatmul.bf16.gmra.mxu0 %v2905
      %v2949 = vpop.f32.mrf.mxu0
      %v2950 = vadd.f32 %v412, %v2949
      %v2951 = vpop.f32.mrf.mxu0
      %v2952 = vadd.f32 %v412, %v2951
      %2953 = vmatmul.bf16.gmra.mxu0 %v2908
      %v2954 = vpop.f32.mrf.mxu0
      %v2955 = vadd.f32 %v412, %v2954
      %v2956 = vpop.f32.mrf.mxu0
      %v2957 = vadd.f32 %v412, %v2956
      %2958 = vdwg.mxu0
      %v2959 = vmax.f32 %v2920, 0.0
      %v2960 = vmax.f32 %v2922, 0.0
      %v2961 = vmax.f32 %v2925, 0.0
      %v2962 = vmax.f32 %v2927, 0.0
      %v2963 = vmax.f32 %v2930, 0.0
      %v2964 = vmax.f32 %v2932, 0.0
      %v2965 = vmax.f32 %v2935, 0.0
      %v2966 = vmax.f32 %v2937, 0.0
      %v2967 = vmax.f32 %v2940, 0.0
      %v2968 = vmax.f32 %v2942, 0.0
      %v2969 = vmax.f32 %v2945, 0.0
      %v2970 = vmax.f32 %v2947, 0.0
      %v2971 = vmax.f32 %v2950, 0.0
      %v2972 = vmax.f32 %v2952, 0.0
      %v2973 = vmax.f32 %v2955, 0.0
      %v2974 = vmax.f32 %v2957, 0.0
      %v2975 = vadd.f32 %v2959, %v1548
      %v2976 = vadd.f32 %v2960, %v1549
      %v2977 = vadd.f32 %v2961, %v1550
      %v2978 = vadd.f32 %v2962, %v1551
      %v2979 = vadd.f32 %v2963, %v1552
      %v2980 = vadd.f32 %v2964, %v1553
      %v2981 = vadd.f32 %v2965, %v1554
      %v2982 = vadd.f32 %v2966, %v1555
      %v2983 = vadd.f32 %v2967, %v1556
      %v2984 = vadd.f32 %v2968, %v1557
      %v2985 = vadd.f32 %v2969, %v1558
      %v2986 = vadd.f32 %v2970, %v1559
      %v2987 = vadd.f32 %v2971, %v1560
      %v2988 = vadd.f32 %v2972, %v1561
      %v2989 = vadd.f32 %v2973, %v1562
      %v2990 = vadd.f32 %v2974, %v1563
      %v2991 = vpack.c.bf16 %v2976, %v2975
      %v2992 = vpack.c.bf16 %v2978, %v2977
      %v2993 = vpack.c.bf16 %v2980, %v2979
      %v2994 = vpack.c.bf16 %v2982, %v2981
      %v2995 = vpack.c.bf16 %v2984, %v2983
      %v2996 = vpack.c.bf16 %v2986, %v2985
      %v2997 = vpack.c.bf16 %v2988, %v2987
      %v2998 = vpack.c.bf16 %v2990, %v2989
      %v2999 = vperm.slane %v409, 6
      %v3004 = vunpack.c.l.b16 %v397
      %v3005 = vunpack.c.l.b16 %v398
      %v3006 = vunpack.c.l.b16 %v399
      %v3007 = vunpack.c.l.b16 %v400
      %v3008 = vpack.c.b16 %v3005, %v3004
      %v3009 = vpack.c.b16 %v3007, %v3006
      %v3013 = vsel %vm1147, %v2991, 0
      %v3016 = vsel %vm1147, %v2992, 0
      %v3019 = vsel %vm1147, %v2993, 0
      %v3022 = vsel %vm1147, %v2994, 0
      %v3025 = vsel %vm1147, %v2995, 0
      %v3028 = vsel %vm1147, %v2996, 0
      %v3031 = vsel %vm1147, %v2997, 0
      %v3034 = vsel %vm1147, %v2998, 0
      %3036 = vmatpush.bf16.msra.mxu0 0
      %3037 = vmatpush.bf16.msra.mxu0 0
      %3038 = vmatpush.bf16.msra.mxu0 0
      %3039 = vmatpush.bf16.msra.mxu0 0
      %3040 = vmatpush.bf16.msra.mxu0 0
      %3041 = vmatpush.bf16.msra.mxu0 0
      %3042 = vmatpush.bf16.msra.mxu0 %v3009
      %3043 = vmatpush.bf16.msra.mxu0 %v3008
      %3044 = vmatmul.bf16.gmra.mxu0 %v3013
      %v3045 = vpop.f32.mrf.mxu0
      %v3046 = vadd.f32 %v2999, %v3045
      %v3047 = vpop.f32.mrf.mxu0
      %v3048 = vadd.f32 %v2999, %v3047
      %3049 = vmatmul.bf16.gmra.mxu0 %v3016
      %v3050 = vpop.f32.mrf.mxu0
      %v3051 = vadd.f32 %v2999, %v3050
      %v3052 = vpop.f32.mrf.mxu0
      %v3053 = vadd.f32 %v2999, %v3052
      %3054 = vmatmul.bf16.gmra.mxu0 %v3019
      %v3055 = vpop.f32.mrf.mxu0
      %v3056 = vadd.f32 %v2999, %v3055
      %v3057 = vpop.f32.mrf.mxu0
      %v3058 = vadd.f32 %v2999, %v3057
      %3059 = vmatmul.bf16.gmra.mxu0 %v3022
      %v3060 = vpop.f32.mrf.mxu0
      %v3061 = vadd.f32 %v2999, %v3060
      %v3062 = vpop.f32.mrf.mxu0
      %v3063 = vadd.f32 %v2999, %v3062
      %3064 = vmatmul.bf16.gmra.mxu0 %v3025
      %v3065 = vpop.f32.mrf.mxu0
      %v3066 = vadd.f32 %v2999, %v3065
      %v3067 = vpop.f32.mrf.mxu0
      %v3068 = vadd.f32 %v2999, %v3067
      %3069 = vmatmul.bf16.gmra.mxu0 %v3028
      %v3070 = vpop.f32.mrf.mxu0
      %v3071 = vadd.f32 %v2999, %v3070
      %v3072 = vpop.f32.mrf.mxu0
      %v3073 = vadd.f32 %v2999, %v3072
      %3074 = vmatmul.bf16.gmra.mxu0 %v3031
      %v3075 = vpop.f32.mrf.mxu0
      %v3076 = vadd.f32 %v2999, %v3075
      %v3077 = vpop.f32.mrf.mxu0
      %v3078 = vadd.f32 %v2999, %v3077
      %3079 = vmatmul.bf16.gmra.mxu0 %v3034
      %v3080 = vpop.f32.mrf.mxu0
      %v3081 = vadd.f32 %v2999, %v3080
      %v3082 = vpop.f32.mrf.mxu0
      %v3083 = vadd.f32 %v2999, %v3082
      %3084 = vdwg.mxu0
      %v3085 = vmax.f32 %v3046, 0.0
      %v3086 = vmax.f32 %v3048, 0.0
      %v3087 = vmax.f32 %v3051, 0.0
      %v3088 = vmax.f32 %v3053, 0.0
      %v3089 = vmax.f32 %v3056, 0.0
      %v3090 = vmax.f32 %v3058, 0.0
      %v3091 = vmax.f32 %v3061, 0.0
      %v3092 = vmax.f32 %v3063, 0.0
      %v3093 = vmax.f32 %v3066, 0.0
      %v3094 = vmax.f32 %v3068, 0.0
      %v3095 = vmax.f32 %v3071, 0.0
      %v3096 = vmax.f32 %v3073, 0.0
      %v3097 = vmax.f32 %v3076, 0.0
      %v3098 = vmax.f32 %v3078, 0.0
      %v3099 = vmax.f32 %v3081, 0.0
      %v3100 = vmax.f32 %v3083, 0.0
      %v3101 = vpack.c.bf16 %v3086, %v3085
      %v3102 = vpack.c.bf16 %v3088, %v3087
      %v3103 = vpack.c.bf16 %v3090, %v3089
      %v3104 = vpack.c.bf16 %v3092, %v3091
      %v3105 = vpack.c.bf16 %v3094, %v3093
      %v3106 = vpack.c.bf16 %v3096, %v3095
      %v3107 = vpack.c.bf16 %v3098, %v3097
      %v3108 = vpack.c.bf16 %v3100, %v3099
      %v3109 = vperm.slane %v409, 7
      %v3114 = vunpack.c.l.b16 %v401
      %v3115 = vunpack.c.l.b16 %v402
      %v3116 = vunpack.c.l.b16 %v403
      %v3117 = vunpack.c.l.b16 %v404
      %v3118 = vpack.c.b16 %v3115, %v3114
      %v3119 = vpack.c.b16 %v3117, %v3116
      %v3123 = vsel %vm1147, %v3101, 0
      %v3126 = vsel %vm1147, %v3102, 0
      %v3129 = vsel %vm1147, %v3103, 0
      %v3132 = vsel %vm1147, %v3104, 0
      %v3135 = vsel %vm1147, %v3105, 0
      %v3138 = vsel %vm1147, %v3106, 0
      %v3141 = vsel %vm1147, %v3107, 0
      %v3144 = vsel %vm1147, %v3108, 0
      %3146 = vmatpush.bf16.msra.mxu0 0
      %3147 = vmatpush.bf16.msra.mxu0 0
      %3148 = vmatpush.bf16.msra.mxu0 0
      %3149 = vmatpush.bf16.msra.mxu0 0
      %3150 = vmatpush.bf16.msra.mxu0 0
      %3151 = vmatpush.bf16.msra.mxu0 0
      %3152 = vmatpush.bf16.msra.mxu0 %v3119
      %3153 = vmatpush.bf16.msra.mxu0 %v3118
      %3154 = vmatmul.bf16.gmra.mxu0 %v3123
      %v3155 = vpop.f32.mrf.mxu0
      %v3156 = vadd.f32 %v3109, %v3155
      %v3157 = vpop.f32.mrf.mxu0
      %v3158 = vadd.f32 %v3109, %v3157
      %3159 = vmatmul.bf16.gmra.mxu0 %v3126
      %v3160 = vpop.f32.mrf.mxu0
      %v3161 = vadd.f32 %v3109, %v3160
      %v3162 = vpop.f32.mrf.mxu0
      %v3163 = vadd.f32 %v3109, %v3162
      %3164 = vmatmul.bf16.gmra.mxu0 %v3129
      %v3165 = vpop.f32.mrf.mxu0
      %v3166 = vadd.f32 %v3109, %v3165
      %v3167 = vpop.f32.mrf.mxu0
      %v3168 = vadd.f32 %v3109, %v3167
      %3169 = vmatmul.bf16.gmra.mxu0 %v3132
      %v3170 = vpop.f32.mrf.mxu0
      %v3171 = vadd.f32 %v3109, %v3170
      %v3172 = vpop.f32.mrf.mxu0
      %v3173 = vadd.f32 %v3109, %v3172
      %3174 = vmatmul.bf16.gmra.mxu0 %v3135
      %v3175 = vpop.f32.mrf.mxu0
      %v3176 = vadd.f32 %v3109, %v3175
      %v3177 = vpop.f32.mrf.mxu0
      %v3178 = vadd.f32 %v3109, %v3177
      %3179 = vmatmul.bf16.gmra.mxu0 %v3138
      %v3180 = vpop.f32.mrf.mxu0
      %v3181 = vadd.f32 %v3109, %v3180
      %v3182 = vpop.f32.mrf.mxu0
      %v3183 = vadd.f32 %v3109, %v3182
      %3184 = vmatmul.bf16.gmra.mxu0 %v3141
      %v3185 = vpop.f32.mrf.mxu0
      %v3186 = vadd.f32 %v3109, %v3185
      %v3187 = vpop.f32.mrf.mxu0
      %v3188 = vadd.f32 %v3109, %v3187
      %3189 = vmatmul.bf16.gmra.mxu0 %v3144
      %v3190 = vpop.f32.mrf.mxu0
      %v3191 = vadd.f32 %v3109, %v3190
      %v3192 = vpop.f32.mrf.mxu0
      %v3193 = vadd.f32 %v3109, %v3192
      %3194 = vdwg.mxu0
      %v3195 = vmax.f32 %v3156, 0.0
      %v3196 = vmax.f32 %v3158, 0.0
      %v3197 = vmax.f32 %v3161, 0.0
      %v3198 = vmax.f32 %v3163, 0.0
      %v3199 = vmax.f32 %v3166, 0.0
      %v3200 = vmax.f32 %v3168, 0.0
      %v3201 = vmax.f32 %v3171, 0.0
      %v3202 = vmax.f32 %v3173, 0.0
      %v3203 = vmax.f32 %v3176, 0.0
      %v3204 = vmax.f32 %v3178, 0.0
      %v3205 = vmax.f32 %v3181, 0.0
      %v3206 = vmax.f32 %v3183, 0.0
      %v3207 = vmax.f32 %v3186, 0.0
      %v3208 = vmax.f32 %v3188, 0.0
      %v3209 = vmax.f32 %v3191, 0.0
      %v3210 = vmax.f32 %v3193, 0.0
      %v3211 = vpack.c.bf16 %v3196, %v3195
      %v3212 = vpack.c.bf16 %v3198, %v3197
      %v3213 = vpack.c.bf16 %v3200, %v3199
      %v3214 = vpack.c.bf16 %v3202, %v3201
      %v3215 = vpack.c.bf16 %v3204, %v3203
      %v3216 = vpack.c.bf16 %v3206, %v3205
      %v3217 = vpack.c.bf16 %v3208, %v3207
      %v3218 = vpack.c.bf16 %v3210, %v3209
      %v3219 = vperm.slane %v410, 0
      %v3224 = vunpack.c.l.b16 %v405
      %v3225 = vunpack.c.l.b16 %v406
      %v3226 = vunpack.c.l.b16 %v407
      %v3227 = vunpack.c.l.b16 %v408
      %v3228 = vpack.c.b16 %v3225, %v3224
      %v3229 = vpack.c.b16 %v3227, %v3226
      %v3233 = vsel %vm1147, %v3211, 0
      %v3236 = vsel %vm1147, %v3212, 0
      %v3239 = vsel %vm1147, %v3213, 0
      %v3242 = vsel %vm1147, %v3214, 0
      %v3245 = vsel %vm1147, %v3215, 0
      %v3248 = vsel %vm1147, %v3216, 0
      %v3251 = vsel %vm1147, %v3217, 0
      %v3254 = vsel %vm1147, %v3218, 0
      %3256 = vmatpush.bf16.msra.mxu0 0
      %3257 = vmatpush.bf16.msra.mxu0 0
      %3258 = vmatpush.bf16.msra.mxu0 0
      %3259 = vmatpush.bf16.msra.mxu0 0
      %3260 = vmatpush.bf16.msra.mxu0 0
      %3261 = vmatpush.bf16.msra.mxu0 0
      %3262 = vmatpush.bf16.msra.mxu0 %v3229
      %3263 = vmatpush.bf16.msra.mxu0 %v3228
      %3264 = vmatmul.bf16.gmra.mxu0 %v3233
      %v3265 = vpop.f32.mrf.mxu0
      %v3266 = vadd.f32 %v3219, %v3265
      %v3267 = vpop.f32.mrf.mxu0
      %v3268 = vadd.f32 %v3219, %v3267
      %3269 = vmatmul.bf16.gmra.mxu0 %v3236
      %v3270 = vpop.f32.mrf.mxu0
      %v3271 = vadd.f32 %v3219, %v3270
      %v3272 = vpop.f32.mrf.mxu0
      %v3273 = vadd.f32 %v3219, %v3272
      %3274 = vmatmul.bf16.gmra.mxu0 %v3239
      %v3275 = vpop.f32.mrf.mxu0
      %v3276 = vadd.f32 %v3219, %v3275
      %v3277 = vpop.f32.mrf.mxu0
      %v3278 = vadd.f32 %v3219, %v3277
      %3279 = vmatmul.bf16.gmra.mxu0 %v3242
      %v3280 = vpop.f32.mrf.mxu0
      %v3281 = vadd.f32 %v3219, %v3280
      %v3282 = vpop.f32.mrf.mxu0
      %v3283 = vadd.f32 %v3219, %v3282
      %3284 = vmatmul.bf16.gmra.mxu0 %v3245
      %v3285 = vpop.f32.mrf.mxu0
      %v3286 = vadd.f32 %v3219, %v3285
      %v3287 = vpop.f32.mrf.mxu0
      %v3288 = vadd.f32 %v3219, %v3287
      %3289 = vmatmul.bf16.gmra.mxu0 %v3248
      %v3290 = vpop.f32.mrf.mxu0
      %v3291 = vadd.f32 %v3219, %v3290
      %v3292 = vpop.f32.mrf.mxu0
      %v3293 = vadd.f32 %v3219, %v3292
      %3294 = vmatmul.bf16.gmra.mxu0 %v3251
      %v3295 = vpop.f32.mrf.mxu0
      %v3296 = vadd.f32 %v3219, %v3295
      %v3297 = vpop.f32.mrf.mxu0
      %v3298 = vadd.f32 %v3219, %v3297
      %3299 = vmatmul.bf16.gmra.mxu0 %v3254
      %v3300 = vpop.f32.mrf.mxu0
      %v3301 = vadd.f32 %v3219, %v3300
      %v3302 = vpop.f32.mrf.mxu0
      %v3303 = vadd.f32 %v3219, %v3302
      %3304 = vdwg.mxu0
      %v3305 = vtanh.pop %v3266
      %v3306 = vtanh.pop %v3268
      %v3307 = vtanh.pop %v3271
      %v3308 = vtanh.pop %v3273
      %v3309 = vtanh.pop %v3276
      %v3310 = vtanh.pop %v3278
      %v3311 = vtanh.pop %v3281
      %v3312 = vtanh.pop %v3283
      %v3313 = vtanh.pop %v3286
      %v3314 = vtanh.pop %v3288
      %v3315 = vtanh.pop %v3291
      %v3316 = vtanh.pop %v3293
      %v3317 = vtanh.pop %v3296
      %v3318 = vtanh.pop %v3298
      %v3319 = vtanh.pop %v3301
      %v3320 = vtanh.pop %v3303
      %3321 = vst.msk [vmem:[%s355] sm:$0xff] %vm1147, %v3305
      %3322 = vst.msk [vmem:[%s355 + $0x8] sm:$0xff] %vm1147, %v3306
      %3323 = vst.msk [vmem:[%s355 + $0x10] sm:$0xff] %vm1147, %v3307
      %3324 = vst.msk [vmem:[%s355 + $0x18] sm:$0xff] %vm1147, %v3308
      %3325 = vst.msk [vmem:[%s355 + $0x20] sm:$0xff] %vm1147, %v3309
      %3326 = vst.msk [vmem:[%s355 + $0x28] sm:$0xff] %vm1147, %v3310
      %3327 = vst.msk [vmem:[%s355 + $0x30] sm:$0xff] %vm1147, %v3311
      %3328 = vst.msk [vmem:[%s355 + $0x38] sm:$0xff] %vm1147, %v3312
      %3329 = vst.msk [vmem:[%s355 + $0x40] sm:$0xff] %vm1147, %v3313
      %3330 = vst.msk [vmem:[%s355 + $0x48] sm:$0xff] %vm1147, %v3314
      %3331 = vst.msk [vmem:[%s355 + $0x50] sm:$0xff] %vm1147, %v3315
      %3332 = vst.msk [vmem:[%s355 + $0x58] sm:$0xff] %vm1147, %v3316
      %3333 = vst.msk [vmem:[%s355 + $0x60] sm:$0xff] %vm1147, %v3317
      %3334 = vst.msk [vmem:[%s355 + $0x68] sm:$0xff] %vm1147, %v3318
      %3335 = vst.msk [vmem:[%s355 + $0x70] sm:$0xff] %vm1147, %v3319
      %3336 = vst.msk [vmem:[%s355 + $0x78] sm:$0xff] %vm1147, %v3320
      %p3337 = scmp.lt.s32.totalorder %s18, 7
      %s3338 = scalar_select %p3337, %s18, 7
      %s3339 = smul.addr %s3338, 16
      %s3340 = smul.addr %s3339, 8
      %s3341 = scalar_lea.vmem %s7, %s3340
      // Predicated region
      $region49: #{tpu_custom_call.1} parent=47 // pred_check
        %p3342 = pneg %p208
      $region50: #{tpu_custom_call.1} parent=47 // pred_check_branch
        %3344 = sbr.rel (%p3342) target = $region52
      $region51: #{tpu_custom_call.1} parent=47 // pred_region
        _
      $region52: #{tpu_custom_call.1} parent=47 // pred_fallthru
        _
    $region48: #{tpu_custom_call.1} parent=5 // pred_fallthru
      _
    %p3345 = scmp.le.s32.totalorder 2, %s13
    // Predicated region
    $region53: #{tpu_custom_call.1} parent=5 // pred_check
      %p3346 = pneg %p3345
    $region54: #{tpu_custom_call.1} parent=5 // pred_check_branch
      %3348 = sbr.rel (%p3346) target = $region56
    $region55: #{tpu_custom_call.1} parent=5 // pred_region
      %s3349 = ssub.s32 %s13, 2
      // Predicated region
      $region57: #{tpu_custom_call.1} parent=55 // pred_check
        %p3350 = pneg %p214
      $region58: #{tpu_custom_call.1} parent=55 // pred_check_branch
        %3352 = sbr.rel (%p3350) target = $region60
      $region59: #{tpu_custom_call.1} parent=55 // pred_region
        %p3353 = scmp.lt.s32.totalorder %s19, 7
        %s3354 = scalar_select %p3353, %s19, 7
        %s3355 = smul.addr %s3354, 16
        %s3356 = smul.addr %s3355, 8
        %s3357 = scalar_lea.vmem %s7, %s3356
      $region60: #{tpu_custom_call.1} parent=55 // pred_fallthru
        _
    $region56: #{tpu_custom_call.1} parent=5 // pred_fallthru
      _
  $region6: #{tpu_custom_call.1} parent=0 // loop_footer
    %s17 = sadd.s32 1, %s13
  $region7: #{tpu_custom_call.1} parent=0 // loop_footer_branch
    %12 = sbr.rel target = $region3
  $region8: #{tpu_custom_call.1} parent=0 // loop_exit
    _

</llo_original>
